<compile_context>
chip_gen: v7x
topology: tpu7x:2x2x1
jax: 0.10.0
libtpu: 0.0.40
codegen_flags: <defaults>
</compile_context>

<pallas_src>
import jax
import jax.numpy as jnp
from jax.experimental import pallas as pl
from jax.experimental.pallas import tpu as pltpu


def make_bottleneck_kernel(B, H, W, Cmid):
    """conv1x1 -> BN -> ReLU -> conv3x3 -> BN -> ReLU -> conv1x1 -> BN -> +x -> ReLU."""
    HW = H * W
    Wp = W + 2                       # width incl. left/right pad
    L = B * (H + 1) * Wp             # rows of the conv2 accumulator / im2col LHS
    FLAT = (B * (H + 1) + 3) * Wp    # flat rows of the padded scratch (incl. over-run)
    STORE0 = Wp + 1                  # flat offset of the first interior pixel

    def kernel(x_ref, w1_ref, s1_ref, b1_ref, w2_ref, s2_ref, b2_ref,
               w3_ref, s3_ref, b3_ref, out_ref, mid_ref):
        Cin = x_ref.shape[1]
        Cout = out_ref.shape[1]

        # Zero the tiny always-zero regions of the persistent scratch that the
        # per-step interior store below does not cover (top pad row + left pad of
        # the first image row, and the trailing over-run rows).  Re-written every
        # step, so the kernel is safe under "parallel" semantics / megacore
        # sharding (no reliance on a step-0 init).
        mid_ref[0:STORE0, :] = jnp.zeros((STORE0, Cmid), jnp.bfloat16)
        mid_ref[STORE0 + L:FLAT, :] = jnp.zeros((FLAT - L - STORE0, Cmid), jnp.bfloat16)

        # ---------- NCHW block -> pixel-major (rows = pixels, lanes = channels) ----------
        xb = x_ref[...]                                              # (B, Cin, HW)
        xp = jnp.transpose(xb, (0, 2, 1)).reshape(B * HW, Cin)       # in-VMEM relayout

        # ---------- conv1 (1x1) + bn1 + relu : one matmul over all B images ----------
        h1 = jnp.dot(xp.astype(jnp.bfloat16), w1_ref[...],
                     preferred_element_type=jnp.float32)             # (B*HW, Cmid)
        h1 = jnp.maximum(h1 * s1_ref[...] + b1_ref[...], 0.0)
        h1 = h1.astype(jnp.bfloat16)

        # ---------- ONE contiguous store of every image interior (plus its shared
        # zero pads) into the flat padded scratch.  Layout per image b:
        # [zero row] [H rows of (1 zero | W pixels | 1 zero)] ... the single zero row
        # between images serves as bottom pad of b and top pad of b+1.
        h1r = h1.reshape(B, H, W, Cmid)
        h1r = jnp.concatenate(
            [h1r, jnp.zeros((B, H, 2, Cmid), jnp.bfloat16)], axis=2)      # width pad
        h1r = jnp.concatenate(
            [h1r, jnp.zeros((B, 1, Wp, Cmid), jnp.bfloat16)], axis=1)     # shared row pad
        mid_ref[STORE0:STORE0 + L, :] = h1r.reshape(L, Cmid)

        # ---------- conv2 (3x3, pad=1, stride=1) as ONE im2col matmul (K = 9*Cmid)
        # over all images.  Tap (dy,dx) of output position q reads scratch row
        # q + dy*Wp + dx, a CONTIGUOUS Ref slice (no relayout, no scratch copy).
        # Rows corresponding to pad / inter-image positions are garbage and are
        # discarded at the extraction below.
        lhs = jnp.concatenate(
            [mid_ref[dy * Wp + dx: dy * Wp + dx + L, :]
             for dy in range(3) for dx in range(3)], axis=-1)        # (L, 9*Cmid) bf16
        h2 = jnp.dot(lhs, w2_ref[...], preferred_element_type=jnp.float32)   # (L, Cmid)
        h2 = jnp.maximum(h2 * s2_ref[...] + b2_ref[...], 0.0)

        # ---------- conv3 (1x1) + bn3 ----------
        h3 = jnp.dot(h2.astype(jnp.bfloat16), w3_ref[...],
                     preferred_element_type=jnp.float32)             # (L, Cout)
        h3 = h3 * s3_ref[...] + b3_ref[...]

        # ---------- drop pad/garbage rows, residual add (f32), relu, back to NCHW ----------
        h3v = h3.reshape(B, H + 1, Wp, Cout)[:, :H, :W, :].reshape(B, HW, Cout)
        o = jnp.maximum(h3v + xp.reshape(B, HW, Cin).astype(jnp.float32), 0.0)
        out_ref[...] = jnp.transpose(o, (0, 2, 1)).astype(out_ref.dtype)   # (B, Cout, HW)

    return kernel


def _vmem_caps():
    """(block-selection budget, vmem_limit_bytes).  Conservative (v7x-safe) fallback."""
    try:
        cap = int(pltpu.get_tpu_info().vmem_capacity_bytes)
    except Exception:
        cap = 64 * 1024 * 1024            # v7x has the smallest per-core VMEM
    cap = max(cap, 32 * 1024 * 1024)
    budget = int(cap * 0.60)              # headroom for compiler internal scratch / regalloc
    limit = min(int(cap * 0.75), 100 * 1024 * 1024)
    return budget, limit


def bottleneck_pallas(x_nchw, w1_oihw, bn1, w2_oihw, bn2, w3_oihw, bn3,
                      eps=1e-5, images_per_step=None, out_dtype=None):
    """x_nchw: (N, Cin, H, W) f32 or bf16.  Weights in PyTorch OIHW (bias=False).
    Returns NCHW in `out_dtype` (defaults to x's dtype)."""
    N, Cin, H, W = x_nchw.shape
    Cmid = w1_oihw.shape[0]                 # planes
    Cout = w3_oihw.shape[0]                 # planes * expansion
    HW = H * W
    Wp = W + 2
    assert w2_oihw.shape == (Cmid, Cmid, 3, 3)
    assert Cout == Cin, "identity shortcut requires inplanes == planes*expansion (downsample=None)"
    # TODO(synk): stride != 1 / downsample != None are not implemented (default ctor args only).

    if out_dtype is None:
        out_dtype = x_nchw.dtype
    xbytes = jnp.dtype(x_nchw.dtype).itemsize
    obytes = jnp.dtype(out_dtype).itemsize

    budget, vmem_limit = _vmem_caps()
    weight_bytes = (Cin * Cmid + 9 * Cmid * Cmid + Cmid * Cout) * 2 + 6 * max(Cmid, Cout) * 4

    def vmem_needed(b):
        l = b * (H + 1) * Wp
        flat = (b * (H + 1) + 3) * Wp
        blocks = 2 * b * HW * (Cin * xbytes + Cout * obytes)            # double-buffered I/O
        scratch = flat * Cmid * 2                                        # persistent bf16 pad buffer
        temps = (b * HW * (Cin * 4 + Cmid * 4 + Cout * 4)                # xp, h1, o (f32)
                 + l * (9 * Cmid * 2 * 2 + Cmid * 4 + Cout * 4))         # im2col lhs (+slices), h2, h3
        return blocks + scratch + 2 * weight_bytes + temps

    if images_per_step is None:
        max_b = N if N < 2 else N // 2      # >=2 grid steps so both v7x cores get work
        B = 1
        for cand in range(max_b, 0, -1):
            if N % cand == 0 and vmem_needed(cand) <= budget:
                B = cand
                break
    else:
        B = int(images_per_step)
    assert N % B == 0

    # ----- HBM layout: keep native NCHW (no host-side transposes); flatten spatial only (free).
    x = x_nchw.reshape(N, Cin, HW)

    # ----- weights -> matmul layouts, bf16 for the MXU (f32 accumulation in-kernel)
    w1 = jnp.transpose(w1_oihw[:, :, 0, 0], (1, 0)).astype(jnp.bfloat16)          # (Cin, Cmid)
    w2 = jnp.transpose(w2_oihw, (2, 3, 1, 0)).reshape(9 * Cmid, Cmid).astype(jnp.bfloat16)
    w3 = jnp.transpose(w3_oihw[:, :, 0, 0], (1, 0)).astype(jnp.bfloat16)          # (Cmid, Cout)

    # ----- fold BatchNorm (eval mode) into per-channel scale & bias (f32)
    def fold(bn, c):
        gamma, beta, mean, var = bn
        scale = gamma / jnp.sqrt(var + eps)
        bias = beta - mean * scale
        return (scale.reshape(1, c).astype(jnp.float32),
                bias.reshape(1, c).astype(jnp.float32))

    s1, b1 = fold(bn1, Cmid)
    s2, b2 = fold(bn2, Cmid)
    s3, b3 = fold(bn3, Cout)

    kernel = make_bottleneck_kernel(B, H, W, Cmid)
    flat_rows = (B * (H + 1) + 3) * Wp
    const2 = lambda n: (0, 0)

    out = pl.pallas_call(
        kernel,
        out_shape=jax.ShapeDtypeStruct((N, Cout, HW), out_dtype),
        grid_spec=pltpu.PrefetchScalarGridSpec(
            num_scalar_prefetch=0,
            grid=(N // B,),
            in_specs=[
                pl.BlockSpec((B, Cin, HW), lambda n: (n, 0, 0)),          # x (also the identity)
                # Constant index_maps: the pipeliner re-fetches these only once.
                # (pl.Buffered(1) would also halve their VMEM footprint; skipped
                #  for wider JAX-version compile compatibility - negligible here.)
                pl.BlockSpec((Cin, Cmid), const2),                        # conv1 weight
                pl.BlockSpec((1, Cmid), const2),                          # bn1 scale
                pl.BlockSpec((1, Cmid), const2),                          # bn1 bias
                pl.BlockSpec((9 * Cmid, Cmid), const2),                   # conv2 weight (im2col)
                pl.BlockSpec((1, Cmid), const2),                          # bn2 scale
                pl.BlockSpec((1, Cmid), const2),                          # bn2 bias
                pl.BlockSpec((Cmid, Cout), const2),                       # conv3 weight
                pl.BlockSpec((1, Cout), const2),                          # bn3 scale
                pl.BlockSpec((1, Cout), const2),                          # bn3 bias
            ],
            out_specs=pl.BlockSpec((B, Cout, HW), lambda n: (n, 0, 0)),
            scratch_shapes=[pltpu.VMEM((flat_rows, Cmid), jnp.bfloat16)],  # flat padded intermediate
        ),
        compiler_params=pltpu.CompilerParams(
            dimension_semantics=("parallel",),
            vmem_limit_bytes=vmem_limit),
    )(x, w1, s1, b1, w2, s2, b2, w3, s3, b3)

    return out.reshape(N, Cout, H, W)


def bottleneck_reference(x_nchw, w1_oihw, bn1, w2_oihw, bn2, w3_oihw, bn3, eps=1e-5):
    """Pure-JAX f32 reference (lax.conv) for correctness checking."""
    x = jnp.transpose(x_nchw, (0, 2, 3, 1)).astype(jnp.float32)
    dn = ("NHWC", "HWIO", "NHWC")

    def fold(bn):
        gamma, beta, mean, var = bn
        scale = gamma / jnp.sqrt(var + eps)
        return scale, beta - mean * scale

    s1, b1 = fold(bn1)
    s2, b2 = fold(bn2)
    s3, b3 = fold(bn3)
    w1 = jnp.transpose(w1_oihw, (2, 3, 1, 0)).astype(jnp.float32)
    w2 = jnp.transpose(w2_oihw, (2, 3, 1, 0)).astype(jnp.float32)
    w3 = jnp.transpose(w3_oihw, (2, 3, 1, 0)).astype(jnp.float32)

    y = jax.lax.conv_general_dilated(x, w1, (1, 1), "SAME", dimension_numbers=dn)
    y = jnp.maximum(y * s1 + b1, 0.0)
    y = jax.lax.conv_general_dilated(y, w2, (1, 1), "SAME", dimension_numbers=dn)
    y = jnp.maximum(y * s2 + b2, 0.0)
    y = jax.lax.conv_general_dilated(y, w3, (1, 1), "SAME", dimension_numbers=dn)
    z = jnp.maximum(y * s3 + b3 + x, 0.0)
    return jnp.transpose(z, (0, 3, 1, 2))


if __name__ == "__main__":
    # Bottleneck(inplanes=16, planes=4, stride=1, downsample=None); expansion=4 -> Cout=16=Cin
    N, planes, H, W = 2, 4, 16, 16
    inplanes = planes * 4

    key = jax.random.PRNGKey(0)
    k_x, k_w1, k_w2, k_w3, k_bn = jax.random.split(key, 5)

    x = jax.random.normal(k_x, (N, inplanes, H, W), dtype=jnp.float32)

    # conv weights (OIHW, bias=False)
    w1 = jax.random.normal(k_w1, (planes, inplanes, 1, 1), dtype=jnp.float32) * 0.2
    w2 = jax.random.normal(k_w2, (planes, planes, 3, 3), dtype=jnp.float32) * 0.2
    w3 = jax.random.normal(k_w3, (inplanes, planes, 1, 1), dtype=jnp.float32) * 0.2

    # BatchNorm params (gamma, beta, running_mean, running_var) - deterministic, nontrivial.
    kb1, kb2, kb3 = jax.random.split(k_bn, 3)

    def mk_bn(k, c):
        return (1.0 + 0.1 * jax.random.normal(k, (c,), dtype=jnp.float32),
                0.05 * jnp.arange(c, dtype=jnp.float32),
                0.1 * jax.random.normal(jax.random.fold_in(k, 1), (c,), dtype=jnp.float32),
                1.0 + 0.05 * jnp.arange(c, dtype=jnp.float32))

    bn1 = mk_bn(kb1, planes)
    bn2 = mk_bn(kb2, planes)
    bn3 = mk_bn(kb3, inplanes)

    out = bottleneck_pallas(x, w1, bn1, w2, bn2, w3, bn3)
    out = jax.block_until_ready(out)

    ref = bottleneck_reference(x, w1, bn1, w2, bn2, w3, bn3)
    assert out.shape == (N, inplanes, H, W) and out.dtype == jnp.float32
    # Tolerance loosened vs. the pure-f32 reference because MXU operands are bf16
    # (accumulation stays f32); elementwise/residual math is f32.
    assert jnp.allclose(out, ref, atol=5e-2, rtol=5e-2), (
        "Pallas output mismatch vs reference, max|diff|="
        f"{float(jnp.max(jnp.abs(out - ref)))}")
    print("KERNEL_OK")
</pallas_src>

<mosaic_0001>
module attributes {stable_mosaic.version = 11 : i64} {
  func.func @kernel(%arg0: i32, %arg1: memref<1x16x256xf32, #tpu.memory_space<vmem>>, %arg2: memref<16x4xbf16, #tpu.memory_space<vmem>>, %arg3: memref<1x4xf32, #tpu.memory_space<vmem>>, %arg4: memref<1x4xf32, #tpu.memory_space<vmem>>, %arg5: memref<36x4xbf16, #tpu.memory_space<vmem>>, %arg6: memref<1x4xf32, #tpu.memory_space<vmem>>, %arg7: memref<1x4xf32, #tpu.memory_space<vmem>>, %arg8: memref<4x16xbf16, #tpu.memory_space<vmem>>, %arg9: memref<1x16xf32, #tpu.memory_space<vmem>>, %arg10: memref<1x16xf32, #tpu.memory_space<vmem>>, %arg11: memref<1x16x256xf32, #tpu.memory_space<vmem>>, %arg12: memref<360x4xbf16, #tpu.memory_space<vmem>>) attributes {dimension_semantics = [#tpu.dimension_semantics<parallel>], iteration_bounds = array<i64: 2>, scalar_prefetch = 0 : i64, scratch_operands = 1 : i64, tpu.core_type = #tpu.core_type<tc>, window_params = [{transform_indices = @transform_0, window_bounds = array<i64: 1, 16, 256>}, {pipeline_mode = #tpu.pipeline_mode<synchronous>, transform_indices = @transform_1, window_bounds = array<i64: 16, 4>}, {pipeline_mode = #tpu.pipeline_mode<synchronous>, transform_indices = @transform_2, window_bounds = array<i64: 1, 4>}, {pipeline_mode = #tpu.pipeline_mode<synchronous>, transform_indices = @transform_3, window_bounds = array<i64: 1, 4>}, {pipeline_mode = #tpu.pipeline_mode<synchronous>, transform_indices = @transform_4, window_bounds = array<i64: 36, 4>}, {pipeline_mode = #tpu.pipeline_mode<synchronous>, transform_indices = @transform_5, window_bounds = array<i64: 1, 4>}, {pipeline_mode = #tpu.pipeline_mode<synchronous>, transform_indices = @transform_6, window_bounds = array<i64: 1, 4>}, {pipeline_mode = #tpu.pipeline_mode<synchronous>, transform_indices = @transform_7, window_bounds = array<i64: 4, 16>}, {pipeline_mode = #tpu.pipeline_mode<synchronous>, transform_indices = @transform_8, window_bounds = array<i64: 1, 16>}, {pipeline_mode = #tpu.pipeline_mode<synchronous>, transform_indices = @transform_9, window_bounds = array<i64: 1, 16>}, {transform_indices = @transform_10, window_bounds = array<i64: 1, 16, 256>}]} {
    %cst = arith.constant 0.000000e+00 : bf16
    %0 = vector.broadcast %cst : bf16 to vector<19x4xbf16>
    %c0 = arith.constant 0 : index
    %c0_0 = arith.constant 0 : index
    %1 = vector.load %arg12[%c0, %c0_0] : memref<360x4xbf16, #tpu.memory_space<vmem>>, vector<19x4xbf16>
    tpu.vector_store %arg12[%c0, %c0_0], %0 {strides = array<i32>} : memref<360x4xbf16, #tpu.memory_space<vmem>>, vector<19x4xbf16>,
    %cst_1 = arith.constant 0.000000e+00 : bf16
    %2 = vector.broadcast %cst_1 : bf16 to vector<35x4xbf16>
    %c325 = arith.constant 325 : index
    %c0_2 = arith.constant 0 : index
    %3 = vector.load %arg12[%c325, %c0_2] : memref<360x4xbf16, #tpu.memory_space<vmem>>, vector<35x4xbf16>
    tpu.vector_store %arg12[%c325, %c0_2], %2 {strides = array<i32>} : memref<360x4xbf16, #tpu.memory_space<vmem>>, vector<35x4xbf16>,
    %c0_3 = arith.constant 0 : index
    %c0_4 = arith.constant 0 : index
    %c0_5 = arith.constant 0 : index
    %4 = vector.load %arg1[%c0_3, %c0_4, %c0_5] : memref<1x16x256xf32, #tpu.memory_space<vmem>>, vector<1x16x256xf32>
    %5 = tpu.transpose %4, [0, 2, 1] : vector<1x16x256xf32> -> vector<1x256x16xf32>
    %6 = vector.shape_cast %5 : vector<1x256x16xf32> to vector<256x16xf32>
    %7 = arith.truncf %6 : vector<256x16xf32> to vector<256x16xbf16>
    %c0_6 = arith.constant 0 : index
    %c0_7 = arith.constant 0 : index
    %8 = vector.load %arg2[%c0_6, %c0_7] : memref<16x4xbf16, #tpu.memory_space<vmem>>, vector<16x4xbf16>
    %cst_8 = arith.constant dense<0.000000e+00> : vector<256x4xf32>
    %9 = tpu.matmul %7, %8, %cst_8 {dimension_numbers = #tpu.dot_dimension_numbers<[1], [0], [0], [1], [0, 0, 1, 1], [], []>} : vector<256x16xbf16>, vector<16x4xbf16>, vector<256x4xf32> -> vector<256x4xf32>
    %c0_9 = arith.constant 0 : index
    %c0_10 = arith.constant 0 : index
    %10 = vector.load %arg3[%c0_9, %c0_10] : memref<1x4xf32, #tpu.memory_space<vmem>>, vector<1x4xf32>
    %11 = vector.broadcast %10 : vector<1x4xf32> to vector<256x4xf32>
    %12 = arith.mulf %9, %11 : vector<256x4xf32>
    %c0_11 = arith.constant 0 : index
    %c0_12 = arith.constant 0 : index
    %13 = vector.load %arg4[%c0_11, %c0_12] : memref<1x4xf32, #tpu.memory_space<vmem>>, vector<1x4xf32>
    %14 = vector.broadcast %13 : vector<1x4xf32> to vector<256x4xf32>
    %15 = arith.addf %12, %14 : vector<256x4xf32>
    %cst_13 = arith.constant 0.000000e+00 : f32
    %16 = vector.broadcast %cst_13 : f32 to vector<256x4xf32>
    %17 = arith.maximumf %15, %16 : vector<256x4xf32>
    %18 = arith.truncf %17 : vector<256x4xf32> to vector<256x4xbf16>
    %19 = vector.shape_cast %18 : vector<256x4xbf16> to vector<1x16x16x4xbf16>
    %cst_14 = arith.constant 0.000000e+00 : bf16
    %20 = vector.broadcast %cst_14 : bf16 to vector<1x16x2x4xbf16>
    %21 = tpu.concatenate %19, %20 in 2 : vector<1x16x16x4xbf16>, vector<1x16x2x4xbf16> -> vector<1x16x18x4xbf16>
    %cst_15 = arith.constant 0.000000e+00 : bf16
    %22 = vector.broadcast %cst_15 : bf16 to vector<1x1x18x4xbf16>
    %23 = tpu.concatenate %21, %22 in 1 : vector<1x16x18x4xbf16>, vector<1x1x18x4xbf16> -> vector<1x17x18x4xbf16>
    %24 = vector.shape_cast %23 : vector<1x17x18x4xbf16> to vector<306x4xbf16>
    %c19 = arith.constant 19 : index
    %c0_16 = arith.constant 0 : index
    %25 = vector.load %arg12[%c19, %c0_16] : memref<360x4xbf16, #tpu.memory_space<vmem>>, vector<306x4xbf16>
    tpu.vector_store %arg12[%c19, %c0_16], %24 {strides = array<i32>} : memref<360x4xbf16, #tpu.memory_space<vmem>>, vector<306x4xbf16>,
    %c0_17 = arith.constant 0 : index
    %c0_18 = arith.constant 0 : index
    %26 = vector.load %arg12[%c0_17, %c0_18] : memref<360x4xbf16, #tpu.memory_space<vmem>>, vector<306x4xbf16>
    %c1 = arith.constant 1 : index
    %c0_19 = arith.constant 0 : index
    %27 = vector.load %arg12[%c1, %c0_19] : memref<360x4xbf16, #tpu.memory_space<vmem>>, vector<306x4xbf16>
    %c2 = arith.constant 2 : index
    %c0_20 = arith.constant 0 : index
    %28 = vector.load %arg12[%c2, %c0_20] : memref<360x4xbf16, #tpu.memory_space<vmem>>, vector<306x4xbf16>
    %c18 = arith.constant 18 : index
    %c0_21 = arith.constant 0 : index
    %29 = vector.load %arg12[%c18, %c0_21] : memref<360x4xbf16, #tpu.memory_space<vmem>>, vector<306x4xbf16>
    %c19_22 = arith.constant 19 : index
    %c0_23 = arith.constant 0 : index
    %30 = vector.load %arg12[%c19_22, %c0_23] : memref<360x4xbf16, #tpu.memory_space<vmem>>, vector<306x4xbf16>
    %c20 = arith.constant 20 : index
    %c0_24 = arith.constant 0 : index
    %31 = vector.load %arg12[%c20, %c0_24] : memref<360x4xbf16, #tpu.memory_space<vmem>>, vector<306x4xbf16>
    %c36 = arith.constant 36 : index
    %c0_25 = arith.constant 0 : index
    %32 = vector.load %arg12[%c36, %c0_25] : memref<360x4xbf16, #tpu.memory_space<vmem>>, vector<306x4xbf16>
    %c37 = arith.constant 37 : index
    %c0_26 = arith.constant 0 : index
    %33 = vector.load %arg12[%c37, %c0_26] : memref<360x4xbf16, #tpu.memory_space<vmem>>, vector<306x4xbf16>
    %c38 = arith.constant 38 : index
    %c0_27 = arith.constant 0 : index
    %34 = vector.load %arg12[%c38, %c0_27] : memref<360x4xbf16, #tpu.memory_space<vmem>>, vector<306x4xbf16>
    %35 = tpu.concatenate %26, %27, %28, %29, %30, %31, %32, %33, %34 in 1 : vector<306x4xbf16>, vector<306x4xbf16>, vector<306x4xbf16>, vector<306x4xbf16>, vector<306x4xbf16>, vector<306x4xbf16>, vector<306x4xbf16>, vector<306x4xbf16>, vector<306x4xbf16> -> vector<306x36xbf16>
    %c0_28 = arith.constant 0 : index
    %c0_29 = arith.constant 0 : index
    %36 = vector.load %arg5[%c0_28, %c0_29] : memref<36x4xbf16, #tpu.memory_space<vmem>>, vector<36x4xbf16>
    %cst_30 = arith.constant dense<0.000000e+00> : vector<306x4xf32>
    %37 = tpu.matmul %35, %36, %cst_30 {dimension_numbers = #tpu.dot_dimension_numbers<[1], [0], [0], [1], [0, 0, 1, 1], [], []>} : vector<306x36xbf16>, vector<36x4xbf16>, vector<306x4xf32> -> vector<306x4xf32>
    %c0_31 = arith.constant 0 : index
    %c0_32 = arith.constant 0 : index
    %38 = vector.load %arg6[%c0_31, %c0_32] : memref<1x4xf32, #tpu.memory_space<vmem>>, vector<1x4xf32>
    %39 = vector.broadcast %38 : vector<1x4xf32> to vector<306x4xf32>
    %40 = arith.mulf %37, %39 : vector<306x4xf32>
    %c0_33 = arith.constant 0 : index
    %c0_34 = arith.constant 0 : index
    %41 = vector.load %arg7[%c0_33, %c0_34] : memref<1x4xf32, #tpu.memory_space<vmem>>, vector<1x4xf32>
    %42 = vector.broadcast %41 : vector<1x4xf32> to vector<306x4xf32>
    %43 = arith.addf %40, %42 : vector<306x4xf32>
    %cst_35 = arith.constant 0.000000e+00 : f32
    %44 = vector.broadcast %cst_35 : f32 to vector<306x4xf32>
    %45 = arith.maximumf %43, %44 : vector<306x4xf32>
    %46 = arith.truncf %45 : vector<306x4xf32> to vector<306x4xbf16>
    %c0_36 = arith.constant 0 : index
    %c0_37 = arith.constant 0 : index
    %47 = vector.load %arg8[%c0_36, %c0_37] : memref<4x16xbf16, #tpu.memory_space<vmem>>, vector<4x16xbf16>
    %cst_38 = arith.constant dense<0.000000e+00> : vector<306x16xf32>
    %48 = tpu.matmul %46, %47, %cst_38 {dimension_numbers = #tpu.dot_dimension_numbers<[1], [0], [0], [1], [0, 0, 1, 1], [], []>} : vector<306x4xbf16>, vector<4x16xbf16>, vector<306x16xf32> -> vector<306x16xf32>
    %c0_39 = arith.constant 0 : index
    %c0_40 = arith.constant 0 : index
    %49 = vector.load %arg9[%c0_39, %c0_40] : memref<1x16xf32, #tpu.memory_space<vmem>>, vector<1x16xf32>
    %50 = vector.broadcast %49 : vector<1x16xf32> to vector<306x16xf32>
    %51 = arith.mulf %48, %50 : vector<306x16xf32>
    %c0_41 = arith.constant 0 : index
    %c0_42 = arith.constant 0 : index
    %52 = vector.load %arg10[%c0_41, %c0_42] : memref<1x16xf32, #tpu.memory_space<vmem>>, vector<1x16xf32>
    %53 = vector.broadcast %52 : vector<1x16xf32> to vector<306x16xf32>
    %54 = arith.addf %51, %53 : vector<306x16xf32>
    %55 = vector.shape_cast %54 : vector<306x16xf32> to vector<1x17x18x16xf32>
    %56 = vector.extract_strided_slice %55 {offsets = [0, 0, 0, 0], sizes = [1, 16, 16, 16], strides = [1, 1, 1, 1]} : vector<1x17x18x16xf32> to vector<1x16x16x16xf32>
    %57 = vector.shape_cast %56 : vector<1x16x16x16xf32> to vector<1x256x16xf32>
    %58 = vector.shape_cast %6 : vector<256x16xf32> to vector<1x256x16xf32>
    %59 = arith.addf %57, %58 : vector<1x256x16xf32>
    %cst_43 = arith.constant 0.000000e+00 : f32
    %60 = vector.broadcast %cst_43 : f32 to vector<1x256x16xf32>
    %61 = arith.maximumf %59, %60 : vector<1x256x16xf32>
    %62 = tpu.transpose %61, [0, 2, 1] : vector<1x256x16xf32> -> vector<1x16x256xf32>
    %c0_44 = arith.constant 0 : index
    %c0_45 = arith.constant 0 : index
    %c0_46 = arith.constant 0 : index
    %63 = vector.load %arg11[%c0_44, %c0_45, %c0_46] : memref<1x16x256xf32, #tpu.memory_space<vmem>>, vector<1x16x256xf32>
    tpu.vector_store %arg11[%c0_44, %c0_45, %c0_46], %62 {strides = array<i32>} : memref<1x16x256xf32, #tpu.memory_space<vmem>>, vector<1x16x256xf32>,
    return
  }
  func.func @transform_0(%arg0: i32) -> (i32, i32, i32) {
    %c0_i32 = arith.constant 0 : i32
    %c0_i32_0 = arith.constant 0 : i32
    %c0_i32_1 = arith.constant 0 : i32
    return %arg0, %c0_i32, %c0_i32_0 : i32, i32, i32
  }
  func.func @transform_1(%arg0: i32) -> (i32, i32) {
    %c0_i32 = arith.constant 0 : i32
    %c0_i32_0 = arith.constant 0 : i32
    %c0_i32_1 = arith.constant 0 : i32
    return %c0_i32, %c0_i32_0 : i32, i32
  }
  func.func @transform_2(%arg0: i32) -> (i32, i32) {
    %c0_i32 = arith.constant 0 : i32
    %c0_i32_0 = arith.constant 0 : i32
    %c0_i32_1 = arith.constant 0 : i32
    return %c0_i32, %c0_i32_0 : i32, i32
  }
  func.func @transform_3(%arg0: i32) -> (i32, i32) {
    %c0_i32 = arith.constant 0 : i32
    %c0_i32_0 = arith.constant 0 : i32
    %c0_i32_1 = arith.constant 0 : i32
    return %c0_i32, %c0_i32_0 : i32, i32
  }
  func.func @transform_4(%arg0: i32) -> (i32, i32) {
    %c0_i32 = arith.constant 0 : i32
    %c0_i32_0 = arith.constant 0 : i32
    %c0_i32_1 = arith.constant 0 : i32
    return %c0_i32, %c0_i32_0 : i32, i32
  }
  func.func @transform_5(%arg0: i32) -> (i32, i32) {
    %c0_i32 = arith.constant 0 : i32
    %c0_i32_0 = arith.constant 0 : i32
    %c0_i32_1 = arith.constant 0 : i32
    return %c0_i32, %c0_i32_0 : i32, i32
  }
  func.func @transform_6(%arg0: i32) -> (i32, i32) {
    %c0_i32 = arith.constant 0 : i32
    %c0_i32_0 = arith.constant 0 : i32
    %c0_i32_1 = arith.constant 0 : i32
    return %c0_i32, %c0_i32_0 : i32, i32
  }
  func.func @transform_7(%arg0: i32) -> (i32, i32) {
    %c0_i32 = arith.constant 0 : i32
    %c0_i32_0 = arith.constant 0 : i32
    %c0_i32_1 = arith.constant 0 : i32
    return %c0_i32, %c0_i32_0 : i32, i32
  }
  func.func @transform_8(%arg0: i32) -> (i32, i32) {
    %c0_i32 = arith.constant 0 : i32
    %c0_i32_0 = arith.constant 0 : i32
    %c0_i32_1 = arith.constant 0 : i32
    return %c0_i32, %c0_i32_0 : i32, i32
  }
  func.func @transform_9(%arg0: i32) -> (i32, i32) {
    %c0_i32 = arith.constant 0 : i32
    %c0_i32_0 = arith.constant 0 : i32
    %c0_i32_1 = arith.constant 0 : i32
    return %c0_i32, %c0_i32_0 : i32, i32
  }
  func.func @transform_10(%arg0: i32) -> (i32, i32, i32) {
    %c0_i32 = arith.constant 0 : i32
    %c0_i32_0 = arith.constant 0 : i32
    %c0_i32_1 = arith.constant 0 : i32
    return %arg0, %c0_i32, %c0_i32_0 : i32, i32, i32
  }
}

</mosaic_0001>

<llo_original>
// kernel: tpu_custom_call.1
$region0: #{tpu_custom_call.1}
  #allocation0 [shape = 'u32[]', space=smem, size = 0x4, offset = 0x4, fixed_abs, tag = 'smem constant byte address 0x4 - core index']
  #allocation1 [shape = 'u32[144,128]{1,0:T(1,128)}', space=vmem, size = 0x12000, scoped, tag = 'internal scratch']
  #allocation2 [shape = 'bf16[360,4]{1,0:T(8,128)(2,1)}', space=vmem, size = 0x16800, scoped, tag = 'scratch operand']
  %s0 = inlined_call_operand.hbm [shape: f32[2,16,256], index: 0, kind: input, shape index: {}]
  %s1 = inlined_call_operand.vmem [shape: bf16[16,4], index: 1, kind: input, shape index: {}]
  %s2 = inlined_call_operand.vmem [shape: f32[1,4], index: 2, kind: input, shape index: {}]
  %s3 = inlined_call_operand.vmem [shape: f32[1,4], index: 3, kind: input, shape index: {}]
  %s4 = inlined_call_operand.vmem [shape: bf16[36,4], index: 4, kind: input, shape index: {}]
  %s5 = inlined_call_operand.vmem [shape: f32[1,4], index: 5, kind: input, shape index: {}]
  %s6 = inlined_call_operand.vmem [shape: f32[1,4], index: 6, kind: input, shape index: {}]
  %s7 = inlined_call_operand.vmem [shape: bf16[4,16], index: 7, kind: input, shape index: {}]
  %s8 = inlined_call_operand.vmem [shape: f32[1,16], index: 8, kind: input, shape index: {}]
  %s9 = inlined_call_operand.vmem [shape: f32[1,16], index: 9, kind: input, shape index: {}]
  %s10 = inlined_call_operand.hbm [shape: f32[2,16,256], index: 10, kind: output, shape index: {}]
  %s11 = sld [smem:[#allocation0]]
  $region77: #{tpu_custom_call.1} parent=0
    _
  %s13 = ssub.s32 1, %s11
  %s14 = scalar_select 0, %s13, %s11
  $region1: #{tpu_custom_call.1} parent=0
    #allocation3 [shape = 'u8[32768]{0}', space=vmem, size = 0x8000, scoped, tag = 'input window, operand 0']
    #allocation4 [shape = 's32[2]{0}', space=sflag, size = 0x8, scoped, tag = 'scoped memory for tpu_custom_call.1']
    #allocation5 [shape = 's32[2]{0}', space=sflag, size = 0x8, scoped, tag = 'scoped memory for tpu_custom_call.1']
    #allocation6 [shape = 'u8[32768]{0}', space=vmem, size = 0x8000, scoped, tag = 'output window, operand 0']
    %15 = vsyncpa [#allocation4], 0
    %s16 = scalar_lea.sflag [#allocation4], 1
    %17 = vsyncpa %s16, 0
    %18 = vsyncpa [#allocation5], 0
    %s19 = scalar_lea.sflag [#allocation5], 1
    %20 = vsyncpa %s19, 0
    loop: start=0, step=1, limit=4
    $region2: #{tpu_custom_call.1} parent=1 // loop_pre_header
      _
    $region3: #{tpu_custom_call.1} parent=1 // loop_header
      %s22 = sphi 0, %s26
      %p23 = scmp.ge.s32.totalorder %s22, 4
      %s32 = sphi 0, %s34
      %s35 = sphi 0, %s32
      %s36 = sphi 0, %s35
      %s52 = sphi 0, %s36
      %s56 = sphi 0, %s56
      %s58 = sphi 0, %s56
      %s59 = sphi 0, %s58
      %s73 = sphi 0, %s59
      %s77 = sphi 0, %s77
      %s79 = sphi 0, %s77
      %s80 = sphi 0, %s79
      %s94 = sphi 0, %s80
      %s98 = sphi 0, %s98
      %s100 = sphi 0, %s98
      %s101 = sphi 0, %s100
      %s115 = sphi 0, %s101
      %s119 = sphi 0, %s119
      %s121 = sphi 0, %s119
      %s122 = sphi 0, %s121
      %s136 = sphi 0, %s122
      %s140 = sphi 0, %s140
      %s142 = sphi 0, %s140
      %s143 = sphi 0, %s142
      %s157 = sphi 0, %s143
      %s161 = sphi 0, %s161
      %s163 = sphi 0, %s161
      %s164 = sphi 0, %s163
      %s178 = sphi 0, %s164
      %s182 = sphi 0, %s182
      %s184 = sphi 0, %s182
      %s185 = sphi 0, %s184
      %s199 = sphi 0, %s185
      %s203 = sphi 0, %s203
      %s205 = sphi 0, %s203
      %s206 = sphi 0, %s205
      %s220 = sphi 0, %s206
      %s224 = sphi 0, %s224
      %s226 = sphi 0, %s224
      %s227 = sphi 0, %s226
      %s241 = sphi 0, %s227
      %s247 = sphi 0, %s249
      %s250 = sphi 0, %s247
      %s251 = sphi 0, %s250
      %s267 = sphi 0, %s251
    $region4: #{tpu_custom_call.1} parent=1 // loop_header_branch
      %25 = sbr.rel (%p23) target = $region8
    $region5: #{tpu_custom_call.1} parent=1 // loop_body
      %s27 = ssub.s32 %s22, 1
      %s28 = ssub.s32 %s22, 2
      %s29 = sadd.s32 %s22, 1
      %s30 = ssub.s32 %s22, %s29
      %p31 = scmp.eq.s32.totalorder %s30, 0
      %s33 = sadd.s32 %s32, 1
      %s34 = scalar_select %p31, %s32, %s33
      %p37 = pneg %p31
      %p38 = scmp.eq.s32.totalorder %s22, 1
      %p39 = por %p37, %p38
      %p40 = scmp.ne.s32.totalorder %s32, %s35
      %p41 = scmp.eq.s32.totalorder %s22, 0
      %p42 = por %p40, %p41
      %p43 = scmp.ne.s32.totalorder %s32, %s35
      %p44 = scmp.eq.s32.totalorder %s27, 1
      %p45 = por %p43, %p44
      %p46 = scmp.ne.s32.totalorder %s35, %s36
      %p47 = scmp.eq.s32.totalorder %s27, 0
      %p48 = por %p46, %p47
      %p49 = scmp.ne.s32.totalorder %s35, %s36
      %p50 = scmp.eq.s32.totalorder %s28, 1
      %p51 = por %p49, %p50
      %p53 = scmp.ne.s32.totalorder %s36, %s52
      %p54 = scmp.eq.s32.totalorder %s28, 0
      %p55 = por %p53, %p54
      %s57 = sadd.s32 %s56, 1
      %p60 = scmp.eq.s32.totalorder %s22, 1
      %p61 = scmp.ne.s32.totalorder %s56, %s58
      %p62 = scmp.eq.s32.totalorder %s22, 0
      %p63 = por %p61, %p62
      %p64 = scmp.ne.s32.totalorder %s56, %s58
      %p65 = scmp.eq.s32.totalorder %s27, 1
      %p66 = por %p64, %p65
      %p67 = scmp.ne.s32.totalorder %s58, %s59
      %p68 = scmp.eq.s32.totalorder %s27, 0
      %p69 = por %p67, %p68
      %p70 = scmp.ne.s32.totalorder %s58, %s59
      %p71 = scmp.eq.s32.totalorder %s28, 1
      %p72 = por %p70, %p71
      %p74 = scmp.ne.s32.totalorder %s59, %s73
      %p75 = scmp.eq.s32.totalorder %s28, 0
      %p76 = por %p74, %p75
      %s78 = sadd.s32 %s77, 1
      %p81 = scmp.eq.s32.totalorder %s22, 1
      %p82 = scmp.ne.s32.totalorder %s77, %s79
      %p83 = scmp.eq.s32.totalorder %s22, 0
      %p84 = por %p82, %p83
      %p85 = scmp.ne.s32.totalorder %s77, %s79
      %p86 = scmp.eq.s32.totalorder %s27, 1
      %p87 = por %p85, %p86
      %p88 = scmp.ne.s32.totalorder %s79, %s80
      %p89 = scmp.eq.s32.totalorder %s27, 0
      %p90 = por %p88, %p89
      %p91 = scmp.ne.s32.totalorder %s79, %s80
      %p92 = scmp.eq.s32.totalorder %s28, 1
      %p93 = por %p91, %p92
      %p95 = scmp.ne.s32.totalorder %s80, %s94
      %p96 = scmp.eq.s32.totalorder %s28, 0
      %p97 = por %p95, %p96
      %s99 = sadd.s32 %s98, 1
      %p102 = scmp.eq.s32.totalorder %s22, 1
      %p103 = scmp.ne.s32.totalorder %s98, %s100
      %p104 = scmp.eq.s32.totalorder %s22, 0
      %p105 = por %p103, %p104
      %p106 = scmp.ne.s32.totalorder %s98, %s100
      %p107 = scmp.eq.s32.totalorder %s27, 1
      %p108 = por %p106, %p107
      %p109 = scmp.ne.s32.totalorder %s100, %s101
      %p110 = scmp.eq.s32.totalorder %s27, 0
      %p111 = por %p109, %p110
      %p112 = scmp.ne.s32.totalorder %s100, %s101
      %p113 = scmp.eq.s32.totalorder %s28, 1
      %p114 = por %p112, %p113
      %p116 = scmp.ne.s32.totalorder %s101, %s115
      %p117 = scmp.eq.s32.totalorder %s28, 0
      %p118 = por %p116, %p117
      %s120 = sadd.s32 %s119, 1
      %p123 = scmp.eq.s32.totalorder %s22, 1
      %p124 = scmp.ne.s32.totalorder %s119, %s121
      %p125 = scmp.eq.s32.totalorder %s22, 0
      %p126 = por %p124, %p125
      %p127 = scmp.ne.s32.totalorder %s119, %s121
      %p128 = scmp.eq.s32.totalorder %s27, 1
      %p129 = por %p127, %p128
      %p130 = scmp.ne.s32.totalorder %s121, %s122
      %p131 = scmp.eq.s32.totalorder %s27, 0
      %p132 = por %p130, %p131
      %p133 = scmp.ne.s32.totalorder %s121, %s122
      %p134 = scmp.eq.s32.totalorder %s28, 1
      %p135 = por %p133, %p134
      %p137 = scmp.ne.s32.totalorder %s122, %s136
      %p138 = scmp.eq.s32.totalorder %s28, 0
      %p139 = por %p137, %p138
      %s141 = sadd.s32 %s140, 1
      %p144 = scmp.eq.s32.totalorder %s22, 1
      %p145 = scmp.ne.s32.totalorder %s140, %s142
      %p146 = scmp.eq.s32.totalorder %s22, 0
      %p147 = por %p145, %p146
      %p148 = scmp.ne.s32.totalorder %s140, %s142
      %p149 = scmp.eq.s32.totalorder %s27, 1
      %p150 = por %p148, %p149
      %p151 = scmp.ne.s32.totalorder %s142, %s143
      %p152 = scmp.eq.s32.totalorder %s27, 0
      %p153 = por %p151, %p152
      %p154 = scmp.ne.s32.totalorder %s142, %s143
      %p155 = scmp.eq.s32.totalorder %s28, 1
      %p156 = por %p154, %p155
      %p158 = scmp.ne.s32.totalorder %s143, %s157
      %p159 = scmp.eq.s32.totalorder %s28, 0
      %p160 = por %p158, %p159
      %s162 = sadd.s32 %s161, 1
      %p165 = scmp.eq.s32.totalorder %s22, 1
      %p166 = scmp.ne.s32.totalorder %s161, %s163
      %p167 = scmp.eq.s32.totalorder %s22, 0
      %p168 = por %p166, %p167
      %p169 = scmp.ne.s32.totalorder %s161, %s163
      %p170 = scmp.eq.s32.totalorder %s27, 1
      %p171 = por %p169, %p170
      %p172 = scmp.ne.s32.totalorder %s163, %s164
      %p173 = scmp.eq.s32.totalorder %s27, 0
      %p174 = por %p172, %p173
      %p175 = scmp.ne.s32.totalorder %s163, %s164
      %p176 = scmp.eq.s32.totalorder %s28, 1
      %p177 = por %p175, %p176
      %p179 = scmp.ne.s32.totalorder %s164, %s178
      %p180 = scmp.eq.s32.totalorder %s28, 0
      %p181 = por %p179, %p180
      %s183 = sadd.s32 %s182, 1
      %p186 = scmp.eq.s32.totalorder %s22, 1
      %p187 = scmp.ne.s32.totalorder %s182, %s184
      %p188 = scmp.eq.s32.totalorder %s22, 0
      %p189 = por %p187, %p188
      %p190 = scmp.ne.s32.totalorder %s182, %s184
      %p191 = scmp.eq.s32.totalorder %s27, 1
      %p192 = por %p190, %p191
      %p193 = scmp.ne.s32.totalorder %s184, %s185
      %p194 = scmp.eq.s32.totalorder %s27, 0
      %p195 = por %p193, %p194
      %p196 = scmp.ne.s32.totalorder %s184, %s185
      %p197 = scmp.eq.s32.totalorder %s28, 1
      %p198 = por %p196, %p197
      %p200 = scmp.ne.s32.totalorder %s185, %s199
      %p201 = scmp.eq.s32.totalorder %s28, 0
      %p202 = por %p200, %p201
      %s204 = sadd.s32 %s203, 1
      %p207 = scmp.eq.s32.totalorder %s22, 1
      %p208 = scmp.ne.s32.totalorder %s203, %s205
      %p209 = scmp.eq.s32.totalorder %s22, 0
      %p210 = por %p208, %p209
      %p211 = scmp.ne.s32.totalorder %s203, %s205
      %p212 = scmp.eq.s32.totalorder %s27, 1
      %p213 = por %p211, %p212
      %p214 = scmp.ne.s32.totalorder %s205, %s206
      %p215 = scmp.eq.s32.totalorder %s27, 0
      %p216 = por %p214, %p215
      %p217 = scmp.ne.s32.totalorder %s205, %s206
      %p218 = scmp.eq.s32.totalorder %s28, 1
      %p219 = por %p217, %p218
      %p221 = scmp.ne.s32.totalorder %s206, %s220
      %p222 = scmp.eq.s32.totalorder %s28, 0
      %p223 = por %p221, %p222
      %s225 = sadd.s32 %s224, 1
      %p228 = scmp.eq.s32.totalorder %s22, 1
      %p229 = scmp.ne.s32.totalorder %s224, %s226
      %p230 = scmp.eq.s32.totalorder %s22, 0
      %p231 = por %p229, %p230
      %p232 = scmp.ne.s32.totalorder %s224, %s226
      %p233 = scmp.eq.s32.totalorder %s27, 1
      %p234 = por %p232, %p233
      %p235 = scmp.ne.s32.totalorder %s226, %s227
      %p236 = scmp.eq.s32.totalorder %s27, 0
      %p237 = por %p235, %p236
      %p238 = scmp.ne.s32.totalorder %s226, %s227
      %p239 = scmp.eq.s32.totalorder %s28, 1
      %p240 = por %p238, %p239
      %p242 = scmp.ne.s32.totalorder %s227, %s241
      %p243 = scmp.eq.s32.totalorder %s28, 0
      %p244 = por %p242, %p243
      %s245 = ssub.s32 %s22, %s29
      %p246 = scmp.eq.s32.totalorder %s245, 0
      %s248 = sadd.s32 %s247, 1
      %s249 = scalar_select %p246, %s247, %s248
      %p252 = pneg %p246
      %p253 = scmp.eq.s32.totalorder %s22, 1
      %p254 = por %p252, %p253
      %p255 = scmp.ne.s32.totalorder %s247, %s250
      %p256 = scmp.eq.s32.totalorder %s22, 0
      %p257 = por %p255, %p256
      %p258 = scmp.ne.s32.totalorder %s247, %s250
      %p259 = scmp.eq.s32.totalorder %s27, 1
      %p260 = por %p258, %p259
      %p261 = scmp.ne.s32.totalorder %s250, %s251
      %p262 = scmp.eq.s32.totalorder %s27, 0
      %p263 = por %p261, %p262
      %p264 = scmp.ne.s32.totalorder %s250, %s251
      %p265 = scmp.eq.s32.totalorder %s28, 1
      %p266 = por %p264, %p265
      %p268 = scmp.ne.s32.totalorder %s251, %s267
      %p269 = scmp.eq.s32.totalorder %s28, 0
      %p270 = por %p268, %p269
      %p271 = scmp.le.s32.totalorder 1, %s22
      %p272 = scmp.lt.s32.totalorder %s22, 3
      %p273 = pnand %p271, %p272
      %p274 = pneg %p273
      // Predicated region
      $region9: #{tpu_custom_call.1} parent=5 // pred_check
        _
      $region10: #{tpu_custom_call.1} parent=5 // pred_check_branch
        %276 = sbr.rel (%p273) target = $region12
      $region11: #{tpu_custom_call.1} parent=5 // pred_region
        %s277 = ssub.s32 %s22, 1
        // Predicated region
        $region13: #{tpu_custom_call.1} parent=11 // pred_check
          %p278 = pneg %p69
        $region14: #{tpu_custom_call.1} parent=11 // pred_check_branch
          %280 = sbr.rel (%p278) target = $region16
        $region15: #{tpu_custom_call.1} parent=11 // pred_region
          _
        $region16: #{tpu_custom_call.1} parent=11 // pred_fallthru
          _
        // Predicated region
        $region17: #{tpu_custom_call.1} parent=11 // pred_check
          %p281 = pneg %p90
        $region18: #{tpu_custom_call.1} parent=11 // pred_check_branch
          %283 = sbr.rel (%p281) target = $region20
        $region19: #{tpu_custom_call.1} parent=11 // pred_region
          _
        $region20: #{tpu_custom_call.1} parent=11 // pred_fallthru
          _
        // Predicated region
        $region21: #{tpu_custom_call.1} parent=11 // pred_check
          %p284 = pneg %p111
        $region22: #{tpu_custom_call.1} parent=11 // pred_check_branch
          %286 = sbr.rel (%p284) target = $region24
        $region23: #{tpu_custom_call.1} parent=11 // pred_region
          _
        $region24: #{tpu_custom_call.1} parent=11 // pred_fallthru
          _
        // Predicated region
        $region25: #{tpu_custom_call.1} parent=11 // pred_check
          %p287 = pneg %p132
        $region26: #{tpu_custom_call.1} parent=11 // pred_check_branch
          %289 = sbr.rel (%p287) target = $region28
        $region27: #{tpu_custom_call.1} parent=11 // pred_region
          _
        $region28: #{tpu_custom_call.1} parent=11 // pred_fallthru
          _
        // Predicated region
        $region29: #{tpu_custom_call.1} parent=11 // pred_check
          %p290 = pneg %p153
        $region30: #{tpu_custom_call.1} parent=11 // pred_check_branch
          %292 = sbr.rel (%p290) target = $region32
        $region31: #{tpu_custom_call.1} parent=11 // pred_region
          _
        $region32: #{tpu_custom_call.1} parent=11 // pred_fallthru
          _
        // Predicated region
        $region33: #{tpu_custom_call.1} parent=11 // pred_check
          %p293 = pneg %p174
        $region34: #{tpu_custom_call.1} parent=11 // pred_check_branch
          %295 = sbr.rel (%p293) target = $region36
        $region35: #{tpu_custom_call.1} parent=11 // pred_region
          _
        $region36: #{tpu_custom_call.1} parent=11 // pred_fallthru
          _
        // Predicated region
        $region37: #{tpu_custom_call.1} parent=11 // pred_check
          %p296 = pneg %p195
        $region38: #{tpu_custom_call.1} parent=11 // pred_check_branch
          %298 = sbr.rel (%p296) target = $region40
        $region39: #{tpu_custom_call.1} parent=11 // pred_region
          _
        $region40: #{tpu_custom_call.1} parent=11 // pred_fallthru
          _
        // Predicated region
        $region41: #{tpu_custom_call.1} parent=11 // pred_check
          %p299 = pneg %p216
        $region42: #{tpu_custom_call.1} parent=11 // pred_check_branch
          %301 = sbr.rel (%p299) target = $region44
        $region43: #{tpu_custom_call.1} parent=11 // pred_region
          _
        $region44: #{tpu_custom_call.1} parent=11 // pred_fallthru
          _
        // Predicated region
        $region45: #{tpu_custom_call.1} parent=11 // pred_check
          %p302 = pneg %p237
        $region46: #{tpu_custom_call.1} parent=11 // pred_check_branch
          %304 = sbr.rel (%p302) target = $region48
        $region47: #{tpu_custom_call.1} parent=11 // pred_region
          _
        $region48: #{tpu_custom_call.1} parent=11 // pred_fallthru
          _
      $region12: #{tpu_custom_call.1} parent=5 // pred_fallthru
        _
      %p305 = scmp.lt.s32.totalorder %s22, 2
      // Predicated region
      $region49: #{tpu_custom_call.1} parent=5 // pred_check
        %p306 = pneg %p305
      $region50: #{tpu_custom_call.1} parent=5 // pred_check_branch
        %308 = sbr.rel (%p306) target = $region52
      $region51: #{tpu_custom_call.1} parent=5 // pred_region
        // Predicated region
        $region53: #{tpu_custom_call.1} parent=51 // pred_check
          %p309 = pneg %p42
        $region54: #{tpu_custom_call.1} parent=51 // pred_check_branch
          %311 = sbr.rel (%p309) target = $region56
        $region55: #{tpu_custom_call.1} parent=51 // pred_region
          %s312 = sand.u32 %s32, 1
          %s313 = scalar_lea.sflag [#allocation4], %s312
          %s314 = sand.u32 %s32, 1
          %s315 = smul.addr %s314, 32
          %s316 = scalar_lea.vmem [#allocation3], %s315
          %s318 = ssub.s32 512, 512
          %319 = vsyncadd %s313, %s318
          %s320 = smul.addr %s22, 4
          %s321 = smul.addr %s320, 128
          %s322 = scalar_lea.hbm %s0, %s321
          %s323 = sshll.u32 %s316, 4
          %s324 = int_to_ptr.vmem [resolvable:$true] %s323
          %329 = dma.hbm_to_vmem [thread:$0]  %s322, 512, %s324, %s313, 256, 256, 16
        $region56: #{tpu_custom_call.1} parent=51 // pred_fallthru
          _
      $region52: #{tpu_custom_call.1} parent=5 // pred_fallthru
        _
      %p330 = scmp.le.s32.totalorder 1, %s22
      %p331 = scmp.lt.s32.totalorder %s22, 3
      %p332 = pnand %p330, %p331
      %p333 = pneg %p332
      // Predicated region
      $region57: #{tpu_custom_call.1} parent=5 // pred_check
        _
      $region58: #{tpu_custom_call.1} parent=5 // pred_check_branch
        %335 = sbr.rel (%p332) target = $region60
      $region59: #{tpu_custom_call.1} parent=5 // pred_region
        %s336 = ssub.s32 %s22, 1
        %s337 = sand.u32 %s35, 1
        %s338 = scalar_lea.sflag [#allocation4], %s337
        %s339 = sand.u32 %s35, 1
        %s340 = smul.addr %s339, 32
        %s341 = scalar_lea.vmem [#allocation3], %s340
        // Predicated region
        $region61: #{tpu_custom_call.1} parent=59 // pred_check
          %p342 = pneg %p48
        $region62: #{tpu_custom_call.1} parent=59 // pred_check_branch
          %344 = sbr.rel (%p342) target = $region64
        $region63: #{tpu_custom_call.1} parent=59 // pred_region
          %345 = dma.done %s338, 512
        $region64: #{tpu_custom_call.1} parent=59 // pred_fallthru
          _
        %s346 = sand.u32 %s35, 1
        %s347 = scalar_lea.sflag [#allocation4], %s346
        %s348 = sand.u32 %s35, 1
        %s349 = smul.addr %s348, 32
        %s350 = scalar_lea.vmem [#allocation3], %s349
        %p351 = pneg %p48
        %p352 = pneg %p45
        %p353 = pneg %p69
        %p354 = pneg %p66
        %p355 = pneg %p90
        %p356 = pneg %p87
        %p357 = pneg %p111
        %p358 = pneg %p108
        %p359 = pneg %p132
        %p360 = pneg %p129
        %p361 = pneg %p153
        %p362 = pneg %p150
        %p363 = pneg %p174
        %p364 = pneg %p171
        %p365 = pneg %p195
        %p366 = pneg %p192
        %p367 = pneg %p216
        %p368 = pneg %p213
        %p369 = pneg %p237
        %p370 = pneg %p234
        %p371 = pneg %p263
        %p372 = pneg %p260
        %s373 = sand.u32 %s250, 1
        %s374 = scalar_lea.sflag [#allocation5], %s373
        %s375 = sand.u32 %s250, 1
        %s376 = smul.addr %s375, 32
        %s377 = scalar_lea.vmem [#allocation6], %s376
        %vm379 = vcmask 27648
        %380 = vst.msk [vmem:[#allocation2] sm:$0xf] %vm379, 0
        %381 = vst.msk [vmem:[#allocation2 + $0x4] sm:$0xf] %vm379, 0
        %vm382 = vcmask 25600
        %vm383 = vsmask.f32 1280
        %vm384 = vmand %vm382, %vm383
        %v385 = vld [vmem:[#allocation2 + $0x8] sm:$0x3]
        %v386 = vsel %vm384, 0, %v385
        %387 = vst [vmem:[#allocation2 + $0x8] sm:$0x3] %v386
        %vm388 = vcmask 27650
        %vm389 = vsmask.f32 7946
        %vm390 = vmand %vm388, %vm389
        %v391 = vld [vmem:[#allocation2 + $0xa0] sm:$0xc]
        %v392 = vsel %vm390, 0, %v391
        %393 = vst [vmem:[#allocation2 + $0xa0] sm:$0xc] %v392
        %394 = vst.msk [vmem:[#allocation2 + $0xa4] sm:$0xf] %vm379, 0
        %395 = vst.msk [vmem:[#allocation2 + $0xa8] sm:$0xf] %vm379, 0
        %396 = vst.msk [vmem:[#allocation2 + $0xac] sm:$0xf] %vm379, 0
        %397 = vst.msk [vmem:[#allocation2 + $0xb0] sm:$0xf] %vm379, 0
        %v398 = vld [vmem:[%s341] sm:$0xff]
        %v399 = vld [vmem:[%s341 + $0x8] sm:$0xff]
        %v400 = vld [vmem:[%s341 + $0x10] sm:$0xff]
        %v401 = vld [vmem:[%s341 + $0x18] sm:$0xff]
        %402 = vxpose.xlu0.b32.start [1/16] %v398, 128
        %403 = vxpose.xlu0.b32.cont [2/16] %v400, 128
        %404 = vxpose.xlu0.b32.cont [3/16] 0.0, 128
        %405 = vxpose.xlu0.b32.cont [4/16] 0.0, 128
        %406 = vxpose.xlu0.b32.cont [5/16] 0.0, 128
        %407 = vxpose.xlu0.b32.cont [6/16] 0.0, 128
        %408 = vxpose.xlu0.b32.cont [7/16] 0.0, 128
        %409 = vxpose.xlu0.b32.cont [8/16] 0.0, 128
        %410 = vxpose.xlu0.b32.cont [9/16] 0.0, 128
        %411 = vxpose.xlu0.b32.cont [10/16] 0.0, 128
        %412 = vxpose.xlu0.b32.cont [11/16] 0.0, 128
        %413 = vxpose.xlu0.b32.cont [12/16] 0.0, 128
        %414 = vxpose.xlu0.b32.cont [13/16] 0.0, 128
        %415 = vxpose.xlu0.b32.cont [14/16] 0.0, 128
        %416 = vxpose.xlu0.b32.cont [15/16] 0.0, 128
        %417 = vxpose.xlu0.b32.end [16/16] 0.0, 128
        %v418 = vpop.trf.xlu0
        %v419 = vpop.trf.xlu0
        %v420 = vpop.trf.xlu0
        %v421 = vpop.trf.xlu0
        %v422 = vpop.trf.xlu0
        %v423 = vpop.trf.xlu0
        %v424 = vpop.trf.xlu0
        %v425 = vpop.trf.xlu0
        %v426 = vpop.trf.xlu0
        %v427 = vpop.trf.xlu0
        %v428 = vpop.trf.xlu0
        %v429 = vpop.trf.xlu0
        %v430 = vpop.trf.xlu0
        %v431 = vpop.trf.xlu0
        %v432 = vpop.trf.xlu0
        %v433 = vpop.trf.xlu0
        %434 = vxpose.xlu0.b32.start [1/16] %v399, 128
        %435 = vxpose.xlu0.b32.cont [2/16] %v401, 128
        %436 = vxpose.xlu0.b32.cont [3/16] 0.0, 128
        %437 = vxpose.xlu0.b32.cont [4/16] 0.0, 128
        %438 = vxpose.xlu0.b32.cont [5/16] 0.0, 128
        %439 = vxpose.xlu0.b32.cont [6/16] 0.0, 128
        %440 = vxpose.xlu0.b32.cont [7/16] 0.0, 128
        %441 = vxpose.xlu0.b32.cont [8/16] 0.0, 128
        %442 = vxpose.xlu0.b32.cont [9/16] 0.0, 128
        %443 = vxpose.xlu0.b32.cont [10/16] 0.0, 128
        %444 = vxpose.xlu0.b32.cont [11/16] 0.0, 128
        %445 = vxpose.xlu0.b32.cont [12/16] 0.0, 128
        %446 = vxpose.xlu0.b32.cont [13/16] 0.0, 128
        %447 = vxpose.xlu0.b32.cont [14/16] 0.0, 128
        %448 = vxpose.xlu0.b32.cont [15/16] 0.0, 128
        %449 = vxpose.xlu0.b32.end [16/16] 0.0, 128
        %v450 = vpop.trf.xlu0
        %v451 = vpop.trf.xlu0
        %v452 = vpop.trf.xlu0
        %v453 = vpop.trf.xlu0
        %v454 = vpop.trf.xlu0
        %v455 = vpop.trf.xlu0
        %v456 = vpop.trf.xlu0
        %v457 = vpop.trf.xlu0
        %v458 = vpop.trf.xlu0
        %v459 = vpop.trf.xlu0
        %v460 = vpop.trf.xlu0
        %v461 = vpop.trf.xlu0
        %v462 = vpop.trf.xlu0
        %v463 = vpop.trf.xlu0
        %v464 = vpop.trf.xlu0
        %v465 = vpop.trf.xlu0
        %v466 = vpack.c.bf16 %v419, %v418
        %v467 = vpack.c.bf16 %v421, %v420
        %v468 = vpack.c.bf16 %v423, %v422
        %v469 = vpack.c.bf16 %v425, %v424
        %v470 = vpack.c.bf16 %v427, %v426
        %v471 = vpack.c.bf16 %v429, %v428
        %v472 = vpack.c.bf16 %v431, %v430
        %v473 = vpack.c.bf16 %v433, %v432
        %v474 = vpack.c.bf16 %v451, %v450
        %v475 = vpack.c.bf16 %v453, %v452
        %v476 = vpack.c.bf16 %v455, %v454
        %v477 = vpack.c.bf16 %v457, %v456
        %v478 = vpack.c.bf16 %v459, %v458
        %v479 = vpack.c.bf16 %v461, %v460
        %v480 = vpack.c.bf16 %v463, %v462
        %v481 = vpack.c.bf16 %v465, %v464
        %v482 = vld [vmem:[%s1] sm:$0xf]
        %v483 = vld [vmem:[%s1 + $0x4] sm:$0xf]
        %v486 = vunpack.c.l.b16 %v482
        %v487 = vunpack.c.l.b16 %v483
        %v488 = vpack.c.b16 %v487, %v486
        %vm490 = vcmask 130048
        %v492 = vsel %vm490, %v466, 0
        %v495 = vsel %vm490, %v467, 0
        %v498 = vsel %vm490, %v468, 0
        %v501 = vsel %vm490, %v469, 0
        %v504 = vsel %vm490, %v470, 0
        %v507 = vsel %vm490, %v471, 0
        %v510 = vsel %vm490, %v472, 0
        %v513 = vsel %vm490, %v473, 0
        %v516 = vsel %vm490, %v474, 0
        %v519 = vsel %vm490, %v475, 0
        %v522 = vsel %vm490, %v476, 0
        %v525 = vsel %vm490, %v477, 0
        %v528 = vsel %vm490, %v478, 0
        %v531 = vsel %vm490, %v479, 0
        %v534 = vsel %vm490, %v480, 0
        %v537 = vsel %vm490, %v481, 0
        %539 = vmatprep.subr.bf16.mxu0 0
        %540 = vmatpush1.bf16.msra.mxu0 %v488
        %541 = vmatprep.subr.bf16.mxu0 0
        %542 = vmatpush1.bf16.msra.mxu0 0
        %543 = vmatprep.subr.bf16.mxu0 0
        %544 = vmatpush1.bf16.msra.mxu0 0
        %545 = vmatprep.subr.bf16.mxu0 0
        %546 = vmatpush1.bf16.msra.mxu0 0
        %547 = vmatprep.subr.bf16.mxu0 0
        %548 = vmatpush1.bf16.msra.mxu0 0
        %549 = vmatprep.subr.bf16.mxu0 0
        %550 = vmatpush1.bf16.msra.mxu0 0
        %551 = vmatprep.subr.bf16.mxu0 0
        %552 = vmatpush1.bf16.msra.mxu0 0
        %553 = vmatprep.subr.bf16.mxu0 0
        %554 = vmatpush1.bf16.msra.mxu0 0
        %555 = vmatprep.subr.bf16.mxu0 0
        %556 = vmatpush1.bf16.msra.mxu0 0
        %557 = vmatprep.subr.bf16.mxu0 0
        %558 = vmatpush1.bf16.msra.mxu0 0
        %559 = vmatprep.subr.bf16.mxu0 0
        %560 = vmatpush1.bf16.msra.mxu0 0
        %561 = vmatprep.subr.bf16.mxu0 0
        %562 = vmatpush1.bf16.msra.mxu0 0
        %563 = vmatprep.subr.bf16.mxu0 0
        %564 = vmatpush1.bf16.msra.mxu0 0
        %565 = vmatprep.subr.bf16.mxu0 0
        %566 = vmatpush1.bf16.msra.mxu0 0
        %567 = vmatprep.subr.bf16.mxu0 0
        %568 = vmatpush1.bf16.msra.mxu0 0
        %569 = vmatprep.subr.bf16.mxu0 0
        %570 = vmatpush1.bf16.msra.mxu0 0
        %571 = vmatprep.mubr.bf16.mxu0 0
        %572 = vmatmul.mubr.bf16.gmra.mrb[0].mxu0 %v492
        %v573 = vpop.f32.mrb[0].mxu0
        %v574 = vadd.f32 0.0, %v573
        %v575 = vpop.f32.mrb[0].mxu0
        %v576 = vpop.f32.mrb[0].mxu0
        %v577 = vadd.f32 0.0, %v576
        %v578 = vpop.f32.mrb[0].mxu0
        %579 = vmatprep.mubr.bf16.mxu0 0
        %580 = vmatmul.mubr.bf16.gmra.mrb[0].mxu0 %v495
        %v581 = vpop.f32.mrb[0].mxu0
        %v582 = vadd.f32 0.0, %v581
        %v583 = vpop.f32.mrb[0].mxu0
        %v584 = vpop.f32.mrb[0].mxu0
        %v585 = vadd.f32 0.0, %v584
        %v586 = vpop.f32.mrb[0].mxu0
        %587 = vmatprep.mubr.bf16.mxu0 0
        %588 = vmatmul.mubr.bf16.gmra.mrb[0].mxu0 %v498
        %v589 = vpop.f32.mrb[0].mxu0
        %v590 = vadd.f32 0.0, %v589
        %v591 = vpop.f32.mrb[0].mxu0
        %v592 = vpop.f32.mrb[0].mxu0
        %v593 = vadd.f32 0.0, %v592
        %v594 = vpop.f32.mrb[0].mxu0
        %595 = vmatprep.mubr.bf16.mxu0 0
        %596 = vmatmul.mubr.bf16.gmra.mrb[0].mxu0 %v501
        %v597 = vpop.f32.mrb[0].mxu0
        %v598 = vadd.f32 0.0, %v597
        %v599 = vpop.f32.mrb[0].mxu0
        %v600 = vpop.f32.mrb[0].mxu0
        %v601 = vadd.f32 0.0, %v600
        %v602 = vpop.f32.mrb[0].mxu0
        %603 = vmatprep.mubr.bf16.mxu0 0
        %604 = vmatmul.mubr.bf16.gmra.mrb[0].mxu0 %v504
        %v605 = vpop.f32.mrb[0].mxu0
        %v606 = vadd.f32 0.0, %v605
        %v607 = vpop.f32.mrb[0].mxu0
        %v608 = vpop.f32.mrb[0].mxu0
        %v609 = vadd.f32 0.0, %v608
        %v610 = vpop.f32.mrb[0].mxu0
        %611 = vmatprep.mubr.bf16.mxu0 0
        %612 = vmatmul.mubr.bf16.gmra.mrb[0].mxu0 %v507
        %v613 = vpop.f32.mrb[0].mxu0
        %v614 = vadd.f32 0.0, %v613
        %v615 = vpop.f32.mrb[0].mxu0
        %v616 = vpop.f32.mrb[0].mxu0
        %v617 = vadd.f32 0.0, %v616
        %v618 = vpop.f32.mrb[0].mxu0
        %619 = vmatprep.mubr.bf16.mxu0 0
        %620 = vmatmul.mubr.bf16.gmra.mrb[0].mxu0 %v510
        %v621 = vpop.f32.mrb[0].mxu0
        %v622 = vadd.f32 0.0, %v621
        %v623 = vpop.f32.mrb[0].mxu0
        %v624 = vpop.f32.mrb[0].mxu0
        %v625 = vadd.f32 0.0, %v624
        %v626 = vpop.f32.mrb[0].mxu0
        %627 = vmatprep.mubr.bf16.mxu0 0
        %628 = vmatmul.mubr.bf16.gmra.mrb[0].mxu0 %v513
        %v629 = vpop.f32.mrb[0].mxu0
        %v630 = vadd.f32 0.0, %v629
        %v631 = vpop.f32.mrb[0].mxu0
        %v632 = vpop.f32.mrb[0].mxu0
        %v633 = vadd.f32 0.0, %v632
        %v634 = vpop.f32.mrb[0].mxu0
        %635 = vmatprep.mubr.bf16.mxu0 0
        %636 = vmatmul.mubr.bf16.gmra.mrb[0].mxu0 %v516
        %v637 = vpop.f32.mrb[0].mxu0
        %v638 = vadd.f32 0.0, %v637
        %v639 = vpop.f32.mrb[0].mxu0
        %v640 = vpop.f32.mrb[0].mxu0
        %v641 = vadd.f32 0.0, %v640
        %v642 = vpop.f32.mrb[0].mxu0
        %643 = vmatprep.mubr.bf16.mxu0 0
        %644 = vmatmul.mubr.bf16.gmra.mrb[0].mxu0 %v519
        %v645 = vpop.f32.mrb[0].mxu0
        %v646 = vadd.f32 0.0, %v645
        %v647 = vpop.f32.mrb[0].mxu0
        %v648 = vpop.f32.mrb[0].mxu0
        %v649 = vadd.f32 0.0, %v648
        %v650 = vpop.f32.mrb[0].mxu0
        %651 = vmatprep.mubr.bf16.mxu0 0
        %652 = vmatmul.mubr.bf16.gmra.mrb[0].mxu0 %v522
        %v653 = vpop.f32.mrb[0].mxu0
        %v654 = vadd.f32 0.0, %v653
        %v655 = vpop.f32.mrb[0].mxu0
        %v656 = vpop.f32.mrb[0].mxu0
        %v657 = vadd.f32 0.0, %v656
        %v658 = vpop.f32.mrb[0].mxu0
        %659 = vmatprep.mubr.bf16.mxu0 0
        %660 = vmatmul.mubr.bf16.gmra.mrb[0].mxu0 %v525
        %v661 = vpop.f32.mrb[0].mxu0
        %v662 = vadd.f32 0.0, %v661
        %v663 = vpop.f32.mrb[0].mxu0
        %v664 = vpop.f32.mrb[0].mxu0
        %v665 = vadd.f32 0.0, %v664
        %v666 = vpop.f32.mrb[0].mxu0
        %667 = vmatprep.mubr.bf16.mxu0 0
        %668 = vmatmul.mubr.bf16.gmra.mrb[0].mxu0 %v528
        %v669 = vpop.f32.mrb[0].mxu0
        %v670 = vadd.f32 0.0, %v669
        %v671 = vpop.f32.mrb[0].mxu0
        %v672 = vpop.f32.mrb[0].mxu0
        %v673 = vadd.f32 0.0, %v672
        %v674 = vpop.f32.mrb[0].mxu0
        %675 = vmatprep.mubr.bf16.mxu0 0
        %676 = vmatmul.mubr.bf16.gmra.mrb[0].mxu0 %v531
        %v677 = vpop.f32.mrb[0].mxu0
        %v678 = vadd.f32 0.0, %v677
        %v679 = vpop.f32.mrb[0].mxu0
        %v680 = vpop.f32.mrb[0].mxu0
        %v681 = vadd.f32 0.0, %v680
        %v682 = vpop.f32.mrb[0].mxu0
        %683 = vmatprep.mubr.bf16.mxu0 0
        %684 = vmatmul.mubr.bf16.gmra.mrb[0].mxu0 %v534
        %v685 = vpop.f32.mrb[0].mxu0
        %v686 = vadd.f32 0.0, %v685
        %v687 = vpop.f32.mrb[0].mxu0
        %v688 = vpop.f32.mrb[0].mxu0
        %v689 = vadd.f32 0.0, %v688
        %v690 = vpop.f32.mrb[0].mxu0
        %691 = vmatprep.mubr.bf16.mxu0 0
        %692 = vmatmul.mubr.bf16.gmra.mrb[0].mxu0 %v537
        %v693 = vpop.f32.mrb[0].mxu0
        %v694 = vadd.f32 0.0, %v693
        %v695 = vpop.f32.mrb[0].mxu0
        %v696 = vpop.f32.mrb[0].mxu0
        %v697 = vadd.f32 0.0, %v696
        %v698 = vpop.f32.mrb[0].mxu0
        %699 = vdwg.mxu0
        %v700 = vld [vmem:[%s2] sm:$0x1]
        %v702 = vlaneseq
        %v703 = vshrl.u32 %v702, 7
        %v704 = vsub.s32 0, %v703
        %v705 = vrot.slane %v700, %v704
        %v707 = vmul.f32 %v574, %v705
        %v708 = vmul.f32 %v577, %v705
        %v709 = vmul.f32 %v582, %v705
        %v710 = vmul.f32 %v585, %v705
        %v711 = vmul.f32 %v590, %v705
        %v712 = vmul.f32 %v593, %v705
        %v713 = vmul.f32 %v598, %v705
        %v714 = vmul.f32 %v601, %v705
        %v715 = vmul.f32 %v606, %v705
        %v716 = vmul.f32 %v609, %v705
        %v717 = vmul.f32 %v614, %v705
        %v718 = vmul.f32 %v617, %v705
        %v719 = vmul.f32 %v622, %v705
        %v720 = vmul.f32 %v625, %v705
        %v721 = vmul.f32 %v630, %v705
        %v722 = vmul.f32 %v633, %v705
        %v723 = vmul.f32 %v638, %v705
        %v724 = vmul.f32 %v641, %v705
        %v725 = vmul.f32 %v646, %v705
        %v726 = vmul.f32 %v649, %v705
        %v727 = vmul.f32 %v654, %v705
        %v728 = vmul.f32 %v657, %v705
        %v729 = vmul.f32 %v662, %v705
        %v730 = vmul.f32 %v665, %v705
        %v731 = vmul.f32 %v670, %v705
        %v732 = vmul.f32 %v673, %v705
        %v733 = vmul.f32 %v678, %v705
        %v734 = vmul.f32 %v681, %v705
        %v735 = vmul.f32 %v686, %v705
        %v736 = vmul.f32 %v689, %v705
        %v737 = vmul.f32 %v694, %v705
        %v738 = vmul.f32 %v697, %v705
        %v739 = vld [vmem:[%s3] sm:$0x1]
        %v741 = vlaneseq
        %v742 = vshrl.u32 %v741, 7
        %v743 = vsub.s32 0, %v742
        %v744 = vrot.slane %v739, %v743
        %v746 = vadd.f32 %v707, %v744
        %v747 = vadd.f32 %v708, %v744
        %v748 = vadd.f32 %v709, %v744
        %v749 = vadd.f32 %v710, %v744
        %v750 = vadd.f32 %v711, %v744
        %v751 = vadd.f32 %v712, %v744
        %v752 = vadd.f32 %v713, %v744
        %v753 = vadd.f32 %v714, %v744
        %v754 = vadd.f32 %v715, %v744
        %v755 = vadd.f32 %v716, %v744
        %v756 = vadd.f32 %v717, %v744
        %v757 = vadd.f32 %v718, %v744
        %v758 = vadd.f32 %v719, %v744
        %v759 = vadd.f32 %v720, %v744
        %v760 = vadd.f32 %v721, %v744
        %v761 = vadd.f32 %v722, %v744
        %v762 = vadd.f32 %v723, %v744
        %v763 = vadd.f32 %v724, %v744
        %v764 = vadd.f32 %v725, %v744
        %v765 = vadd.f32 %v726, %v744
        %v766 = vadd.f32 %v727, %v744
        %v767 = vadd.f32 %v728, %v744
        %v768 = vadd.f32 %v729, %v744
        %v769 = vadd.f32 %v730, %v744
        %v770 = vadd.f32 %v731, %v744
        %v771 = vadd.f32 %v732, %v744
        %v772 = vadd.f32 %v733, %v744
        %v773 = vadd.f32 %v734, %v744
        %v774 = vadd.f32 %v735, %v744
        %v775 = vadd.f32 %v736, %v744
        %v776 = vadd.f32 %v737, %v744
        %v777 = vadd.f32 %v738, %v744
        %v778 = vmax.f32 %v746, 0.0
        %v779 = vmax.f32 %v747, 0.0
        %v780 = vmax.f32 %v748, 0.0
        %v781 = vmax.f32 %v749, 0.0
        %v782 = vmax.f32 %v750, 0.0
        %v783 = vmax.f32 %v751, 0.0
        %v784 = vmax.f32 %v752, 0.0
        %v785 = vmax.f32 %v753, 0.0
        %v786 = vmax.f32 %v754, 0.0
        %v787 = vmax.f32 %v755, 0.0
        %v788 = vmax.f32 %v756, 0.0
        %v789 = vmax.f32 %v757, 0.0
        %v790 = vmax.f32 %v758, 0.0
        %v791 = vmax.f32 %v759, 0.0
        %v792 = vmax.f32 %v760, 0.0
        %v793 = vmax.f32 %v761, 0.0
        %v794 = vmax.f32 %v762, 0.0
        %v795 = vmax.f32 %v763, 0.0
        %v796 = vmax.f32 %v764, 0.0
        %v797 = vmax.f32 %v765, 0.0
        %v798 = vmax.f32 %v766, 0.0
        %v799 = vmax.f32 %v767, 0.0
        %v800 = vmax.f32 %v768, 0.0
        %v801 = vmax.f32 %v769, 0.0
        %v802 = vmax.f32 %v770, 0.0
        %v803 = vmax.f32 %v771, 0.0
        %v804 = vmax.f32 %v772, 0.0
        %v805 = vmax.f32 %v773, 0.0
        %v806 = vmax.f32 %v774, 0.0
        %v807 = vmax.f32 %v775, 0.0
        %v808 = vmax.f32 %v776, 0.0
        %v809 = vmax.f32 %v777, 0.0
        %v810 = vpack.c.bf16 %v779, %v778
        %v811 = vpack.c.bf16 %v781, %v780
        %v812 = vpack.c.bf16 %v783, %v782
        %v813 = vpack.c.bf16 %v785, %v784
        %v814 = vpack.c.bf16 %v787, %v786
        %v815 = vpack.c.bf16 %v789, %v788
        %v816 = vpack.c.bf16 %v791, %v790
        %v817 = vpack.c.bf16 %v793, %v792
        %v818 = vpack.c.bf16 %v795, %v794
        %v819 = vpack.c.bf16 %v797, %v796
        %v820 = vpack.c.bf16 %v799, %v798
        %v821 = vpack.c.bf16 %v801, %v800
        %v822 = vpack.c.bf16 %v803, %v802
        %v823 = vpack.c.bf16 %v805, %v804
        %v824 = vpack.c.bf16 %v807, %v806
        %v825 = vpack.c.bf16 %v809, %v808
        %v843 = vcombine.high %v810, %v810
        %v845 = vunpack.c.l.s4 1966171168
        %v846 = vunpack.c.0.s8 %v845
        %v847 = vlaneseq
        %v848 = vshrl.u32 %v847, 7
        %v849 = vsub.s32 %v846, %v848
        %v850 = vrot.slane %v810, %v849
        %v852 = vunpack.c.l.s4 1966171168
        %v853 = vunpack.c.0.s8 %v852
        %v854 = vlaneseq
        %v855 = vshrl.u32 %v854, 7
        %v856 = vsub.s32 %v853, %v855
        %v857 = vrot.slane %v843, %v856
        %v858 = vcombine.high %v850, %v850
        %v859 = vcombine.high %v857, %v857
        %v861 = vunpack.c.l.s4 1966171168
        %v862 = vunpack.c.0.s8 %v861
        %v863 = vlaneseq
        %v864 = vshrl.u32 %v863, 7
        %v865 = vsub.s32 %v862, %v864
        %v866 = vrot.slane %v850, %v865
        %v868 = vunpack.c.l.s4 1966171168
        %v869 = vunpack.c.0.s8 %v868
        %v870 = vlaneseq
        %v871 = vshrl.u32 %v870, 7
        %v872 = vsub.s32 %v869, %v871
        %v873 = vrot.slane %v857, %v872
        %v875 = vunpack.c.l.s4 1966171168
        %v876 = vunpack.c.0.s8 %v875
        %v877 = vlaneseq
        %v878 = vshrl.u32 %v877, 7
        %v879 = vsub.s32 %v876, %v878
        %v880 = vrot.slane %v858, %v879
        %v882 = vunpack.c.l.s4 1966171168
        %v883 = vunpack.c.0.s8 %v882
        %v884 = vlaneseq
        %v885 = vshrl.u32 %v884, 7
        %v886 = vsub.s32 %v883, %v885
        %v887 = vrot.slane %v859, %v886
        %v888 = vcombine.high %v866, %v866
        %v889 = vcombine.high %v873, %v873
        %v890 = vcombine.high %v880, %v880
        %v891 = vcombine.high %v887, %v887
        %v893 = vunpack.c.l.s4 1966171168
        %v894 = vunpack.c.0.s8 %v893
        %v895 = vlaneseq
        %v896 = vshrl.u32 %v895, 7
        %v897 = vsub.s32 %v894, %v896
        %v898 = vrot.slane 0, %v897
        %v900 = vunpack.c.l.s4 1966171168
        %v901 = vunpack.c.0.s8 %v900
        %v902 = vlaneseq
        %v903 = vshrl.u32 %v902, 7
        %v904 = vsub.s32 %v901, %v903
        %v905 = vrot.slane %v898, %v904
        %v906 = vcombine.high %v811, %v811
        %v908 = vunpack.c.l.s4 1966171168
        %v909 = vunpack.c.0.s8 %v908
        %v910 = vlaneseq
        %v911 = vshrl.u32 %v910, 7
        %v912 = vsub.s32 %v909, %v911
        %v913 = vrot.slane %v811, %v912
        %v915 = vunpack.c.l.s4 1966171168
        %v916 = vunpack.c.0.s8 %v915
        %v917 = vlaneseq
        %v918 = vshrl.u32 %v917, 7
        %v919 = vsub.s32 %v916, %v918
        %v920 = vrot.slane %v906, %v919
        %v921 = vcombine.high %v913, %v913
        %v922 = vcombine.high %v920, %v920
        %v924 = vunpack.c.l.s4 1966171168
        %v925 = vunpack.c.0.s8 %v924
        %v926 = vlaneseq
        %v927 = vshrl.u32 %v926, 7
        %v928 = vsub.s32 %v925, %v927
        %v929 = vrot.slane %v913, %v928
        %v931 = vunpack.c.l.s4 1966171168
        %v932 = vunpack.c.0.s8 %v931
        %v933 = vlaneseq
        %v934 = vshrl.u32 %v933, 7
        %v935 = vsub.s32 %v932, %v934
        %v936 = vrot.slane %v920, %v935
        %v938 = vunpack.c.l.s4 1966171168
        %v939 = vunpack.c.0.s8 %v938
        %v940 = vlaneseq
        %v941 = vshrl.u32 %v940, 7
        %v942 = vsub.s32 %v939, %v941
        %v943 = vrot.slane %v921, %v942
        %v945 = vunpack.c.l.s4 1966171168
        %v946 = vunpack.c.0.s8 %v945
        %v947 = vlaneseq
        %v948 = vshrl.u32 %v947, 7
        %v949 = vsub.s32 %v946, %v948
        %v950 = vrot.slane %v922, %v949
        %v951 = vcombine.high %v929, %v929
        %v952 = vcombine.high %v936, %v936
        %v953 = vcombine.high %v943, %v943
        %v954 = vcombine.high %v950, %v950
        %v955 = vcombine.high %v812, %v812
        %v957 = vunpack.c.l.s4 1966171168
        %v958 = vunpack.c.0.s8 %v957
        %v959 = vlaneseq
        %v960 = vshrl.u32 %v959, 7
        %v961 = vsub.s32 %v958, %v960
        %v962 = vrot.slane %v812, %v961
        %v964 = vunpack.c.l.s4 1966171168
        %v965 = vunpack.c.0.s8 %v964
        %v966 = vlaneseq
        %v967 = vshrl.u32 %v966, 7
        %v968 = vsub.s32 %v965, %v967
        %v969 = vrot.slane %v955, %v968
        %v970 = vcombine.high %v962, %v962
        %v971 = vcombine.high %v969, %v969
        %v973 = vunpack.c.l.s4 1966171168
        %v974 = vunpack.c.0.s8 %v973
        %v975 = vlaneseq
        %v976 = vshrl.u32 %v975, 7
        %v977 = vsub.s32 %v974, %v976
        %v978 = vrot.slane %v962, %v977
        %v980 = vunpack.c.l.s4 1966171168
        %v981 = vunpack.c.0.s8 %v980
        %v982 = vlaneseq
        %v983 = vshrl.u32 %v982, 7
        %v984 = vsub.s32 %v981, %v983
        %v985 = vrot.slane %v969, %v984
        %v987 = vunpack.c.l.s4 1966171168
        %v988 = vunpack.c.0.s8 %v987
        %v989 = vlaneseq
        %v990 = vshrl.u32 %v989, 7
        %v991 = vsub.s32 %v988, %v990
        %v992 = vrot.slane %v970, %v991
        %v994 = vunpack.c.l.s4 1966171168
        %v995 = vunpack.c.0.s8 %v994
        %v996 = vlaneseq
        %v997 = vshrl.u32 %v996, 7
        %v998 = vsub.s32 %v995, %v997
        %v999 = vrot.slane %v971, %v998
        %v1000 = vcombine.high %v978, %v978
        %v1001 = vcombine.high %v985, %v985
        %v1002 = vcombine.high %v992, %v992
        %v1003 = vcombine.high %v999, %v999
        %v1004 = vcombine.high %v813, %v813
        %v1006 = vunpack.c.l.s4 1966171168
        %v1007 = vunpack.c.0.s8 %v1006
        %v1008 = vlaneseq
        %v1009 = vshrl.u32 %v1008, 7
        %v1010 = vsub.s32 %v1007, %v1009
        %v1011 = vrot.slane %v813, %v1010
        %v1013 = vunpack.c.l.s4 1966171168
        %v1014 = vunpack.c.0.s8 %v1013
        %v1015 = vlaneseq
        %v1016 = vshrl.u32 %v1015, 7
        %v1017 = vsub.s32 %v1014, %v1016
        %v1018 = vrot.slane %v1004, %v1017
        %v1019 = vcombine.high %v1011, %v1011
        %v1020 = vcombine.high %v1018, %v1018
        %v1022 = vunpack.c.l.s4 1966171168
        %v1023 = vunpack.c.0.s8 %v1022
        %v1024 = vlaneseq
        %v1025 = vshrl.u32 %v1024, 7
        %v1026 = vsub.s32 %v1023, %v1025
        %v1027 = vrot.slane %v1011, %v1026
        %v1029 = vunpack.c.l.s4 1966171168
        %v1030 = vunpack.c.0.s8 %v1029
        %v1031 = vlaneseq
        %v1032 = vshrl.u32 %v1031, 7
        %v1033 = vsub.s32 %v1030, %v1032
        %v1034 = vrot.slane %v1018, %v1033
        %v1036 = vunpack.c.l.s4 1966171168
        %v1037 = vunpack.c.0.s8 %v1036
        %v1038 = vlaneseq
        %v1039 = vshrl.u32 %v1038, 7
        %v1040 = vsub.s32 %v1037, %v1039
        %v1041 = vrot.slane %v1019, %v1040
        %v1043 = vunpack.c.l.s4 1966171168
        %v1044 = vunpack.c.0.s8 %v1043
        %v1045 = vlaneseq
        %v1046 = vshrl.u32 %v1045, 7
        %v1047 = vsub.s32 %v1044, %v1046
        %v1048 = vrot.slane %v1020, %v1047
        %v1049 = vcombine.high %v1027, %v1027
        %v1050 = vcombine.high %v1034, %v1034
        %v1051 = vcombine.high %v1041, %v1041
        %v1052 = vcombine.high %v1048, %v1048
        %v1053 = vcombine.high %v814, %v814
        %v1055 = vunpack.c.l.s4 1966171168
        %v1056 = vunpack.c.0.s8 %v1055
        %v1057 = vlaneseq
        %v1058 = vshrl.u32 %v1057, 7
        %v1059 = vsub.s32 %v1056, %v1058
        %v1060 = vrot.slane %v814, %v1059
        %v1062 = vunpack.c.l.s4 1966171168
        %v1063 = vunpack.c.0.s8 %v1062
        %v1064 = vlaneseq
        %v1065 = vshrl.u32 %v1064, 7
        %v1066 = vsub.s32 %v1063, %v1065
        %v1067 = vrot.slane %v1053, %v1066
        %v1068 = vcombine.high %v1060, %v1060
        %v1069 = vcombine.high %v1067, %v1067
        %v1071 = vunpack.c.l.s4 1966171168
        %v1072 = vunpack.c.0.s8 %v1071
        %v1073 = vlaneseq
        %v1074 = vshrl.u32 %v1073, 7
        %v1075 = vsub.s32 %v1072, %v1074
        %v1076 = vrot.slane %v1060, %v1075
        %v1078 = vunpack.c.l.s4 1966171168
        %v1079 = vunpack.c.0.s8 %v1078
        %v1080 = vlaneseq
        %v1081 = vshrl.u32 %v1080, 7
        %v1082 = vsub.s32 %v1079, %v1081
        %v1083 = vrot.slane %v1067, %v1082
        %v1085 = vunpack.c.l.s4 1966171168
        %v1086 = vunpack.c.0.s8 %v1085
        %v1087 = vlaneseq
        %v1088 = vshrl.u32 %v1087, 7
        %v1089 = vsub.s32 %v1086, %v1088
        %v1090 = vrot.slane %v1068, %v1089
        %v1092 = vunpack.c.l.s4 1966171168
        %v1093 = vunpack.c.0.s8 %v1092
        %v1094 = vlaneseq
        %v1095 = vshrl.u32 %v1094, 7
        %v1096 = vsub.s32 %v1093, %v1095
        %v1097 = vrot.slane %v1069, %v1096
        %v1098 = vcombine.high %v1076, %v1076
        %v1099 = vcombine.high %v1083, %v1083
        %v1100 = vcombine.high %v1090, %v1090
        %v1101 = vcombine.high %v1097, %v1097
        %v1102 = vcombine.high %v815, %v815
        %v1104 = vunpack.c.l.s4 1966171168
        %v1105 = vunpack.c.0.s8 %v1104
        %v1106 = vlaneseq
        %v1107 = vshrl.u32 %v1106, 7
        %v1108 = vsub.s32 %v1105, %v1107
        %v1109 = vrot.slane %v815, %v1108
        %v1111 = vunpack.c.l.s4 1966171168
        %v1112 = vunpack.c.0.s8 %v1111
        %v1113 = vlaneseq
        %v1114 = vshrl.u32 %v1113, 7
        %v1115 = vsub.s32 %v1112, %v1114
        %v1116 = vrot.slane %v1102, %v1115
        %v1117 = vcombine.high %v1109, %v1109
        %v1118 = vcombine.high %v1116, %v1116
        %v1120 = vunpack.c.l.s4 1966171168
        %v1121 = vunpack.c.0.s8 %v1120
        %v1122 = vlaneseq
        %v1123 = vshrl.u32 %v1122, 7
        %v1124 = vsub.s32 %v1121, %v1123
        %v1125 = vrot.slane %v1109, %v1124
        %v1127 = vunpack.c.l.s4 1966171168
        %v1128 = vunpack.c.0.s8 %v1127
        %v1129 = vlaneseq
        %v1130 = vshrl.u32 %v1129, 7
        %v1131 = vsub.s32 %v1128, %v1130
        %v1132 = vrot.slane %v1116, %v1131
        %v1134 = vunpack.c.l.s4 1966171168
        %v1135 = vunpack.c.0.s8 %v1134
        %v1136 = vlaneseq
        %v1137 = vshrl.u32 %v1136, 7
        %v1138 = vsub.s32 %v1135, %v1137
        %v1139 = vrot.slane %v1117, %v1138
        %v1141 = vunpack.c.l.s4 1966171168
        %v1142 = vunpack.c.0.s8 %v1141
        %v1143 = vlaneseq
        %v1144 = vshrl.u32 %v1143, 7
        %v1145 = vsub.s32 %v1142, %v1144
        %v1146 = vrot.slane %v1118, %v1145
        %v1147 = vcombine.high %v1125, %v1125
        %v1148 = vcombine.high %v1132, %v1132
        %v1149 = vcombine.high %v1139, %v1139
        %v1150 = vcombine.high %v1146, %v1146
        %v1151 = vcombine.high %v816, %v816
        %v1153 = vunpack.c.l.s4 1966171168
        %v1154 = vunpack.c.0.s8 %v1153
        %v1155 = vlaneseq
        %v1156 = vshrl.u32 %v1155, 7
        %v1157 = vsub.s32 %v1154, %v1156
        %v1158 = vrot.slane %v816, %v1157
        %v1160 = vunpack.c.l.s4 1966171168
        %v1161 = vunpack.c.0.s8 %v1160
        %v1162 = vlaneseq
        %v1163 = vshrl.u32 %v1162, 7
        %v1164 = vsub.s32 %v1161, %v1163
        %v1165 = vrot.slane %v1151, %v1164
        %v1166 = vcombine.high %v1158, %v1158
        %v1167 = vcombine.high %v1165, %v1165
        %v1169 = vunpack.c.l.s4 1966171168
        %v1170 = vunpack.c.0.s8 %v1169
        %v1171 = vlaneseq
        %v1172 = vshrl.u32 %v1171, 7
        %v1173 = vsub.s32 %v1170, %v1172
        %v1174 = vrot.slane %v1158, %v1173
        %v1176 = vunpack.c.l.s4 1966171168
        %v1177 = vunpack.c.0.s8 %v1176
        %v1178 = vlaneseq
        %v1179 = vshrl.u32 %v1178, 7
        %v1180 = vsub.s32 %v1177, %v1179
        %v1181 = vrot.slane %v1165, %v1180
        %v1183 = vunpack.c.l.s4 1966171168
        %v1184 = vunpack.c.0.s8 %v1183
        %v1185 = vlaneseq
        %v1186 = vshrl.u32 %v1185, 7
        %v1187 = vsub.s32 %v1184, %v1186
        %v1188 = vrot.slane %v1166, %v1187
        %v1190 = vunpack.c.l.s4 1966171168
        %v1191 = vunpack.c.0.s8 %v1190
        %v1192 = vlaneseq
        %v1193 = vshrl.u32 %v1192, 7
        %v1194 = vsub.s32 %v1191, %v1193
        %v1195 = vrot.slane %v1167, %v1194
        %v1196 = vcombine.high %v1174, %v1174
        %v1197 = vcombine.high %v1181, %v1181
        %v1198 = vcombine.high %v1188, %v1188
        %v1199 = vcombine.high %v1195, %v1195
        %v1200 = vcombine.high %v817, %v817
        %v1202 = vunpack.c.l.s4 1966171168
        %v1203 = vunpack.c.0.s8 %v1202
        %v1204 = vlaneseq
        %v1205 = vshrl.u32 %v1204, 7
        %v1206 = vsub.s32 %v1203, %v1205
        %v1207 = vrot.slane %v817, %v1206
        %v1209 = vunpack.c.l.s4 1966171168
        %v1210 = vunpack.c.0.s8 %v1209
        %v1211 = vlaneseq
        %v1212 = vshrl.u32 %v1211, 7
        %v1213 = vsub.s32 %v1210, %v1212
        %v1214 = vrot.slane %v1200, %v1213
        %v1215 = vcombine.high %v1207, %v1207
        %v1216 = vcombine.high %v1214, %v1214
        %v1218 = vunpack.c.l.s4 1966171168
        %v1219 = vunpack.c.0.s8 %v1218
        %v1220 = vlaneseq
        %v1221 = vshrl.u32 %v1220, 7
        %v1222 = vsub.s32 %v1219, %v1221
        %v1223 = vrot.slane %v1207, %v1222
        %v1225 = vunpack.c.l.s4 1966171168
        %v1226 = vunpack.c.0.s8 %v1225
        %v1227 = vlaneseq
        %v1228 = vshrl.u32 %v1227, 7
        %v1229 = vsub.s32 %v1226, %v1228
        %v1230 = vrot.slane %v1214, %v1229
        %v1232 = vunpack.c.l.s4 1966171168
        %v1233 = vunpack.c.0.s8 %v1232
        %v1234 = vlaneseq
        %v1235 = vshrl.u32 %v1234, 7
        %v1236 = vsub.s32 %v1233, %v1235
        %v1237 = vrot.slane %v1215, %v1236
        %v1239 = vunpack.c.l.s4 1966171168
        %v1240 = vunpack.c.0.s8 %v1239
        %v1241 = vlaneseq
        %v1242 = vshrl.u32 %v1241, 7
        %v1243 = vsub.s32 %v1240, %v1242
        %v1244 = vrot.slane %v1216, %v1243
        %v1245 = vcombine.high %v1223, %v1223
        %v1246 = vcombine.high %v1230, %v1230
        %v1247 = vcombine.high %v1237, %v1237
        %v1248 = vcombine.high %v1244, %v1244
        %v1249 = vcombine.high %v818, %v818
        %v1251 = vunpack.c.l.s4 1966171168
        %v1252 = vunpack.c.0.s8 %v1251
        %v1253 = vlaneseq
        %v1254 = vshrl.u32 %v1253, 7
        %v1255 = vsub.s32 %v1252, %v1254
        %v1256 = vrot.slane %v818, %v1255
        %v1258 = vunpack.c.l.s4 1966171168
        %v1259 = vunpack.c.0.s8 %v1258
        %v1260 = vlaneseq
        %v1261 = vshrl.u32 %v1260, 7
        %v1262 = vsub.s32 %v1259, %v1261
        %v1263 = vrot.slane %v1249, %v1262
        %v1264 = vcombine.high %v1256, %v1256
        %v1265 = vcombine.high %v1263, %v1263
        %v1267 = vunpack.c.l.s4 1966171168
        %v1268 = vunpack.c.0.s8 %v1267
        %v1269 = vlaneseq
        %v1270 = vshrl.u32 %v1269, 7
        %v1271 = vsub.s32 %v1268, %v1270
        %v1272 = vrot.slane %v1256, %v1271
        %v1274 = vunpack.c.l.s4 1966171168
        %v1275 = vunpack.c.0.s8 %v1274
        %v1276 = vlaneseq
        %v1277 = vshrl.u32 %v1276, 7
        %v1278 = vsub.s32 %v1275, %v1277
        %v1279 = vrot.slane %v1263, %v1278
        %v1281 = vunpack.c.l.s4 1966171168
        %v1282 = vunpack.c.0.s8 %v1281
        %v1283 = vlaneseq
        %v1284 = vshrl.u32 %v1283, 7
        %v1285 = vsub.s32 %v1282, %v1284
        %v1286 = vrot.slane %v1264, %v1285
        %v1288 = vunpack.c.l.s4 1966171168
        %v1289 = vunpack.c.0.s8 %v1288
        %v1290 = vlaneseq
        %v1291 = vshrl.u32 %v1290, 7
        %v1292 = vsub.s32 %v1289, %v1291
        %v1293 = vrot.slane %v1265, %v1292
        %v1294 = vcombine.high %v1272, %v1272
        %v1295 = vcombine.high %v1279, %v1279
        %v1296 = vcombine.high %v1286, %v1286
        %v1297 = vcombine.high %v1293, %v1293
        %v1298 = vcombine.high %v819, %v819
        %v1300 = vunpack.c.l.s4 1966171168
        %v1301 = vunpack.c.0.s8 %v1300
        %v1302 = vlaneseq
        %v1303 = vshrl.u32 %v1302, 7
        %v1304 = vsub.s32 %v1301, %v1303
        %v1305 = vrot.slane %v819, %v1304
        %v1307 = vunpack.c.l.s4 1966171168
        %v1308 = vunpack.c.0.s8 %v1307
        %v1309 = vlaneseq
        %v1310 = vshrl.u32 %v1309, 7
        %v1311 = vsub.s32 %v1308, %v1310
        %v1312 = vrot.slane %v1298, %v1311
        %v1313 = vcombine.high %v1305, %v1305
        %v1314 = vcombine.high %v1312, %v1312
        %v1316 = vunpack.c.l.s4 1966171168
        %v1317 = vunpack.c.0.s8 %v1316
        %v1318 = vlaneseq
        %v1319 = vshrl.u32 %v1318, 7
        %v1320 = vsub.s32 %v1317, %v1319
        %v1321 = vrot.slane %v1305, %v1320
        %v1323 = vunpack.c.l.s4 1966171168
        %v1324 = vunpack.c.0.s8 %v1323
        %v1325 = vlaneseq
        %v1326 = vshrl.u32 %v1325, 7
        %v1327 = vsub.s32 %v1324, %v1326
        %v1328 = vrot.slane %v1312, %v1327
        %v1330 = vunpack.c.l.s4 1966171168
        %v1331 = vunpack.c.0.s8 %v1330
        %v1332 = vlaneseq
        %v1333 = vshrl.u32 %v1332, 7
        %v1334 = vsub.s32 %v1331, %v1333
        %v1335 = vrot.slane %v1313, %v1334
        %v1337 = vunpack.c.l.s4 1966171168
        %v1338 = vunpack.c.0.s8 %v1337
        %v1339 = vlaneseq
        %v1340 = vshrl.u32 %v1339, 7
        %v1341 = vsub.s32 %v1338, %v1340
        %v1342 = vrot.slane %v1314, %v1341
        %v1343 = vcombine.high %v1321, %v1321
        %v1344 = vcombine.high %v1328, %v1328
        %v1345 = vcombine.high %v1335, %v1335
        %v1346 = vcombine.high %v1342, %v1342
        %v1347 = vcombine.high %v820, %v820
        %v1349 = vunpack.c.l.s4 1966171168
        %v1350 = vunpack.c.0.s8 %v1349
        %v1351 = vlaneseq
        %v1352 = vshrl.u32 %v1351, 7
        %v1353 = vsub.s32 %v1350, %v1352
        %v1354 = vrot.slane %v820, %v1353
        %v1356 = vunpack.c.l.s4 1966171168
        %v1357 = vunpack.c.0.s8 %v1356
        %v1358 = vlaneseq
        %v1359 = vshrl.u32 %v1358, 7
        %v1360 = vsub.s32 %v1357, %v1359
        %v1361 = vrot.slane %v1347, %v1360
        %v1362 = vcombine.high %v1354, %v1354
        %v1363 = vcombine.high %v1361, %v1361
        %v1365 = vunpack.c.l.s4 1966171168
        %v1366 = vunpack.c.0.s8 %v1365
        %v1367 = vlaneseq
        %v1368 = vshrl.u32 %v1367, 7
        %v1369 = vsub.s32 %v1366, %v1368
        %v1370 = vrot.slane %v1354, %v1369
        %v1372 = vunpack.c.l.s4 1966171168
        %v1373 = vunpack.c.0.s8 %v1372
        %v1374 = vlaneseq
        %v1375 = vshrl.u32 %v1374, 7
        %v1376 = vsub.s32 %v1373, %v1375
        %v1377 = vrot.slane %v1361, %v1376
        %v1379 = vunpack.c.l.s4 1966171168
        %v1380 = vunpack.c.0.s8 %v1379
        %v1381 = vlaneseq
        %v1382 = vshrl.u32 %v1381, 7
        %v1383 = vsub.s32 %v1380, %v1382
        %v1384 = vrot.slane %v1362, %v1383
        %v1386 = vunpack.c.l.s4 1966171168
        %v1387 = vunpack.c.0.s8 %v1386
        %v1388 = vlaneseq
        %v1389 = vshrl.u32 %v1388, 7
        %v1390 = vsub.s32 %v1387, %v1389
        %v1391 = vrot.slane %v1363, %v1390
        %v1392 = vcombine.high %v1370, %v1370
        %v1393 = vcombine.high %v1377, %v1377
        %v1394 = vcombine.high %v1384, %v1384
        %v1395 = vcombine.high %v1391, %v1391
        %v1396 = vcombine.high %v821, %v821
        %v1398 = vunpack.c.l.s4 1966171168
        %v1399 = vunpack.c.0.s8 %v1398
        %v1400 = vlaneseq
        %v1401 = vshrl.u32 %v1400, 7
        %v1402 = vsub.s32 %v1399, %v1401
        %v1403 = vrot.slane %v821, %v1402
        %v1405 = vunpack.c.l.s4 1966171168
        %v1406 = vunpack.c.0.s8 %v1405
        %v1407 = vlaneseq
        %v1408 = vshrl.u32 %v1407, 7
        %v1409 = vsub.s32 %v1406, %v1408
        %v1410 = vrot.slane %v1396, %v1409
        %v1411 = vcombine.high %v1403, %v1403
        %v1412 = vcombine.high %v1410, %v1410
        %v1414 = vunpack.c.l.s4 1966171168
        %v1415 = vunpack.c.0.s8 %v1414
        %v1416 = vlaneseq
        %v1417 = vshrl.u32 %v1416, 7
        %v1418 = vsub.s32 %v1415, %v1417
        %v1419 = vrot.slane %v1403, %v1418
        %v1421 = vunpack.c.l.s4 1966171168
        %v1422 = vunpack.c.0.s8 %v1421
        %v1423 = vlaneseq
        %v1424 = vshrl.u32 %v1423, 7
        %v1425 = vsub.s32 %v1422, %v1424
        %v1426 = vrot.slane %v1410, %v1425
        %v1428 = vunpack.c.l.s4 1966171168
        %v1429 = vunpack.c.0.s8 %v1428
        %v1430 = vlaneseq
        %v1431 = vshrl.u32 %v1430, 7
        %v1432 = vsub.s32 %v1429, %v1431
        %v1433 = vrot.slane %v1411, %v1432
        %v1435 = vunpack.c.l.s4 1966171168
        %v1436 = vunpack.c.0.s8 %v1435
        %v1437 = vlaneseq
        %v1438 = vshrl.u32 %v1437, 7
        %v1439 = vsub.s32 %v1436, %v1438
        %v1440 = vrot.slane %v1412, %v1439
        %v1441 = vcombine.high %v1419, %v1419
        %v1442 = vcombine.high %v1426, %v1426
        %v1443 = vcombine.high %v1433, %v1433
        %v1444 = vcombine.high %v1440, %v1440
        %v1445 = vcombine.high %v822, %v822
        %v1447 = vunpack.c.l.s4 1966171168
        %v1448 = vunpack.c.0.s8 %v1447
        %v1449 = vlaneseq
        %v1450 = vshrl.u32 %v1449, 7
        %v1451 = vsub.s32 %v1448, %v1450
        %v1452 = vrot.slane %v822, %v1451
        %v1454 = vunpack.c.l.s4 1966171168
        %v1455 = vunpack.c.0.s8 %v1454
        %v1456 = vlaneseq
        %v1457 = vshrl.u32 %v1456, 7
        %v1458 = vsub.s32 %v1455, %v1457
        %v1459 = vrot.slane %v1445, %v1458
        %v1460 = vcombine.high %v1452, %v1452
        %v1461 = vcombine.high %v1459, %v1459
        %v1463 = vunpack.c.l.s4 1966171168
        %v1464 = vunpack.c.0.s8 %v1463
        %v1465 = vlaneseq
        %v1466 = vshrl.u32 %v1465, 7
        %v1467 = vsub.s32 %v1464, %v1466
        %v1468 = vrot.slane %v1452, %v1467
        %v1470 = vunpack.c.l.s4 1966171168
        %v1471 = vunpack.c.0.s8 %v1470
        %v1472 = vlaneseq
        %v1473 = vshrl.u32 %v1472, 7
        %v1474 = vsub.s32 %v1471, %v1473
        %v1475 = vrot.slane %v1459, %v1474
        %v1477 = vunpack.c.l.s4 1966171168
        %v1478 = vunpack.c.0.s8 %v1477
        %v1479 = vlaneseq
        %v1480 = vshrl.u32 %v1479, 7
        %v1481 = vsub.s32 %v1478, %v1480
        %v1482 = vrot.slane %v1460, %v1481
        %v1484 = vunpack.c.l.s4 1966171168
        %v1485 = vunpack.c.0.s8 %v1484
        %v1486 = vlaneseq
        %v1487 = vshrl.u32 %v1486, 7
        %v1488 = vsub.s32 %v1485, %v1487
        %v1489 = vrot.slane %v1461, %v1488
        %v1490 = vcombine.high %v1468, %v1468
        %v1491 = vcombine.high %v1475, %v1475
        %v1492 = vcombine.high %v1482, %v1482
        %v1493 = vcombine.high %v1489, %v1489
        %v1494 = vcombine.high %v823, %v823
        %v1496 = vunpack.c.l.s4 1966171168
        %v1497 = vunpack.c.0.s8 %v1496
        %v1498 = vlaneseq
        %v1499 = vshrl.u32 %v1498, 7
        %v1500 = vsub.s32 %v1497, %v1499
        %v1501 = vrot.slane %v823, %v1500
        %v1503 = vunpack.c.l.s4 1966171168
        %v1504 = vunpack.c.0.s8 %v1503
        %v1505 = vlaneseq
        %v1506 = vshrl.u32 %v1505, 7
        %v1507 = vsub.s32 %v1504, %v1506
        %v1508 = vrot.slane %v1494, %v1507
        %v1509 = vcombine.high %v1501, %v1501
        %v1510 = vcombine.high %v1508, %v1508
        %v1512 = vunpack.c.l.s4 1966171168
        %v1513 = vunpack.c.0.s8 %v1512
        %v1514 = vlaneseq
        %v1515 = vshrl.u32 %v1514, 7
        %v1516 = vsub.s32 %v1513, %v1515
        %v1517 = vrot.slane %v1501, %v1516
        %v1519 = vunpack.c.l.s4 1966171168
        %v1520 = vunpack.c.0.s8 %v1519
        %v1521 = vlaneseq
        %v1522 = vshrl.u32 %v1521, 7
        %v1523 = vsub.s32 %v1520, %v1522
        %v1524 = vrot.slane %v1508, %v1523
        %v1526 = vunpack.c.l.s4 1966171168
        %v1527 = vunpack.c.0.s8 %v1526
        %v1528 = vlaneseq
        %v1529 = vshrl.u32 %v1528, 7
        %v1530 = vsub.s32 %v1527, %v1529
        %v1531 = vrot.slane %v1509, %v1530
        %v1533 = vunpack.c.l.s4 1966171168
        %v1534 = vunpack.c.0.s8 %v1533
        %v1535 = vlaneseq
        %v1536 = vshrl.u32 %v1535, 7
        %v1537 = vsub.s32 %v1534, %v1536
        %v1538 = vrot.slane %v1510, %v1537
        %v1539 = vcombine.high %v1517, %v1517
        %v1540 = vcombine.high %v1524, %v1524
        %v1541 = vcombine.high %v1531, %v1531
        %v1542 = vcombine.high %v1538, %v1538
        %v1543 = vcombine.high %v824, %v824
        %v1545 = vunpack.c.l.s4 1966171168
        %v1546 = vunpack.c.0.s8 %v1545
        %v1547 = vlaneseq
        %v1548 = vshrl.u32 %v1547, 7
        %v1549 = vsub.s32 %v1546, %v1548
        %v1550 = vrot.slane %v824, %v1549
        %v1552 = vunpack.c.l.s4 1966171168
        %v1553 = vunpack.c.0.s8 %v1552
        %v1554 = vlaneseq
        %v1555 = vshrl.u32 %v1554, 7
        %v1556 = vsub.s32 %v1553, %v1555
        %v1557 = vrot.slane %v1543, %v1556
        %v1558 = vcombine.high %v1550, %v1550
        %v1559 = vcombine.high %v1557, %v1557
        %v1561 = vunpack.c.l.s4 1966171168
        %v1562 = vunpack.c.0.s8 %v1561
        %v1563 = vlaneseq
        %v1564 = vshrl.u32 %v1563, 7
        %v1565 = vsub.s32 %v1562, %v1564
        %v1566 = vrot.slane %v1550, %v1565
        %v1568 = vunpack.c.l.s4 1966171168
        %v1569 = vunpack.c.0.s8 %v1568
        %v1570 = vlaneseq
        %v1571 = vshrl.u32 %v1570, 7
        %v1572 = vsub.s32 %v1569, %v1571
        %v1573 = vrot.slane %v1557, %v1572
        %v1575 = vunpack.c.l.s4 1966171168
        %v1576 = vunpack.c.0.s8 %v1575
        %v1577 = vlaneseq
        %v1578 = vshrl.u32 %v1577, 7
        %v1579 = vsub.s32 %v1576, %v1578
        %v1580 = vrot.slane %v1558, %v1579
        %v1582 = vunpack.c.l.s4 1966171168
        %v1583 = vunpack.c.0.s8 %v1582
        %v1584 = vlaneseq
        %v1585 = vshrl.u32 %v1584, 7
        %v1586 = vsub.s32 %v1583, %v1585
        %v1587 = vrot.slane %v1559, %v1586
        %v1588 = vcombine.high %v1566, %v1566
        %v1589 = vcombine.high %v1573, %v1573
        %v1590 = vcombine.high %v1580, %v1580
        %v1591 = vcombine.high %v1587, %v1587
        %v1592 = vcombine.high %v825, %v825
        %v1594 = vunpack.c.l.s4 1966171168
        %v1595 = vunpack.c.0.s8 %v1594
        %v1596 = vlaneseq
        %v1597 = vshrl.u32 %v1596, 7
        %v1598 = vsub.s32 %v1595, %v1597
        %v1599 = vrot.slane %v825, %v1598
        %v1601 = vunpack.c.l.s4 1966171168
        %v1602 = vunpack.c.0.s8 %v1601
        %v1603 = vlaneseq
        %v1604 = vshrl.u32 %v1603, 7
        %v1605 = vsub.s32 %v1602, %v1604
        %v1606 = vrot.slane %v1592, %v1605
        %v1607 = vcombine.high %v1599, %v1599
        %v1608 = vcombine.high %v1606, %v1606
        %v1610 = vunpack.c.l.s4 1966171168
        %v1611 = vunpack.c.0.s8 %v1610
        %v1612 = vlaneseq
        %v1613 = vshrl.u32 %v1612, 7
        %v1614 = vsub.s32 %v1611, %v1613
        %v1615 = vrot.slane %v1599, %v1614
        %v1617 = vunpack.c.l.s4 1966171168
        %v1618 = vunpack.c.0.s8 %v1617
        %v1619 = vlaneseq
        %v1620 = vshrl.u32 %v1619, 7
        %v1621 = vsub.s32 %v1618, %v1620
        %v1622 = vrot.slane %v1606, %v1621
        %v1624 = vunpack.c.l.s4 1966171168
        %v1625 = vunpack.c.0.s8 %v1624
        %v1626 = vlaneseq
        %v1627 = vshrl.u32 %v1626, 7
        %v1628 = vsub.s32 %v1625, %v1627
        %v1629 = vrot.slane %v1607, %v1628
        %v1631 = vunpack.c.l.s4 1966171168
        %v1632 = vunpack.c.0.s8 %v1631
        %v1633 = vlaneseq
        %v1634 = vshrl.u32 %v1633, 7
        %v1635 = vsub.s32 %v1632, %v1634
        %v1636 = vrot.slane %v1608, %v1635
        %v1637 = vcombine.high %v1615, %v1615
        %v1638 = vcombine.high %v1622, %v1622
        %v1639 = vcombine.high %v1629, %v1629
        %v1640 = vcombine.high %v1636, %v1636
        %v1641 = vcombine.high 0, 0
        %v1643 = vunpack.c.l.s4 1966171168
        %v1644 = vunpack.c.0.s8 %v1643
        %v1645 = vlaneseq
        %v1646 = vshrl.u32 %v1645, 7
        %v1647 = vsub.s32 %v1644, %v1646
        %v1648 = vrot.slane %v1641, %v1647
        %v1649 = vcombine.high %v898, %v898
        %v1650 = vcombine.high %v1648, %v1648
        %v1652 = vunpack.c.l.s4 1966171168
        %v1653 = vunpack.c.0.s8 %v1652
        %v1654 = vlaneseq
        %v1655 = vshrl.u32 %v1654, 7
        %v1656 = vsub.s32 %v1653, %v1655
        %v1657 = vrot.slane %v1648, %v1656
        %v1659 = vunpack.c.l.s4 1966171168
        %v1660 = vunpack.c.0.s8 %v1659
        %v1661 = vlaneseq
        %v1662 = vshrl.u32 %v1661, 7
        %v1663 = vsub.s32 %v1660, %v1662
        %v1664 = vrot.slane %v1649, %v1663
        %v1666 = vunpack.c.l.s4 1966171168
        %v1667 = vunpack.c.0.s8 %v1666
        %v1668 = vlaneseq
        %v1669 = vshrl.u32 %v1668, 7
        %v1670 = vsub.s32 %v1667, %v1669
        %v1671 = vrot.slane %v1650, %v1670
        %v1672 = vcombine.high %v905, %v905
        %v1673 = vcombine.high %v1657, %v1657
        %v1674 = vcombine.high %v1664, %v1664
        %v1675 = vcombine.high %v1671, %v1671
        %v1676 = vcombine.low %v866, %v888
        %v1677 = vcombine.low %v880, %v890
        %v1679 = vunpack.c.l.s4 1935823168
        %v1680 = vunpack.c.0.s8 %v1679
        %v1681 = vlaneseq
        %v1682 = vshrl.u32 %v1681, 7
        %v1683 = vsub.s32 %v1680, %v1682
        %v1684 = vrot.slane %v1676, %v1683
        %v1686 = vunpack.c.l.s4 1935823168
        %v1687 = vunpack.c.0.s8 %v1686
        %v1688 = vlaneseq
        %v1689 = vshrl.u32 %v1688, 7
        %v1690 = vsub.s32 %v1687, %v1689
        %v1691 = vrot.slane %v1677, %v1690
        %v1692 = vcombine.low %v1684, %v1691
        %v1694 = vunpack.c.l.s4 1935823168
        %v1695 = vunpack.c.0.s8 %v1694
        %v1696 = vlaneseq
        %v1697 = vshrl.u32 %v1696, 7
        %v1698 = vsub.s32 %v1695, %v1697
        %v1699 = vrot.slane %v1692, %v1698
        %v1700 = vcombine.low %v873, %v889
        %v1701 = vcombine.low %v887, %v891
        %v1703 = vunpack.c.l.s4 1935823168
        %v1704 = vunpack.c.0.s8 %v1703
        %v1705 = vlaneseq
        %v1706 = vshrl.u32 %v1705, 7
        %v1707 = vsub.s32 %v1704, %v1706
        %v1708 = vrot.slane %v1700, %v1707
        %v1710 = vunpack.c.l.s4 1935823168
        %v1711 = vunpack.c.0.s8 %v1710
        %v1712 = vlaneseq
        %v1713 = vshrl.u32 %v1712, 7
        %v1714 = vsub.s32 %v1711, %v1713
        %v1715 = vrot.slane %v1701, %v1714
        %v1716 = vcombine.low %v1708, %v1715
        %v1718 = vunpack.c.l.s4 1935823168
        %v1719 = vunpack.c.0.s8 %v1718
        %v1720 = vlaneseq
        %v1721 = vshrl.u32 %v1720, 7
        %v1722 = vsub.s32 %v1719, %v1721
        %v1723 = vrot.slane %v1716, %v1722
        %v1724 = vcombine.low %v905, %v943
        %v1725 = vcombine.low %v929, %v951
        %v1727 = vunpack.c.l.s4 1935823168
        %v1728 = vunpack.c.0.s8 %v1727
        %v1729 = vlaneseq
        %v1730 = vshrl.u32 %v1729, 7
        %v1731 = vsub.s32 %v1728, %v1730
        %v1732 = vrot.slane %v1724, %v1731
        %v1734 = vunpack.c.l.s4 1935823168
        %v1735 = vunpack.c.0.s8 %v1734
        %v1736 = vlaneseq
        %v1737 = vshrl.u32 %v1736, 7
        %v1738 = vsub.s32 %v1735, %v1737
        %v1739 = vrot.slane %v1725, %v1738
        %v1740 = vcombine.low %v1732, %v1739
        %v1742 = vunpack.c.l.s4 1935823168
        %v1743 = vunpack.c.0.s8 %v1742
        %v1744 = vlaneseq
        %v1745 = vshrl.u32 %v1744, 7
        %v1746 = vsub.s32 %v1743, %v1745
        %v1747 = vrot.slane %v1740, %v1746
        %v1748 = vcombine.low %v953, %v950
        %v1749 = vcombine.low %v936, %v952
        %v1751 = vunpack.c.l.s4 1935823168
        %v1752 = vunpack.c.0.s8 %v1751
        %v1753 = vlaneseq
        %v1754 = vshrl.u32 %v1753, 7
        %v1755 = vsub.s32 %v1752, %v1754
        %v1756 = vrot.slane %v1748, %v1755
        %v1758 = vunpack.c.l.s4 1935823168
        %v1759 = vunpack.c.0.s8 %v1758
        %v1760 = vlaneseq
        %v1761 = vshrl.u32 %v1760, 7
        %v1762 = vsub.s32 %v1759, %v1761
        %v1763 = vrot.slane %v1749, %v1762
        %v1764 = vcombine.low %v1756, %v1763
        %v1766 = vunpack.c.l.s4 1935823168
        %v1767 = vunpack.c.0.s8 %v1766
        %v1768 = vlaneseq
        %v1769 = vshrl.u32 %v1768, 7
        %v1770 = vsub.s32 %v1767, %v1769
        %v1771 = vrot.slane %v1764, %v1770
        %v1772 = vcombine.low %v954, %v978
        %v1773 = vcombine.low %v905, %v992
        %v1775 = vunpack.c.l.s4 1935823168
        %v1776 = vunpack.c.0.s8 %v1775
        %v1777 = vlaneseq
        %v1778 = vshrl.u32 %v1777, 7
        %v1779 = vsub.s32 %v1776, %v1778
        %v1780 = vrot.slane %v1772, %v1779
        %v1782 = vunpack.c.l.s4 1935823168
        %v1783 = vunpack.c.0.s8 %v1782
        %v1784 = vlaneseq
        %v1785 = vshrl.u32 %v1784, 7
        %v1786 = vsub.s32 %v1783, %v1785
        %v1787 = vrot.slane %v1773, %v1786
        %v1788 = vcombine.low %v1780, %v1787
        %v1790 = vunpack.c.l.s4 1935823168
        %v1791 = vunpack.c.0.s8 %v1790
        %v1792 = vlaneseq
        %v1793 = vshrl.u32 %v1792, 7
        %v1794 = vsub.s32 %v1791, %v1793
        %v1795 = vrot.slane %v1788, %v1794
        %v1796 = vcombine.low %v1000, %v985
        %v1797 = vcombine.low %v1002, %v999
        %v1799 = vunpack.c.l.s4 1935823168
        %v1800 = vunpack.c.0.s8 %v1799
        %v1801 = vlaneseq
        %v1802 = vshrl.u32 %v1801, 7
        %v1803 = vsub.s32 %v1800, %v1802
        %v1804 = vrot.slane %v1796, %v1803
        %v1806 = vunpack.c.l.s4 1935823168
        %v1807 = vunpack.c.0.s8 %v1806
        %v1808 = vlaneseq
        %v1809 = vshrl.u32 %v1808, 7
        %v1810 = vsub.s32 %v1807, %v1809
        %v1811 = vrot.slane %v1797, %v1810
        %v1812 = vcombine.low %v1804, %v1811
        %v1814 = vunpack.c.l.s4 1935823168
        %v1815 = vunpack.c.0.s8 %v1814
        %v1816 = vlaneseq
        %v1817 = vshrl.u32 %v1816, 7
        %v1818 = vsub.s32 %v1815, %v1817
        %v1819 = vrot.slane %v1812, %v1818
        %v1820 = vcombine.low %v1001, %v905
        %v1821 = vcombine.low %v1003, %v1027
        %v1823 = vunpack.c.l.s4 1935823168
        %v1824 = vunpack.c.0.s8 %v1823
        %v1825 = vlaneseq
        %v1826 = vshrl.u32 %v1825, 7
        %v1827 = vsub.s32 %v1824, %v1826
        %v1828 = vrot.slane %v1820, %v1827
        %v1830 = vunpack.c.l.s4 1935823168
        %v1831 = vunpack.c.0.s8 %v1830
        %v1832 = vlaneseq
        %v1833 = vshrl.u32 %v1832, 7
        %v1834 = vsub.s32 %v1831, %v1833
        %v1835 = vrot.slane %v1821, %v1834
        %v1836 = vcombine.low %v1828, %v1835
        %v1838 = vunpack.c.l.s4 1935823168
        %v1839 = vunpack.c.0.s8 %v1838
        %v1840 = vlaneseq
        %v1841 = vshrl.u32 %v1840, 7
        %v1842 = vsub.s32 %v1839, %v1841
        %v1843 = vrot.slane %v1836, %v1842
        %v1844 = vcombine.low %v1041, %v1051
        %v1845 = vcombine.low %v1049, %v1034
        %v1847 = vunpack.c.l.s4 1935823168
        %v1848 = vunpack.c.0.s8 %v1847
        %v1849 = vlaneseq
        %v1850 = vshrl.u32 %v1849, 7
        %v1851 = vsub.s32 %v1848, %v1850
        %v1852 = vrot.slane %v1844, %v1851
        %v1854 = vunpack.c.l.s4 1935823168
        %v1855 = vunpack.c.0.s8 %v1854
        %v1856 = vlaneseq
        %v1857 = vshrl.u32 %v1856, 7
        %v1858 = vsub.s32 %v1855, %v1857
        %v1859 = vrot.slane %v1845, %v1858
        %v1860 = vcombine.low %v1852, %v1859
        %v1862 = vunpack.c.l.s4 1935823168
        %v1863 = vunpack.c.0.s8 %v1862
        %v1864 = vlaneseq
        %v1865 = vshrl.u32 %v1864, 7
        %v1866 = vsub.s32 %v1863, %v1865
        %v1867 = vrot.slane %v1860, %v1866
        %v1868 = vcombine.low %v1048, %v1052
        %v1869 = vcombine.low %v1050, %v905
        %v1871 = vunpack.c.l.s4 1935823168
        %v1872 = vunpack.c.0.s8 %v1871
        %v1873 = vlaneseq
        %v1874 = vshrl.u32 %v1873, 7
        %v1875 = vsub.s32 %v1872, %v1874
        %v1876 = vrot.slane %v1868, %v1875
        %v1878 = vunpack.c.l.s4 1935823168
        %v1879 = vunpack.c.0.s8 %v1878
        %v1880 = vlaneseq
        %v1881 = vshrl.u32 %v1880, 7
        %v1882 = vsub.s32 %v1879, %v1881
        %v1883 = vrot.slane %v1869, %v1882
        %v1884 = vcombine.low %v1876, %v1883
        %v1886 = vunpack.c.l.s4 1935823168
        %v1887 = vunpack.c.0.s8 %v1886
        %v1888 = vlaneseq
        %v1889 = vshrl.u32 %v1888, 7
        %v1890 = vsub.s32 %v1887, %v1889
        %v1891 = vrot.slane %v1884, %v1890
        %v1892 = vcombine.low %v1076, %v1098
        %v1893 = vcombine.low %v1090, %v1100
        %v1895 = vunpack.c.l.s4 1935823168
        %v1896 = vunpack.c.0.s8 %v1895
        %v1897 = vlaneseq
        %v1898 = vshrl.u32 %v1897, 7
        %v1899 = vsub.s32 %v1896, %v1898
        %v1900 = vrot.slane %v1892, %v1899
        %v1902 = vunpack.c.l.s4 1935823168
        %v1903 = vunpack.c.0.s8 %v1902
        %v1904 = vlaneseq
        %v1905 = vshrl.u32 %v1904, 7
        %v1906 = vsub.s32 %v1903, %v1905
        %v1907 = vrot.slane %v1893, %v1906
        %v1908 = vcombine.low %v1900, %v1907
        %v1910 = vunpack.c.l.s4 1935823168
        %v1911 = vunpack.c.0.s8 %v1910
        %v1912 = vlaneseq
        %v1913 = vshrl.u32 %v1912, 7
        %v1914 = vsub.s32 %v1911, %v1913
        %v1915 = vrot.slane %v1908, %v1914
        %v1916 = vcombine.low %v1083, %v1099
        %v1917 = vcombine.low %v1097, %v1101
        %v1919 = vunpack.c.l.s4 1935823168
        %v1920 = vunpack.c.0.s8 %v1919
        %v1921 = vlaneseq
        %v1922 = vshrl.u32 %v1921, 7
        %v1923 = vsub.s32 %v1920, %v1922
        %v1924 = vrot.slane %v1916, %v1923
        %v1926 = vunpack.c.l.s4 1935823168
        %v1927 = vunpack.c.0.s8 %v1926
        %v1928 = vlaneseq
        %v1929 = vshrl.u32 %v1928, 7
        %v1930 = vsub.s32 %v1927, %v1929
        %v1931 = vrot.slane %v1917, %v1930
        %v1932 = vcombine.low %v1924, %v1931
        %v1934 = vunpack.c.l.s4 1935823168
        %v1935 = vunpack.c.0.s8 %v1934
        %v1936 = vlaneseq
        %v1937 = vshrl.u32 %v1936, 7
        %v1938 = vsub.s32 %v1935, %v1937
        %v1939 = vrot.slane %v1932, %v1938
        %v1940 = vcombine.low %v905, %v1139
        %v1941 = vcombine.low %v1125, %v1147
        %v1943 = vunpack.c.l.s4 1935823168
        %v1944 = vunpack.c.0.s8 %v1943
        %v1945 = vlaneseq
        %v1946 = vshrl.u32 %v1945, 7
        %v1947 = vsub.s32 %v1944, %v1946
        %v1948 = vrot.slane %v1940, %v1947
        %v1950 = vunpack.c.l.s4 1935823168
        %v1951 = vunpack.c.0.s8 %v1950
        %v1952 = vlaneseq
        %v1953 = vshrl.u32 %v1952, 7
        %v1954 = vsub.s32 %v1951, %v1953
        %v1955 = vrot.slane %v1941, %v1954
        %v1956 = vcombine.low %v1948, %v1955
        %v1958 = vunpack.c.l.s4 1935823168
        %v1959 = vunpack.c.0.s8 %v1958
        %v1960 = vlaneseq
        %v1961 = vshrl.u32 %v1960, 7
        %v1962 = vsub.s32 %v1959, %v1961
        %v1963 = vrot.slane %v1956, %v1962
        %v1964 = vcombine.low %v1149, %v1146
        %v1965 = vcombine.low %v1132, %v1148
        %v1967 = vunpack.c.l.s4 1935823168
        %v1968 = vunpack.c.0.s8 %v1967
        %v1969 = vlaneseq
        %v1970 = vshrl.u32 %v1969, 7
        %v1971 = vsub.s32 %v1968, %v1970
        %v1972 = vrot.slane %v1964, %v1971
        %v1974 = vunpack.c.l.s4 1935823168
        %v1975 = vunpack.c.0.s8 %v1974
        %v1976 = vlaneseq
        %v1977 = vshrl.u32 %v1976, 7
        %v1978 = vsub.s32 %v1975, %v1977
        %v1979 = vrot.slane %v1965, %v1978
        %v1980 = vcombine.low %v1972, %v1979
        %v1982 = vunpack.c.l.s4 1935823168
        %v1983 = vunpack.c.0.s8 %v1982
        %v1984 = vlaneseq
        %v1985 = vshrl.u32 %v1984, 7
        %v1986 = vsub.s32 %v1983, %v1985
        %v1987 = vrot.slane %v1980, %v1986
        %v1988 = vcombine.low %v1150, %v1174
        %v1989 = vcombine.low %v905, %v1188
        %v1991 = vunpack.c.l.s4 1935823168
        %v1992 = vunpack.c.0.s8 %v1991
        %v1993 = vlaneseq
        %v1994 = vshrl.u32 %v1993, 7
        %v1995 = vsub.s32 %v1992, %v1994
        %v1996 = vrot.slane %v1988, %v1995
        %v1998 = vunpack.c.l.s4 1935823168
        %v1999 = vunpack.c.0.s8 %v1998
        %v2000 = vlaneseq
        %v2001 = vshrl.u32 %v2000, 7
        %v2002 = vsub.s32 %v1999, %v2001
        %v2003 = vrot.slane %v1989, %v2002
        %v2004 = vcombine.low %v1996, %v2003
        %v2006 = vunpack.c.l.s4 1935823168
        %v2007 = vunpack.c.0.s8 %v2006
        %v2008 = vlaneseq
        %v2009 = vshrl.u32 %v2008, 7
        %v2010 = vsub.s32 %v2007, %v2009
        %v2011 = vrot.slane %v2004, %v2010
        %v2012 = vcombine.low %v1196, %v1181
        %v2013 = vcombine.low %v1198, %v1195
        %v2015 = vunpack.c.l.s4 1935823168
        %v2016 = vunpack.c.0.s8 %v2015
        %v2017 = vlaneseq
        %v2018 = vshrl.u32 %v2017, 7
        %v2019 = vsub.s32 %v2016, %v2018
        %v2020 = vrot.slane %v2012, %v2019
        %v2022 = vunpack.c.l.s4 1935823168
        %v2023 = vunpack.c.0.s8 %v2022
        %v2024 = vlaneseq
        %v2025 = vshrl.u32 %v2024, 7
        %v2026 = vsub.s32 %v2023, %v2025
        %v2027 = vrot.slane %v2013, %v2026
        %v2028 = vcombine.low %v2020, %v2027
        %v2030 = vunpack.c.l.s4 1935823168
        %v2031 = vunpack.c.0.s8 %v2030
        %v2032 = vlaneseq
        %v2033 = vshrl.u32 %v2032, 7
        %v2034 = vsub.s32 %v2031, %v2033
        %v2035 = vrot.slane %v2028, %v2034
        %v2036 = vcombine.low %v1197, %v905
        %v2037 = vcombine.low %v1199, %v1223
        %v2039 = vunpack.c.l.s4 1935823168
        %v2040 = vunpack.c.0.s8 %v2039
        %v2041 = vlaneseq
        %v2042 = vshrl.u32 %v2041, 7
        %v2043 = vsub.s32 %v2040, %v2042
        %v2044 = vrot.slane %v2036, %v2043
        %v2046 = vunpack.c.l.s4 1935823168
        %v2047 = vunpack.c.0.s8 %v2046
        %v2048 = vlaneseq
        %v2049 = vshrl.u32 %v2048, 7
        %v2050 = vsub.s32 %v2047, %v2049
        %v2051 = vrot.slane %v2037, %v2050
        %v2052 = vcombine.low %v2044, %v2051
        %v2054 = vunpack.c.l.s4 1935823168
        %v2055 = vunpack.c.0.s8 %v2054
        %v2056 = vlaneseq
        %v2057 = vshrl.u32 %v2056, 7
        %v2058 = vsub.s32 %v2055, %v2057
        %v2059 = vrot.slane %v2052, %v2058
        %v2060 = vcombine.low %v1237, %v1247
        %v2061 = vcombine.low %v1245, %v1230
        %v2063 = vunpack.c.l.s4 1935823168
        %v2064 = vunpack.c.0.s8 %v2063
        %v2065 = vlaneseq
        %v2066 = vshrl.u32 %v2065, 7
        %v2067 = vsub.s32 %v2064, %v2066
        %v2068 = vrot.slane %v2060, %v2067
        %v2070 = vunpack.c.l.s4 1935823168
        %v2071 = vunpack.c.0.s8 %v2070
        %v2072 = vlaneseq
        %v2073 = vshrl.u32 %v2072, 7
        %v2074 = vsub.s32 %v2071, %v2073
        %v2075 = vrot.slane %v2061, %v2074
        %v2076 = vcombine.low %v2068, %v2075
        %v2078 = vunpack.c.l.s4 1935823168
        %v2079 = vunpack.c.0.s8 %v2078
        %v2080 = vlaneseq
        %v2081 = vshrl.u32 %v2080, 7
        %v2082 = vsub.s32 %v2079, %v2081
        %v2083 = vrot.slane %v2076, %v2082
        %v2084 = vcombine.low %v1244, %v1248
        %v2085 = vcombine.low %v1246, %v905
        %v2087 = vunpack.c.l.s4 1935823168
        %v2088 = vunpack.c.0.s8 %v2087
        %v2089 = vlaneseq
        %v2090 = vshrl.u32 %v2089, 7
        %v2091 = vsub.s32 %v2088, %v2090
        %v2092 = vrot.slane %v2084, %v2091
        %v2094 = vunpack.c.l.s4 1935823168
        %v2095 = vunpack.c.0.s8 %v2094
        %v2096 = vlaneseq
        %v2097 = vshrl.u32 %v2096, 7
        %v2098 = vsub.s32 %v2095, %v2097
        %v2099 = vrot.slane %v2085, %v2098
        %v2100 = vcombine.low %v2092, %v2099
        %v2102 = vunpack.c.l.s4 1935823168
        %v2103 = vunpack.c.0.s8 %v2102
        %v2104 = vlaneseq
        %v2105 = vshrl.u32 %v2104, 7
        %v2106 = vsub.s32 %v2103, %v2105
        %v2107 = vrot.slane %v2100, %v2106
        %v2108 = vcombine.low %v1272, %v1294
        %v2109 = vcombine.low %v1286, %v1296
        %v2111 = vunpack.c.l.s4 1935823168
        %v2112 = vunpack.c.0.s8 %v2111
        %v2113 = vlaneseq
        %v2114 = vshrl.u32 %v2113, 7
        %v2115 = vsub.s32 %v2112, %v2114
        %v2116 = vrot.slane %v2108, %v2115
        %v2118 = vunpack.c.l.s4 1935823168
        %v2119 = vunpack.c.0.s8 %v2118
        %v2120 = vlaneseq
        %v2121 = vshrl.u32 %v2120, 7
        %v2122 = vsub.s32 %v2119, %v2121
        %v2123 = vrot.slane %v2109, %v2122
        %v2124 = vcombine.low %v2116, %v2123
        %v2126 = vunpack.c.l.s4 1935823168
        %v2127 = vunpack.c.0.s8 %v2126
        %v2128 = vlaneseq
        %v2129 = vshrl.u32 %v2128, 7
        %v2130 = vsub.s32 %v2127, %v2129
        %v2131 = vrot.slane %v2124, %v2130
        %v2132 = vcombine.low %v1279, %v1295
        %v2133 = vcombine.low %v1293, %v1297
        %v2135 = vunpack.c.l.s4 1935823168
        %v2136 = vunpack.c.0.s8 %v2135
        %v2137 = vlaneseq
        %v2138 = vshrl.u32 %v2137, 7
        %v2139 = vsub.s32 %v2136, %v2138
        %v2140 = vrot.slane %v2132, %v2139
        %v2142 = vunpack.c.l.s4 1935823168
        %v2143 = vunpack.c.0.s8 %v2142
        %v2144 = vlaneseq
        %v2145 = vshrl.u32 %v2144, 7
        %v2146 = vsub.s32 %v2143, %v2145
        %v2147 = vrot.slane %v2133, %v2146
        %v2148 = vcombine.low %v2140, %v2147
        %v2150 = vunpack.c.l.s4 1935823168
        %v2151 = vunpack.c.0.s8 %v2150
        %v2152 = vlaneseq
        %v2153 = vshrl.u32 %v2152, 7
        %v2154 = vsub.s32 %v2151, %v2153
        %v2155 = vrot.slane %v2148, %v2154
        %v2156 = vcombine.low %v905, %v1335
        %v2157 = vcombine.low %v1321, %v1343
        %v2159 = vunpack.c.l.s4 1935823168
        %v2160 = vunpack.c.0.s8 %v2159
        %v2161 = vlaneseq
        %v2162 = vshrl.u32 %v2161, 7
        %v2163 = vsub.s32 %v2160, %v2162
        %v2164 = vrot.slane %v2156, %v2163
        %v2166 = vunpack.c.l.s4 1935823168
        %v2167 = vunpack.c.0.s8 %v2166
        %v2168 = vlaneseq
        %v2169 = vshrl.u32 %v2168, 7
        %v2170 = vsub.s32 %v2167, %v2169
        %v2171 = vrot.slane %v2157, %v2170
        %v2172 = vcombine.low %v2164, %v2171
        %v2174 = vunpack.c.l.s4 1935823168
        %v2175 = vunpack.c.0.s8 %v2174
        %v2176 = vlaneseq
        %v2177 = vshrl.u32 %v2176, 7
        %v2178 = vsub.s32 %v2175, %v2177
        %v2179 = vrot.slane %v2172, %v2178
        %v2180 = vcombine.low %v1345, %v1342
        %v2181 = vcombine.low %v1328, %v1344
        %v2183 = vunpack.c.l.s4 1935823168
        %v2184 = vunpack.c.0.s8 %v2183
        %v2185 = vlaneseq
        %v2186 = vshrl.u32 %v2185, 7
        %v2187 = vsub.s32 %v2184, %v2186
        %v2188 = vrot.slane %v2180, %v2187
        %v2190 = vunpack.c.l.s4 1935823168
        %v2191 = vunpack.c.0.s8 %v2190
        %v2192 = vlaneseq
        %v2193 = vshrl.u32 %v2192, 7
        %v2194 = vsub.s32 %v2191, %v2193
        %v2195 = vrot.slane %v2181, %v2194
        %v2196 = vcombine.low %v2188, %v2195
        %v2198 = vunpack.c.l.s4 1935823168
        %v2199 = vunpack.c.0.s8 %v2198
        %v2200 = vlaneseq
        %v2201 = vshrl.u32 %v2200, 7
        %v2202 = vsub.s32 %v2199, %v2201
        %v2203 = vrot.slane %v2196, %v2202
        %v2204 = vcombine.low %v1346, %v1370
        %v2205 = vcombine.low %v905, %v1384
        %v2207 = vunpack.c.l.s4 1935823168
        %v2208 = vunpack.c.0.s8 %v2207
        %v2209 = vlaneseq
        %v2210 = vshrl.u32 %v2209, 7
        %v2211 = vsub.s32 %v2208, %v2210
        %v2212 = vrot.slane %v2204, %v2211
        %v2214 = vunpack.c.l.s4 1935823168
        %v2215 = vunpack.c.0.s8 %v2214
        %v2216 = vlaneseq
        %v2217 = vshrl.u32 %v2216, 7
        %v2218 = vsub.s32 %v2215, %v2217
        %v2219 = vrot.slane %v2205, %v2218
        %v2220 = vcombine.low %v2212, %v2219
        %v2222 = vunpack.c.l.s4 1935823168
        %v2223 = vunpack.c.0.s8 %v2222
        %v2224 = vlaneseq
        %v2225 = vshrl.u32 %v2224, 7
        %v2226 = vsub.s32 %v2223, %v2225
        %v2227 = vrot.slane %v2220, %v2226
        %v2228 = vcombine.low %v1392, %v1377
        %v2229 = vcombine.low %v1394, %v1391
        %v2231 = vunpack.c.l.s4 1935823168
        %v2232 = vunpack.c.0.s8 %v2231
        %v2233 = vlaneseq
        %v2234 = vshrl.u32 %v2233, 7
        %v2235 = vsub.s32 %v2232, %v2234
        %v2236 = vrot.slane %v2228, %v2235
        %v2238 = vunpack.c.l.s4 1935823168
        %v2239 = vunpack.c.0.s8 %v2238
        %v2240 = vlaneseq
        %v2241 = vshrl.u32 %v2240, 7
        %v2242 = vsub.s32 %v2239, %v2241
        %v2243 = vrot.slane %v2229, %v2242
        %v2244 = vcombine.low %v2236, %v2243
        %v2246 = vunpack.c.l.s4 1935823168
        %v2247 = vunpack.c.0.s8 %v2246
        %v2248 = vlaneseq
        %v2249 = vshrl.u32 %v2248, 7
        %v2250 = vsub.s32 %v2247, %v2249
        %v2251 = vrot.slane %v2244, %v2250
        %v2252 = vcombine.low %v1393, %v905
        %v2253 = vcombine.low %v1395, %v1419
        %v2255 = vunpack.c.l.s4 1935823168
        %v2256 = vunpack.c.0.s8 %v2255
        %v2257 = vlaneseq
        %v2258 = vshrl.u32 %v2257, 7
        %v2259 = vsub.s32 %v2256, %v2258
        %v2260 = vrot.slane %v2252, %v2259
        %v2262 = vunpack.c.l.s4 1935823168
        %v2263 = vunpack.c.0.s8 %v2262
        %v2264 = vlaneseq
        %v2265 = vshrl.u32 %v2264, 7
        %v2266 = vsub.s32 %v2263, %v2265
        %v2267 = vrot.slane %v2253, %v2266
        %v2268 = vcombine.low %v2260, %v2267
        %v2270 = vunpack.c.l.s4 1935823168
        %v2271 = vunpack.c.0.s8 %v2270
        %v2272 = vlaneseq
        %v2273 = vshrl.u32 %v2272, 7
        %v2274 = vsub.s32 %v2271, %v2273
        %v2275 = vrot.slane %v2268, %v2274
        %v2276 = vcombine.low %v1433, %v1443
        %v2277 = vcombine.low %v1441, %v1426
        %v2279 = vunpack.c.l.s4 1935823168
        %v2280 = vunpack.c.0.s8 %v2279
        %v2281 = vlaneseq
        %v2282 = vshrl.u32 %v2281, 7
        %v2283 = vsub.s32 %v2280, %v2282
        %v2284 = vrot.slane %v2276, %v2283
        %v2286 = vunpack.c.l.s4 1935823168
        %v2287 = vunpack.c.0.s8 %v2286
        %v2288 = vlaneseq
        %v2289 = vshrl.u32 %v2288, 7
        %v2290 = vsub.s32 %v2287, %v2289
        %v2291 = vrot.slane %v2277, %v2290
        %v2292 = vcombine.low %v2284, %v2291
        %v2294 = vunpack.c.l.s4 1935823168
        %v2295 = vunpack.c.0.s8 %v2294
        %v2296 = vlaneseq
        %v2297 = vshrl.u32 %v2296, 7
        %v2298 = vsub.s32 %v2295, %v2297
        %v2299 = vrot.slane %v2292, %v2298
        %v2300 = vcombine.low %v1440, %v1444
        %v2301 = vcombine.low %v1442, %v905
        %v2303 = vunpack.c.l.s4 1935823168
        %v2304 = vunpack.c.0.s8 %v2303
        %v2305 = vlaneseq
        %v2306 = vshrl.u32 %v2305, 7
        %v2307 = vsub.s32 %v2304, %v2306
        %v2308 = vrot.slane %v2300, %v2307
        %v2310 = vunpack.c.l.s4 1935823168
        %v2311 = vunpack.c.0.s8 %v2310
        %v2312 = vlaneseq
        %v2313 = vshrl.u32 %v2312, 7
        %v2314 = vsub.s32 %v2311, %v2313
        %v2315 = vrot.slane %v2301, %v2314
        %v2316 = vcombine.low %v2308, %v2315
        %v2318 = vunpack.c.l.s4 1935823168
        %v2319 = vunpack.c.0.s8 %v2318
        %v2320 = vlaneseq
        %v2321 = vshrl.u32 %v2320, 7
        %v2322 = vsub.s32 %v2319, %v2321
        %v2323 = vrot.slane %v2316, %v2322
        %v2324 = vcombine.low %v1468, %v1490
        %v2325 = vcombine.low %v1482, %v1492
        %v2327 = vunpack.c.l.s4 1935823168
        %v2328 = vunpack.c.0.s8 %v2327
        %v2329 = vlaneseq
        %v2330 = vshrl.u32 %v2329, 7
        %v2331 = vsub.s32 %v2328, %v2330
        %v2332 = vrot.slane %v2324, %v2331
        %v2334 = vunpack.c.l.s4 1935823168
        %v2335 = vunpack.c.0.s8 %v2334
        %v2336 = vlaneseq
        %v2337 = vshrl.u32 %v2336, 7
        %v2338 = vsub.s32 %v2335, %v2337
        %v2339 = vrot.slane %v2325, %v2338
        %v2340 = vcombine.low %v2332, %v2339
        %v2342 = vunpack.c.l.s4 1935823168
        %v2343 = vunpack.c.0.s8 %v2342
        %v2344 = vlaneseq
        %v2345 = vshrl.u32 %v2344, 7
        %v2346 = vsub.s32 %v2343, %v2345
        %v2347 = vrot.slane %v2340, %v2346
        %v2348 = vcombine.low %v1475, %v1491
        %v2349 = vcombine.low %v1489, %v1493
        %v2351 = vunpack.c.l.s4 1935823168
        %v2352 = vunpack.c.0.s8 %v2351
        %v2353 = vlaneseq
        %v2354 = vshrl.u32 %v2353, 7
        %v2355 = vsub.s32 %v2352, %v2354
        %v2356 = vrot.slane %v2348, %v2355
        %v2358 = vunpack.c.l.s4 1935823168
        %v2359 = vunpack.c.0.s8 %v2358
        %v2360 = vlaneseq
        %v2361 = vshrl.u32 %v2360, 7
        %v2362 = vsub.s32 %v2359, %v2361
        %v2363 = vrot.slane %v2349, %v2362
        %v2364 = vcombine.low %v2356, %v2363
        %v2366 = vunpack.c.l.s4 1935823168
        %v2367 = vunpack.c.0.s8 %v2366
        %v2368 = vlaneseq
        %v2369 = vshrl.u32 %v2368, 7
        %v2370 = vsub.s32 %v2367, %v2369
        %v2371 = vrot.slane %v2364, %v2370
        %v2372 = vcombine.low %v905, %v1531
        %v2373 = vcombine.low %v1517, %v1539
        %v2375 = vunpack.c.l.s4 1935823168
        %v2376 = vunpack.c.0.s8 %v2375
        %v2377 = vlaneseq
        %v2378 = vshrl.u32 %v2377, 7
        %v2379 = vsub.s32 %v2376, %v2378
        %v2380 = vrot.slane %v2372, %v2379
        %v2382 = vunpack.c.l.s4 1935823168
        %v2383 = vunpack.c.0.s8 %v2382
        %v2384 = vlaneseq
        %v2385 = vshrl.u32 %v2384, 7
        %v2386 = vsub.s32 %v2383, %v2385
        %v2387 = vrot.slane %v2373, %v2386
        %v2388 = vcombine.low %v2380, %v2387
        %v2390 = vunpack.c.l.s4 1935823168
        %v2391 = vunpack.c.0.s8 %v2390
        %v2392 = vlaneseq
        %v2393 = vshrl.u32 %v2392, 7
        %v2394 = vsub.s32 %v2391, %v2393
        %v2395 = vrot.slane %v2388, %v2394
        %v2396 = vcombine.low %v1541, %v1538
        %v2397 = vcombine.low %v1524, %v1540
        %v2399 = vunpack.c.l.s4 1935823168
        %v2400 = vunpack.c.0.s8 %v2399
        %v2401 = vlaneseq
        %v2402 = vshrl.u32 %v2401, 7
        %v2403 = vsub.s32 %v2400, %v2402
        %v2404 = vrot.slane %v2396, %v2403
        %v2406 = vunpack.c.l.s4 1935823168
        %v2407 = vunpack.c.0.s8 %v2406
        %v2408 = vlaneseq
        %v2409 = vshrl.u32 %v2408, 7
        %v2410 = vsub.s32 %v2407, %v2409
        %v2411 = vrot.slane %v2397, %v2410
        %v2412 = vcombine.low %v2404, %v2411
        %v2414 = vunpack.c.l.s4 1935823168
        %v2415 = vunpack.c.0.s8 %v2414
        %v2416 = vlaneseq
        %v2417 = vshrl.u32 %v2416, 7
        %v2418 = vsub.s32 %v2415, %v2417
        %v2419 = vrot.slane %v2412, %v2418
        %v2420 = vcombine.low %v1542, %v1566
        %v2421 = vcombine.low %v905, %v1580
        %v2423 = vunpack.c.l.s4 1935823168
        %v2424 = vunpack.c.0.s8 %v2423
        %v2425 = vlaneseq
        %v2426 = vshrl.u32 %v2425, 7
        %v2427 = vsub.s32 %v2424, %v2426
        %v2428 = vrot.slane %v2420, %v2427
        %v2430 = vunpack.c.l.s4 1935823168
        %v2431 = vunpack.c.0.s8 %v2430
        %v2432 = vlaneseq
        %v2433 = vshrl.u32 %v2432, 7
        %v2434 = vsub.s32 %v2431, %v2433
        %v2435 = vrot.slane %v2421, %v2434
        %v2436 = vcombine.low %v2428, %v2435
        %v2438 = vunpack.c.l.s4 1935823168
        %v2439 = vunpack.c.0.s8 %v2438
        %v2440 = vlaneseq
        %v2441 = vshrl.u32 %v2440, 7
        %v2442 = vsub.s32 %v2439, %v2441
        %v2443 = vrot.slane %v2436, %v2442
        %v2444 = vcombine.low %v1588, %v1573
        %v2445 = vcombine.low %v1590, %v1587
        %v2447 = vunpack.c.l.s4 1935823168
        %v2448 = vunpack.c.0.s8 %v2447
        %v2449 = vlaneseq
        %v2450 = vshrl.u32 %v2449, 7
        %v2451 = vsub.s32 %v2448, %v2450
        %v2452 = vrot.slane %v2444, %v2451
        %v2454 = vunpack.c.l.s4 1935823168
        %v2455 = vunpack.c.0.s8 %v2454
        %v2456 = vlaneseq
        %v2457 = vshrl.u32 %v2456, 7
        %v2458 = vsub.s32 %v2455, %v2457
        %v2459 = vrot.slane %v2445, %v2458
        %v2460 = vcombine.low %v2452, %v2459
        %v2462 = vunpack.c.l.s4 1935823168
        %v2463 = vunpack.c.0.s8 %v2462
        %v2464 = vlaneseq
        %v2465 = vshrl.u32 %v2464, 7
        %v2466 = vsub.s32 %v2463, %v2465
        %v2467 = vrot.slane %v2460, %v2466
        %v2468 = vcombine.low %v1589, %v905
        %v2469 = vcombine.low %v1591, %v1615
        %v2471 = vunpack.c.l.s4 1935823168
        %v2472 = vunpack.c.0.s8 %v2471
        %v2473 = vlaneseq
        %v2474 = vshrl.u32 %v2473, 7
        %v2475 = vsub.s32 %v2472, %v2474
        %v2476 = vrot.slane %v2468, %v2475
        %v2478 = vunpack.c.l.s4 1935823168
        %v2479 = vunpack.c.0.s8 %v2478
        %v2480 = vlaneseq
        %v2481 = vshrl.u32 %v2480, 7
        %v2482 = vsub.s32 %v2479, %v2481
        %v2483 = vrot.slane %v2469, %v2482
        %v2484 = vcombine.low %v2476, %v2483
        %v2486 = vunpack.c.l.s4 1935823168
        %v2487 = vunpack.c.0.s8 %v2486
        %v2488 = vlaneseq
        %v2489 = vshrl.u32 %v2488, 7
        %v2490 = vsub.s32 %v2487, %v2489
        %v2491 = vrot.slane %v2484, %v2490
        %v2492 = vcombine.low %v1629, %v1639
        %v2493 = vcombine.low %v1637, %v1622
        %v2495 = vunpack.c.l.s4 1935823168
        %v2496 = vunpack.c.0.s8 %v2495
        %v2497 = vlaneseq
        %v2498 = vshrl.u32 %v2497, 7
        %v2499 = vsub.s32 %v2496, %v2498
        %v2500 = vrot.slane %v2492, %v2499
        %v2502 = vunpack.c.l.s4 1935823168
        %v2503 = vunpack.c.0.s8 %v2502
        %v2504 = vlaneseq
        %v2505 = vshrl.u32 %v2504, 7
        %v2506 = vsub.s32 %v2503, %v2505
        %v2507 = vrot.slane %v2493, %v2506
        %v2508 = vcombine.low %v2500, %v2507
        %v2510 = vunpack.c.l.s4 1935823168
        %v2511 = vunpack.c.0.s8 %v2510
        %v2512 = vlaneseq
        %v2513 = vshrl.u32 %v2512, 7
        %v2514 = vsub.s32 %v2511, %v2513
        %v2515 = vrot.slane %v2508, %v2514
        %v2516 = vcombine.low %v1636, %v1640
        %v2517 = vcombine.low %v1638, %v905
        %v2519 = vunpack.c.l.s4 1935823168
        %v2520 = vunpack.c.0.s8 %v2519
        %v2521 = vlaneseq
        %v2522 = vshrl.u32 %v2521, 7
        %v2523 = vsub.s32 %v2520, %v2522
        %v2524 = vrot.slane %v2516, %v2523
        %v2526 = vunpack.c.l.s4 1935823168
        %v2527 = vunpack.c.0.s8 %v2526
        %v2528 = vlaneseq
        %v2529 = vshrl.u32 %v2528, 7
        %v2530 = vsub.s32 %v2527, %v2529
        %v2531 = vrot.slane %v2517, %v2530
        %v2532 = vcombine.low %v2524, %v2531
        %v2534 = vunpack.c.l.s4 1935823168
        %v2535 = vunpack.c.0.s8 %v2534
        %v2536 = vlaneseq
        %v2537 = vshrl.u32 %v2536, 7
        %v2538 = vsub.s32 %v2535, %v2537
        %v2539 = vrot.slane %v2532, %v2538
        %v2540 = vcombine.low %v905, %v1672
        %v2541 = vcombine.low %v1664, %v1674
        %v2543 = vunpack.c.l.s4 1935823168
        %v2544 = vunpack.c.0.s8 %v2543
        %v2545 = vlaneseq
        %v2546 = vshrl.u32 %v2545, 7
        %v2547 = vsub.s32 %v2544, %v2546
        %v2548 = vrot.slane %v2540, %v2547
        %v2550 = vunpack.c.l.s4 1935823168
        %v2551 = vunpack.c.0.s8 %v2550
        %v2552 = vlaneseq
        %v2553 = vshrl.u32 %v2552, 7
        %v2554 = vsub.s32 %v2551, %v2553
        %v2555 = vrot.slane %v2541, %v2554
        %v2556 = vcombine.low %v2548, %v2555
        %v2558 = vunpack.c.l.s4 1935823168
        %v2559 = vunpack.c.0.s8 %v2558
        %v2560 = vlaneseq
        %v2561 = vshrl.u32 %v2560, 7
        %v2562 = vsub.s32 %v2559, %v2561
        %v2563 = vrot.slane %v2556, %v2562
        %v2564 = vcombine.low %v1657, %v1673
        %v2565 = vcombine.low %v1671, %v1675
        %v2567 = vunpack.c.l.s4 1935823168
        %v2568 = vunpack.c.0.s8 %v2567
        %v2569 = vlaneseq
        %v2570 = vshrl.u32 %v2569, 7
        %v2571 = vsub.s32 %v2568, %v2570
        %v2572 = vrot.slane %v2564, %v2571
        %v2574 = vunpack.c.l.s4 1935823168
        %v2575 = vunpack.c.0.s8 %v2574
        %v2576 = vlaneseq
        %v2577 = vshrl.u32 %v2576, 7
        %v2578 = vsub.s32 %v2575, %v2577
        %v2579 = vrot.slane %v2565, %v2578
        %v2580 = vcombine.low %v2572, %v2579
        %v2582 = vunpack.c.l.s4 1935823168
        %v2583 = vunpack.c.0.s8 %v2582
        %v2584 = vlaneseq
        %v2585 = vshrl.u32 %v2584, 7
        %v2586 = vsub.s32 %v2583, %v2585
        %v2587 = vrot.slane %v2580, %v2586
        %v2589 = vunpack.c.l.s4 1935823168
        %v2590 = vunpack.c.0.s8 %v2589
        %v2591 = vlaneseq
        %v2592 = vshrl.u32 %v2591, 7
        %v2593 = vsub.s32 %v2590, %v2592
        %v2594 = vrot.slane %v905, %v2593
        %v2596 = vunpack.c.l.s4 1935823168
        %v2597 = vunpack.c.0.s8 %v2596
        %v2598 = vlaneseq
        %v2599 = vshrl.u32 %v2598, 7
        %v2600 = vsub.s32 %v2597, %v2599
        %v2601 = vrot.slane %v2594, %v2600
        %vm2602 = vsmask.f32 5392
        %vm2603 = vmor %vm383, %vm2602
        %v2605 = vshrl.u32 %v1699, 16
        %v2607 = vrot.slane %v2605, 6
        %v2608 = vshll.u32 %v1699, 16
        %v2610 = vrot.slane %v2608, 7
        %v2611 = vor.u32 %v2607, %v2610
        %v2612 = vrot.slane %v2611, 4
        %v2614 = vshrl.u32 %v1723, 16
        %v2616 = vrot.slane %v2614, 6
        %v2617 = vshll.u32 %v1723, 16
        %v2619 = vrot.slane %v2617, 7
        %v2620 = vor.u32 %v2616, %v2619
        %v2621 = vsel %vm2603, %v2612, %v2620
        %v2622 = vrot.slane %v2620, 4
        %v2624 = vshrl.u32 %v1747, 16
        %v2626 = vrot.slane %v2624, 6
        %v2627 = vshll.u32 %v1747, 16
        %v2629 = vrot.slane %v2627, 7
        %v2630 = vor.u32 %v2626, %v2629
        %v2631 = vsel %vm2603, %v2622, %v2630
        %v2632 = vrot.slane %v2630, 4
        %v2634 = vshrl.u32 %v1771, 16
        %v2636 = vrot.slane %v2634, 6
        %v2637 = vshll.u32 %v1771, 16
        %v2639 = vrot.slane %v2637, 7
        %v2640 = vor.u32 %v2636, %v2639
        %v2641 = vsel %vm2603, %v2632, %v2640
        %v2642 = vrot.slane %v2640, 4
        %v2644 = vshrl.u32 %v1795, 16
        %v2646 = vrot.slane %v2644, 6
        %v2647 = vshll.u32 %v1795, 16
        %v2649 = vrot.slane %v2647, 7
        %v2650 = vor.u32 %v2646, %v2649
        %v2651 = vsel %vm2603, %v2642, %v2650
        %v2652 = vrot.slane %v2650, 4
        %v2654 = vshrl.u32 %v1819, 16
        %v2656 = vrot.slane %v2654, 6
        %v2657 = vshll.u32 %v1819, 16
        %v2659 = vrot.slane %v2657, 7
        %v2660 = vor.u32 %v2656, %v2659
        %v2661 = vsel %vm2603, %v2652, %v2660
        %v2662 = vrot.slane %v2660, 4
        %v2664 = vshrl.u32 %v1843, 16
        %v2666 = vrot.slane %v2664, 6
        %v2667 = vshll.u32 %v1843, 16
        %v2669 = vrot.slane %v2667, 7
        %v2670 = vor.u32 %v2666, %v2669
        %v2671 = vsel %vm2603, %v2662, %v2670
        %v2672 = vrot.slane %v2670, 4
        %v2674 = vshrl.u32 %v1867, 16
        %v2676 = vrot.slane %v2674, 6
        %v2677 = vshll.u32 %v1867, 16
        %v2679 = vrot.slane %v2677, 7
        %v2680 = vor.u32 %v2676, %v2679
        %v2681 = vsel %vm2603, %v2672, %v2680
        %v2682 = vrot.slane %v2680, 4
        %v2684 = vshrl.u32 %v1891, 16
        %v2686 = vrot.slane %v2684, 6
        %v2687 = vshll.u32 %v1891, 16
        %v2689 = vrot.slane %v2687, 7
        %v2690 = vor.u32 %v2686, %v2689
        %v2691 = vsel %vm2603, %v2682, %v2690
        %v2692 = vrot.slane %v2690, 4
        %v2694 = vshrl.u32 %v1915, 16
        %v2696 = vrot.slane %v2694, 6
        %v2697 = vshll.u32 %v1915, 16
        %v2699 = vrot.slane %v2697, 7
        %v2700 = vor.u32 %v2696, %v2699
        %v2701 = vsel %vm2603, %v2692, %v2700
        %v2702 = vrot.slane %v2700, 4
        %v2704 = vshrl.u32 %v1939, 16
        %v2706 = vrot.slane %v2704, 6
        %v2707 = vshll.u32 %v1939, 16
        %v2709 = vrot.slane %v2707, 7
        %v2710 = vor.u32 %v2706, %v2709
        %v2711 = vsel %vm2603, %v2702, %v2710
        %v2712 = vrot.slane %v2710, 4
        %v2714 = vshrl.u32 %v1963, 16
        %v2716 = vrot.slane %v2714, 6
        %v2717 = vshll.u32 %v1963, 16
        %v2719 = vrot.slane %v2717, 7
        %v2720 = vor.u32 %v2716, %v2719
        %v2721 = vsel %vm2603, %v2712, %v2720
        %v2722 = vrot.slane %v2720, 4
        %v2724 = vshrl.u32 %v1987, 16
        %v2726 = vrot.slane %v2724, 6
        %v2727 = vshll.u32 %v1987, 16
        %v2729 = vrot.slane %v2727, 7
        %v2730 = vor.u32 %v2726, %v2729
        %v2731 = vsel %vm2603, %v2722, %v2730
        %v2732 = vrot.slane %v2730, 4
        %v2734 = vshrl.u32 %v2011, 16
        %v2736 = vrot.slane %v2734, 6
        %v2737 = vshll.u32 %v2011, 16
        %v2739 = vrot.slane %v2737, 7
        %v2740 = vor.u32 %v2736, %v2739
        %v2741 = vsel %vm2603, %v2732, %v2740
        %v2742 = vrot.slane %v2740, 4
        %v2744 = vshrl.u32 %v2035, 16
        %v2746 = vrot.slane %v2744, 6
        %v2747 = vshll.u32 %v2035, 16
        %v2749 = vrot.slane %v2747, 7
        %v2750 = vor.u32 %v2746, %v2749
        %v2751 = vsel %vm2603, %v2742, %v2750
        %v2752 = vrot.slane %v2750, 4
        %v2754 = vshrl.u32 %v2059, 16
        %v2756 = vrot.slane %v2754, 6
        %v2757 = vshll.u32 %v2059, 16
        %v2759 = vrot.slane %v2757, 7
        %v2760 = vor.u32 %v2756, %v2759
        %v2761 = vsel %vm2603, %v2752, %v2760
        %v2762 = vrot.slane %v2760, 4
        %v2764 = vshrl.u32 %v2083, 16
        %v2766 = vrot.slane %v2764, 6
        %v2767 = vshll.u32 %v2083, 16
        %v2769 = vrot.slane %v2767, 7
        %v2770 = vor.u32 %v2766, %v2769
        %v2771 = vsel %vm2603, %v2762, %v2770
        %v2772 = vrot.slane %v2770, 4
        %v2774 = vshrl.u32 %v2107, 16
        %v2776 = vrot.slane %v2774, 6
        %v2777 = vshll.u32 %v2107, 16
        %v2779 = vrot.slane %v2777, 7
        %v2780 = vor.u32 %v2776, %v2779
        %v2781 = vsel %vm2603, %v2772, %v2780
        %v2782 = vrot.slane %v2780, 4
        %v2784 = vshrl.u32 %v2131, 16
        %v2786 = vrot.slane %v2784, 6
        %v2787 = vshll.u32 %v2131, 16
        %v2789 = vrot.slane %v2787, 7
        %v2790 = vor.u32 %v2786, %v2789
        %v2791 = vsel %vm2603, %v2782, %v2790
        %v2792 = vrot.slane %v2790, 4
        %v2794 = vshrl.u32 %v2155, 16
        %v2796 = vrot.slane %v2794, 6
        %v2797 = vshll.u32 %v2155, 16
        %v2799 = vrot.slane %v2797, 7
        %v2800 = vor.u32 %v2796, %v2799
        %v2801 = vsel %vm2603, %v2792, %v2800
        %v2802 = vrot.slane %v2800, 4
        %v2804 = vshrl.u32 %v2179, 16
        %v2806 = vrot.slane %v2804, 6
        %v2807 = vshll.u32 %v2179, 16
        %v2809 = vrot.slane %v2807, 7
        %v2810 = vor.u32 %v2806, %v2809
        %v2811 = vsel %vm2603, %v2802, %v2810
        %v2812 = vrot.slane %v2810, 4
        %v2814 = vshrl.u32 %v2203, 16
        %v2816 = vrot.slane %v2814, 6
        %v2817 = vshll.u32 %v2203, 16
        %v2819 = vrot.slane %v2817, 7
        %v2820 = vor.u32 %v2816, %v2819
        %v2821 = vsel %vm2603, %v2812, %v2820
        %v2822 = vrot.slane %v2820, 4
        %v2824 = vshrl.u32 %v2227, 16
        %v2826 = vrot.slane %v2824, 6
        %v2827 = vshll.u32 %v2227, 16
        %v2829 = vrot.slane %v2827, 7
        %v2830 = vor.u32 %v2826, %v2829
        %v2831 = vsel %vm2603, %v2822, %v2830
        %v2832 = vrot.slane %v2830, 4
        %v2834 = vshrl.u32 %v2251, 16
        %v2836 = vrot.slane %v2834, 6
        %v2837 = vshll.u32 %v2251, 16
        %v2839 = vrot.slane %v2837, 7
        %v2840 = vor.u32 %v2836, %v2839
        %v2841 = vsel %vm2603, %v2832, %v2840
        %v2842 = vrot.slane %v2840, 4
        %v2844 = vshrl.u32 %v2275, 16
        %v2846 = vrot.slane %v2844, 6
        %v2847 = vshll.u32 %v2275, 16
        %v2849 = vrot.slane %v2847, 7
        %v2850 = vor.u32 %v2846, %v2849
        %v2851 = vsel %vm2603, %v2842, %v2850
        %v2852 = vrot.slane %v2850, 4
        %v2854 = vshrl.u32 %v2299, 16
        %v2856 = vrot.slane %v2854, 6
        %v2857 = vshll.u32 %v2299, 16
        %v2859 = vrot.slane %v2857, 7
        %v2860 = vor.u32 %v2856, %v2859
        %v2861 = vsel %vm2603, %v2852, %v2860
        %v2862 = vrot.slane %v2860, 4
        %v2864 = vshrl.u32 %v2323, 16
        %v2866 = vrot.slane %v2864, 6
        %v2867 = vshll.u32 %v2323, 16
        %v2869 = vrot.slane %v2867, 7
        %v2870 = vor.u32 %v2866, %v2869
        %v2871 = vsel %vm2603, %v2862, %v2870
        %v2872 = vrot.slane %v2870, 4
        %v2874 = vshrl.u32 %v2347, 16
        %v2876 = vrot.slane %v2874, 6
        %v2877 = vshll.u32 %v2347, 16
        %v2879 = vrot.slane %v2877, 7
        %v2880 = vor.u32 %v2876, %v2879
        %v2881 = vsel %vm2603, %v2872, %v2880
        %v2882 = vrot.slane %v2880, 4
        %v2884 = vshrl.u32 %v2371, 16
        %v2886 = vrot.slane %v2884, 6
        %v2887 = vshll.u32 %v2371, 16
        %v2889 = vrot.slane %v2887, 7
        %v2890 = vor.u32 %v2886, %v2889
        %v2891 = vsel %vm2603, %v2882, %v2890
        %v2892 = vrot.slane %v2890, 4
        %v2894 = vshrl.u32 %v2395, 16
        %v2896 = vrot.slane %v2894, 6
        %v2897 = vshll.u32 %v2395, 16
        %v2899 = vrot.slane %v2897, 7
        %v2900 = vor.u32 %v2896, %v2899
        %v2901 = vsel %vm2603, %v2892, %v2900
        %v2902 = vrot.slane %v2900, 4
        %v2904 = vshrl.u32 %v2419, 16
        %v2906 = vrot.slane %v2904, 6
        %v2907 = vshll.u32 %v2419, 16
        %v2909 = vrot.slane %v2907, 7
        %v2910 = vor.u32 %v2906, %v2909
        %v2911 = vsel %vm2603, %v2902, %v2910
        %v2912 = vrot.slane %v2910, 4
        %v2914 = vshrl.u32 %v2443, 16
        %v2916 = vrot.slane %v2914, 6
        %v2917 = vshll.u32 %v2443, 16
        %v2919 = vrot.slane %v2917, 7
        %v2920 = vor.u32 %v2916, %v2919
        %v2921 = vsel %vm2603, %v2912, %v2920
        %v2922 = vrot.slane %v2920, 4
        %v2924 = vshrl.u32 %v2467, 16
        %v2926 = vrot.slane %v2924, 6
        %v2927 = vshll.u32 %v2467, 16
        %v2929 = vrot.slane %v2927, 7
        %v2930 = vor.u32 %v2926, %v2929
        %v2931 = vsel %vm2603, %v2922, %v2930
        %v2932 = vrot.slane %v2930, 4
        %v2934 = vshrl.u32 %v2491, 16
        %v2936 = vrot.slane %v2934, 6
        %v2937 = vshll.u32 %v2491, 16
        %v2939 = vrot.slane %v2937, 7
        %v2940 = vor.u32 %v2936, %v2939
        %v2941 = vsel %vm2603, %v2932, %v2940
        %v2942 = vrot.slane %v2940, 4
        %v2944 = vshrl.u32 %v2515, 16
        %v2946 = vrot.slane %v2944, 6
        %v2947 = vshll.u32 %v2515, 16
        %v2949 = vrot.slane %v2947, 7
        %v2950 = vor.u32 %v2946, %v2949
        %v2951 = vsel %vm2603, %v2942, %v2950
        %v2952 = vrot.slane %v2950, 4
        %v2954 = vshrl.u32 %v2539, 16
        %v2956 = vrot.slane %v2954, 6
        %v2957 = vshll.u32 %v2539, 16
        %v2959 = vrot.slane %v2957, 7
        %v2960 = vor.u32 %v2956, %v2959
        %v2961 = vsel %vm2603, %v2952, %v2960
        %v2962 = vrot.slane %v2960, 4
        %v2964 = vshrl.u32 %v2563, 16
        %v2966 = vrot.slane %v2964, 6
        %v2967 = vshll.u32 %v2563, 16
        %v2969 = vrot.slane %v2967, 7
        %v2970 = vor.u32 %v2966, %v2969
        %v2971 = vsel %vm2603, %v2962, %v2970
        %v2972 = vrot.slane %v2970, 4
        %v2974 = vshrl.u32 %v2587, 16
        %v2976 = vrot.slane %v2974, 6
        %v2977 = vshll.u32 %v2587, 16
        %v2979 = vrot.slane %v2977, 7
        %v2980 = vor.u32 %v2976, %v2979
        %v2981 = vsel %vm2603, %v2972, %v2980
        %v2982 = vrot.slane %v2980, 4
        %v2984 = vshrl.u32 %v2601, 16
        %v2986 = vrot.slane %v2984, 6
        %v2987 = vshll.u32 %v2601, 16
        %v2989 = vrot.slane %v2987, 7
        %v2990 = vor.u32 %v2986, %v2989
        %v2991 = vsel %vm2603, %v2982, %v2990
        %vm3031 = vcmask 27649
        %vm3032 = vsmask.f32 7942
        %vm3033 = vmand %vm3031, %vm3032
        %v3034 = vld [vmem:[#allocation2 + $0x8] sm:$0xe]
        %v3035 = vsel %vm3033, %v2611, %v3034
        %3036 = vst [vmem:[#allocation2 + $0x8] sm:$0xe] %v3035
        %3037 = vst.msk [vmem:[#allocation2 + $0xc] sm:$0xf] %vm379, %v2621
        %3038 = vst.msk [vmem:[#allocation2 + $0x10] sm:$0xf] %vm379, %v2631
        %3039 = vst.msk [vmem:[#allocation2 + $0x14] sm:$0xf] %vm379, %v2641
        %3040 = vst.msk [vmem:[#allocation2 + $0x18] sm:$0xf] %vm379, %v2651
        %3041 = vst.msk [vmem:[#allocation2 + $0x1c] sm:$0xf] %vm379, %v2661
        %3042 = vst.msk [vmem:[#allocation2 + $0x20] sm:$0xf] %vm379, %v2671
        %3043 = vst.msk [vmem:[#allocation2 + $0x24] sm:$0xf] %vm379, %v2681
        %3044 = vst.msk [vmem:[#allocation2 + $0x28] sm:$0xf] %vm379, %v2691
        %3045 = vst.msk [vmem:[#allocation2 + $0x2c] sm:$0xf] %vm379, %v2701
        %3046 = vst.msk [vmem:[#allocation2 + $0x30] sm:$0xf] %vm379, %v2711
        %3047 = vst.msk [vmem:[#allocation2 + $0x34] sm:$0xf] %vm379, %v2721
        %3048 = vst.msk [vmem:[#allocation2 + $0x38] sm:$0xf] %vm379, %v2731
        %3049 = vst.msk [vmem:[#allocation2 + $0x3c] sm:$0xf] %vm379, %v2741
        %3050 = vst.msk [vmem:[#allocation2 + $0x40] sm:$0xf] %vm379, %v2751
        %3051 = vst.msk [vmem:[#allocation2 + $0x44] sm:$0xf] %vm379, %v2761
        %3052 = vst.msk [vmem:[#allocation2 + $0x48] sm:$0xf] %vm379, %v2771
        %3053 = vst.msk [vmem:[#allocation2 + $0x4c] sm:$0xf] %vm379, %v2781
        %3054 = vst.msk [vmem:[#allocation2 + $0x50] sm:$0xf] %vm379, %v2791
        %3055 = vst.msk [vmem:[#allocation2 + $0x54] sm:$0xf] %vm379, %v2801
        %3056 = vst.msk [vmem:[#allocation2 + $0x58] sm:$0xf] %vm379, %v2811
        %3057 = vst.msk [vmem:[#allocation2 + $0x5c] sm:$0xf] %vm379, %v2821
        %3058 = vst.msk [vmem:[#allocation2 + $0x60] sm:$0xf] %vm379, %v2831
        %3059 = vst.msk [vmem:[#allocation2 + $0x64] sm:$0xf] %vm379, %v2841
        %3060 = vst.msk [vmem:[#allocation2 + $0x68] sm:$0xf] %vm379, %v2851
        %3061 = vst.msk [vmem:[#allocation2 + $0x6c] sm:$0xf] %vm379, %v2861
        %3062 = vst.msk [vmem:[#allocation2 + $0x70] sm:$0xf] %vm379, %v2871
        %3063 = vst.msk [vmem:[#allocation2 + $0x74] sm:$0xf] %vm379, %v2881
        %3064 = vst.msk [vmem:[#allocation2 + $0x78] sm:$0xf] %vm379, %v2891
        %3065 = vst.msk [vmem:[#allocation2 + $0x7c] sm:$0xf] %vm379, %v2901
        %3066 = vst.msk [vmem:[#allocation2 + $0x80] sm:$0xf] %vm379, %v2911
        %3067 = vst.msk [vmem:[#allocation2 + $0x84] sm:$0xf] %vm379, %v2921
        %3068 = vst.msk [vmem:[#allocation2 + $0x88] sm:$0xf] %vm379, %v2931
        %3069 = vst.msk [vmem:[#allocation2 + $0x8c] sm:$0xf] %vm379, %v2941
        %3070 = vst.msk [vmem:[#allocation2 + $0x90] sm:$0xf] %vm379, %v2951
        %3071 = vst.msk [vmem:[#allocation2 + $0x94] sm:$0xf] %vm379, %v2961
        %3072 = vst.msk [vmem:[#allocation2 + $0x98] sm:$0xf] %vm379, %v2971
        %3073 = vst.msk [vmem:[#allocation2 + $0x9c] sm:$0xf] %vm379, %v2981
        %vm3074 = vcmask 26624
        %vm3075 = vsmask.f32 2304
        %vm3076 = vmand %vm3074, %vm3075
        %v3077 = vld [vmem:[#allocation2 + $0xa0] sm:$0x7]
        %v3078 = vsel %vm3076, %v2991, %v3077
        %3079 = vst [vmem:[#allocation2 + $0xa0] sm:$0x7] %v3078
        %v3080 = vld [vmem:[#allocation2] sm:$0xf]
        %v3081 = vld [vmem:[#allocation2 + $0x4] sm:$0xf]
        %v3082 = vld [vmem:[#allocation2 + $0x8] sm:$0xf]
        %v3083 = vld [vmem:[#allocation2 + $0xc] sm:$0xf]
        %v3084 = vld [vmem:[#allocation2 + $0x10] sm:$0xf]
        %v3085 = vld [vmem:[#allocation2 + $0x14] sm:$0xf]
        %v3086 = vld [vmem:[#allocation2 + $0x18] sm:$0xf]
        %v3087 = vld [vmem:[#allocation2 + $0x1c] sm:$0xf]
        %v3088 = vld [vmem:[#allocation2 + $0x20] sm:$0xf]
        %v3089 = vld [vmem:[#allocation2 + $0x24] sm:$0xf]
        %v3090 = vld [vmem:[#allocation2 + $0x28] sm:$0xf]
        %v3091 = vld [vmem:[#allocation2 + $0x2c] sm:$0xf]
        %v3092 = vld [vmem:[#allocation2 + $0x30] sm:$0xf]
        %v3093 = vld [vmem:[#allocation2 + $0x34] sm:$0xf]
        %v3094 = vld [vmem:[#allocation2 + $0x38] sm:$0xf]
        %v3095 = vld [vmem:[#allocation2 + $0x3c] sm:$0xf]
        %v3096 = vld [vmem:[#allocation2 + $0x40] sm:$0xf]
        %v3097 = vld [vmem:[#allocation2 + $0x44] sm:$0xf]
        %v3098 = vld [vmem:[#allocation2 + $0x48] sm:$0xf]
        %v3099 = vld [vmem:[#allocation2 + $0x4c] sm:$0xf]
        %v3100 = vld [vmem:[#allocation2 + $0x50] sm:$0xf]
        %v3101 = vld [vmem:[#allocation2 + $0x54] sm:$0xf]
        %v3102 = vld [vmem:[#allocation2 + $0x58] sm:$0xf]
        %v3103 = vld [vmem:[#allocation2 + $0x5c] sm:$0xf]
        %v3104 = vld [vmem:[#allocation2 + $0x60] sm:$0xf]
        %v3105 = vld [vmem:[#allocation2 + $0x64] sm:$0xf]
        %v3106 = vld [vmem:[#allocation2 + $0x68] sm:$0xf]
        %v3107 = vld [vmem:[#allocation2 + $0x6c] sm:$0xf]
        %v3108 = vld [vmem:[#allocation2 + $0x70] sm:$0xf]
        %v3109 = vld [vmem:[#allocation2 + $0x74] sm:$0xf]
        %v3110 = vld [vmem:[#allocation2 + $0x78] sm:$0xf]
        %v3111 = vld [vmem:[#allocation2 + $0x7c] sm:$0xf]
        %v3112 = vld [vmem:[#allocation2 + $0x80] sm:$0xf]
        %v3113 = vld [vmem:[#allocation2 + $0x84] sm:$0xf]
        %v3114 = vld [vmem:[#allocation2 + $0x88] sm:$0xf]
        %v3115 = vld [vmem:[#allocation2 + $0x8c] sm:$0xf]
        %v3116 = vld [vmem:[#allocation2 + $0x90] sm:$0xf]
        %v3117 = vld [vmem:[#allocation2 + $0x94] sm:$0xf]
        %v3118 = vld [vmem:[#allocation2 + $0x98] sm:$0x1]
        %v3119 = vld [vmem:[#allocation2 + $0x98] sm:$0x3]
        %v3120 = vld [vmem:[#allocation2] sm:$0xe]
        %v3121 = vld [vmem:[#allocation2 + $0x8] sm:$0xe]
        %v3122 = vld [vmem:[#allocation2 + $0x98] sm:$0xf]
        %v3123 = vld [vmem:[#allocation2 + $0x9c] sm:$0xf]
        %v3124 = vld [vmem:[#allocation2 + $0xa0] sm:$0x3]
        %v3125 = vld [vmem:[#allocation2 + $0xa0] sm:$0x7]
        %v3126 = vld [vmem:[#allocation2 + $0x8] sm:$0xc]
        %v3127 = vld [vmem:[#allocation2 + $0x10] sm:$0xc]
        %v3128 = vld [vmem:[#allocation2 + $0xa0] sm:$0xf]
        %v3129 = vld [vmem:[#allocation2 + $0xa4] sm:$0xf]
        %v3130 = vld [vmem:[#allocation2 + $0xa8] sm:$0x7]
        %v3131 = vld [vmem:[#allocation2 + $0xa8] sm:$0xf]
        %v3132 = vld [vmem:[#allocation2 + $0x10] sm:$0x8]
        %v3172 = vunpack.c.l.b16 %v3080
        %v3173 = vunpack.c.l.b16 %v3081
        %v3174 = vunpack.c.l.b16 %v3082
        %v3175 = vunpack.c.l.b16 %v3083
        %v3176 = vunpack.c.l.b16 %v3084
        %v3177 = vunpack.c.l.b16 %v3085
        %v3178 = vunpack.c.l.b16 %v3086
        %v3179 = vunpack.c.l.b16 %v3087
        %v3180 = vunpack.c.l.b16 %v3088
        %v3181 = vunpack.c.l.b16 %v3089
        %v3182 = vunpack.c.l.b16 %v3090
        %v3183 = vunpack.c.l.b16 %v3091
        %v3184 = vunpack.c.l.b16 %v3092
        %v3185 = vunpack.c.l.b16 %v3093
        %v3186 = vunpack.c.l.b16 %v3094
        %v3187 = vunpack.c.l.b16 %v3095
        %v3188 = vunpack.c.l.b16 %v3096
        %v3189 = vunpack.c.l.b16 %v3097
        %v3190 = vunpack.c.l.b16 %v3098
        %v3191 = vunpack.c.l.b16 %v3099
        %v3192 = vunpack.c.l.b16 %v3100
        %v3193 = vunpack.c.l.b16 %v3101
        %v3194 = vunpack.c.l.b16 %v3102
        %v3195 = vunpack.c.l.b16 %v3103
        %v3196 = vunpack.c.l.b16 %v3104
        %v3197 = vunpack.c.l.b16 %v3105
        %v3198 = vunpack.c.l.b16 %v3106
        %v3199 = vunpack.c.l.b16 %v3107
        %v3200 = vunpack.c.l.b16 %v3108
        %v3201 = vunpack.c.l.b16 %v3109
        %v3202 = vunpack.c.l.b16 %v3110
        %v3203 = vunpack.c.l.b16 %v3111
        %v3204 = vunpack.c.l.b16 %v3112
        %v3205 = vunpack.c.l.b16 %v3113
        %v3206 = vunpack.c.l.b16 %v3114
        %v3207 = vunpack.c.l.b16 %v3115
        %v3208 = vunpack.c.l.b16 %v3116
        %v3209 = vunpack.c.l.b16 %v3117
        %v3210 = vunpack.c.l.b16 %v3118
        %v3211 = vpack.c.b16 %v3173, %v3172
        %v3212 = vpack.c.b16 %v3175, %v3174
        %v3213 = vpack.c.b16 %v3177, %v3176
        %v3214 = vpack.c.b16 %v3179, %v3178
        %v3215 = vpack.c.b16 %v3181, %v3180
        %v3216 = vpack.c.b16 %v3183, %v3182
        %v3217 = vpack.c.b16 %v3185, %v3184
        %v3218 = vpack.c.b16 %v3187, %v3186
        %v3219 = vpack.c.b16 %v3189, %v3188
        %v3220 = vpack.c.b16 %v3191, %v3190
        %v3221 = vpack.c.b16 %v3193, %v3192
        %v3222 = vpack.c.b16 %v3195, %v3194
        %v3223 = vpack.c.b16 %v3197, %v3196
        %v3224 = vpack.c.b16 %v3199, %v3198
        %v3225 = vpack.c.b16 %v3201, %v3200
        %v3226 = vpack.c.b16 %v3203, %v3202
        %v3227 = vpack.c.b16 %v3205, %v3204
        %v3228 = vpack.c.b16 %v3207, %v3206
        %v3229 = vpack.c.b16 %v3209, %v3208
        %v3230 = vpack.c.b16 %v3210, %v3210
        %v3232 = vunpack.c.l.b16 %v3119
        %v3233 = vpack.c.b16 %v3232, %v3232
        %vm3234 = vsmask.f32 7424
        %v3236 = vshrl.u32 %v3211, 16
        %v3238 = vshll.u32 %v3211, 16
        %v3240 = vrot.slane %v3238, 1
        %v3241 = vor.u32 %v3236, %v3240
        %v3243 = vshll.u32 %v3212, 16
        %v3245 = vrot.slane %v3243, 1
        %v3246 = vsel %vm3234, %v3241, %v3245
        %v3247 = vshrl.u32 %v3212, 16
        %v3249 = vor.u32 %v3247, %v3245
        %v3251 = vshll.u32 %v3213, 16
        %v3253 = vrot.slane %v3251, 1
        %v3254 = vsel %vm3234, %v3249, %v3253
        %v3255 = vshrl.u32 %v3213, 16
        %v3257 = vor.u32 %v3255, %v3253
        %v3259 = vshll.u32 %v3214, 16
        %v3261 = vrot.slane %v3259, 1
        %v3262 = vsel %vm3234, %v3257, %v3261
        %v3263 = vshrl.u32 %v3214, 16
        %v3265 = vor.u32 %v3263, %v3261
        %v3267 = vshll.u32 %v3215, 16
        %v3269 = vrot.slane %v3267, 1
        %v3270 = vsel %vm3234, %v3265, %v3269
        %v3271 = vshrl.u32 %v3215, 16
        %v3273 = vor.u32 %v3271, %v3269
        %v3275 = vshll.u32 %v3216, 16
        %v3277 = vrot.slane %v3275, 1
        %v3278 = vsel %vm3234, %v3273, %v3277
        %v3279 = vshrl.u32 %v3216, 16
        %v3281 = vor.u32 %v3279, %v3277
        %v3283 = vshll.u32 %v3217, 16
        %v3285 = vrot.slane %v3283, 1
        %v3286 = vsel %vm3234, %v3281, %v3285
        %v3287 = vshrl.u32 %v3217, 16
        %v3289 = vor.u32 %v3287, %v3285
        %v3291 = vshll.u32 %v3218, 16
        %v3293 = vrot.slane %v3291, 1
        %v3294 = vsel %vm3234, %v3289, %v3293
        %v3295 = vshrl.u32 %v3218, 16
        %v3297 = vor.u32 %v3295, %v3293
        %v3299 = vshll.u32 %v3219, 16
        %v3301 = vrot.slane %v3299, 1
        %v3302 = vsel %vm3234, %v3297, %v3301
        %v3303 = vshrl.u32 %v3219, 16
        %v3305 = vor.u32 %v3303, %v3301
        %v3307 = vshll.u32 %v3220, 16
        %v3309 = vrot.slane %v3307, 1
        %v3310 = vsel %vm3234, %v3305, %v3309
        %v3311 = vshrl.u32 %v3220, 16
        %v3313 = vor.u32 %v3311, %v3309
        %v3315 = vshll.u32 %v3221, 16
        %v3317 = vrot.slane %v3315, 1
        %v3318 = vsel %vm3234, %v3313, %v3317
        %v3319 = vshrl.u32 %v3221, 16
        %v3321 = vor.u32 %v3319, %v3317
        %v3323 = vshll.u32 %v3222, 16
        %v3325 = vrot.slane %v3323, 1
        %v3326 = vsel %vm3234, %v3321, %v3325
        %v3327 = vshrl.u32 %v3222, 16
        %v3329 = vor.u32 %v3327, %v3325
        %v3331 = vshll.u32 %v3223, 16
        %v3333 = vrot.slane %v3331, 1
        %v3334 = vsel %vm3234, %v3329, %v3333
        %v3335 = vshrl.u32 %v3223, 16
        %v3337 = vor.u32 %v3335, %v3333
        %v3339 = vshll.u32 %v3224, 16
        %v3341 = vrot.slane %v3339, 1
        %v3342 = vsel %vm3234, %v3337, %v3341
        %v3343 = vshrl.u32 %v3224, 16
        %v3345 = vor.u32 %v3343, %v3341
        %v3347 = vshll.u32 %v3225, 16
        %v3349 = vrot.slane %v3347, 1
        %v3350 = vsel %vm3234, %v3345, %v3349
        %v3351 = vshrl.u32 %v3225, 16
        %v3353 = vor.u32 %v3351, %v3349
        %v3355 = vshll.u32 %v3226, 16
        %v3357 = vrot.slane %v3355, 1
        %v3358 = vsel %vm3234, %v3353, %v3357
        %v3359 = vshrl.u32 %v3226, 16
        %v3361 = vor.u32 %v3359, %v3357
        %v3363 = vshll.u32 %v3227, 16
        %v3365 = vrot.slane %v3363, 1
        %v3366 = vsel %vm3234, %v3361, %v3365
        %v3367 = vshrl.u32 %v3227, 16
        %v3369 = vor.u32 %v3367, %v3365
        %v3371 = vshll.u32 %v3228, 16
        %v3373 = vrot.slane %v3371, 1
        %v3374 = vsel %vm3234, %v3369, %v3373
        %v3375 = vshrl.u32 %v3228, 16
        %v3377 = vor.u32 %v3375, %v3373
        %v3379 = vshll.u32 %v3229, 16
        %v3381 = vrot.slane %v3379, 1
        %v3382 = vsel %vm3234, %v3377, %v3381
        %v3383 = vshrl.u32 %v3229, 16
        %v3385 = vor.u32 %v3383, %v3381
        %v3387 = vshll.u32 %v3233, 16
        %v3389 = vrot.slane %v3387, 1
        %v3390 = vsel %vm3234, %v3385, %v3389
        %v3391 = vshrl.u32 %v3233, 16
        %v3393 = vor.u32 %v3391, %v3389
        %3394 = vrot.lane.b32.xlu0 %v3246, 4
        %v3395 = vpop.permute.xlu0 %3394
        %3396 = vrot.lane.b32.xlu0 %v3254, 4
        %v3397 = vpop.permute.xlu0 %3396
        %3398 = vrot.lane.b32.xlu0 %v3262, 4
        %v3399 = vpop.permute.xlu0 %3398
        %3400 = vrot.lane.b32.xlu0 %v3270, 4
        %v3401 = vpop.permute.xlu0 %3400
        %3402 = vrot.lane.b32.xlu0 %v3278, 4
        %v3403 = vpop.permute.xlu0 %3402
        %3404 = vrot.lane.b32.xlu0 %v3286, 4
        %v3405 = vpop.permute.xlu0 %3404
        %3406 = vrot.lane.b32.xlu0 %v3294, 4
        %v3407 = vpop.permute.xlu0 %3406
        %3408 = vrot.lane.b32.xlu0 %v3302, 4
        %v3409 = vpop.permute.xlu0 %3408
        %3410 = vrot.lane.b32.xlu0 %v3310, 4
        %v3411 = vpop.permute.xlu0 %3410
        %3412 = vrot.lane.b32.xlu0 %v3318, 4
        %v3413 = vpop.permute.xlu0 %3412
        %3414 = vrot.lane.b32.xlu0 %v3326, 4
        %v3415 = vpop.permute.xlu0 %3414
        %3416 = vrot.lane.b32.xlu0 %v3334, 4
        %v3417 = vpop.permute.xlu0 %3416
        %3418 = vrot.lane.b32.xlu0 %v3342, 4
        %v3419 = vpop.permute.xlu0 %3418
        %3420 = vrot.lane.b32.xlu0 %v3350, 4
        %v3421 = vpop.permute.xlu0 %3420
        %3422 = vrot.lane.b32.xlu0 %v3358, 4
        %v3423 = vpop.permute.xlu0 %3422
        %3424 = vrot.lane.b32.xlu0 %v3366, 4
        %v3425 = vpop.permute.xlu0 %3424
        %3426 = vrot.lane.b32.xlu0 %v3374, 4
        %v3427 = vpop.permute.xlu0 %3426
        %3428 = vrot.lane.b32.xlu0 %v3382, 4
        %v3429 = vpop.permute.xlu0 %3428
        %3430 = vrot.lane.b32.xlu0 %v3390, 4
        %v3431 = vpop.permute.xlu0 %3430
        %3432 = vrot.lane.b32.xlu0 %v3393, 4
        %v3433 = vpop.permute.xlu0 %3432
        %v3435 = vunpack.c.l.b16 %v3120
        %v3436 = vpack.c.b16 %v3173, %v3435
        %vm3437 = vcmask 1046528
        %v3438 = vrot.slane %v3436, 1
        %v3439 = vrot.slane %v3212, 1
        %v3440 = vsel %vm3437, %v3438, %v3439
        %v3441 = vrot.slane %v3213, 1
        %v3442 = vsel %vm3437, %v3439, %v3441
        %v3443 = vrot.slane %v3214, 1
        %v3444 = vsel %vm3437, %v3441, %v3443
        %v3445 = vrot.slane %v3215, 1
        %v3446 = vsel %vm3437, %v3443, %v3445
        %v3447 = vrot.slane %v3216, 1
        %v3448 = vsel %vm3437, %v3445, %v3447
        %v3449 = vrot.slane %v3217, 1
        %v3450 = vsel %vm3437, %v3447, %v3449
        %v3451 = vrot.slane %v3218, 1
        %v3452 = vsel %vm3437, %v3449, %v3451
        %v3453 = vrot.slane %v3219, 1
        %v3454 = vsel %vm3437, %v3451, %v3453
        %v3455 = vrot.slane %v3220, 1
        %v3456 = vsel %vm3437, %v3453, %v3455
        %v3457 = vrot.slane %v3221, 1
        %v3458 = vsel %vm3437, %v3455, %v3457
        %v3459 = vrot.slane %v3222, 1
        %v3460 = vsel %vm3437, %v3457, %v3459
        %v3461 = vrot.slane %v3223, 1
        %v3462 = vsel %vm3437, %v3459, %v3461
        %v3463 = vrot.slane %v3224, 1
        %v3464 = vsel %vm3437, %v3461, %v3463
        %v3465 = vrot.slane %v3225, 1
        %v3466 = vsel %vm3437, %v3463, %v3465
        %v3467 = vrot.slane %v3226, 1
        %v3468 = vsel %vm3437, %v3465, %v3467
        %v3469 = vrot.slane %v3227, 1
        %v3470 = vsel %vm3437, %v3467, %v3469
        %v3471 = vrot.slane %v3228, 1
        %v3472 = vsel %vm3437, %v3469, %v3471
        %v3473 = vrot.slane %v3229, 1
        %v3474 = vsel %vm3437, %v3471, %v3473
        %v3475 = vrot.slane %v3233, 1
        %v3476 = vsel %vm3437, %v3473, %v3475
        %3477 = vrot.lane.b32.xlu0 %v3440, 8
        %v3478 = vpop.permute.xlu0 %3477
        %3479 = vrot.lane.b32.xlu0 %v3442, 8
        %v3480 = vpop.permute.xlu0 %3479
        %3481 = vrot.lane.b32.xlu0 %v3444, 8
        %v3482 = vpop.permute.xlu0 %3481
        %3483 = vrot.lane.b32.xlu0 %v3446, 8
        %v3484 = vpop.permute.xlu0 %3483
        %3485 = vrot.lane.b32.xlu0 %v3448, 8
        %v3486 = vpop.permute.xlu0 %3485
        %3487 = vrot.lane.b32.xlu0 %v3450, 8
        %v3488 = vpop.permute.xlu0 %3487
        %3489 = vrot.lane.b32.xlu0 %v3452, 8
        %v3490 = vpop.permute.xlu0 %3489
        %3491 = vrot.lane.b32.xlu0 %v3454, 8
        %v3492 = vpop.permute.xlu0 %3491
        %3493 = vrot.lane.b32.xlu0 %v3456, 8
        %v3494 = vpop.permute.xlu0 %3493
        %3495 = vrot.lane.b32.xlu0 %v3458, 8
        %v3496 = vpop.permute.xlu0 %3495
        %3497 = vrot.lane.b32.xlu0 %v3460, 8
        %v3498 = vpop.permute.xlu0 %3497
        %3499 = vrot.lane.b32.xlu0 %v3462, 8
        %v3500 = vpop.permute.xlu0 %3499
        %3501 = vrot.lane.b32.xlu0 %v3464, 8
        %v3502 = vpop.permute.xlu0 %3501
        %3503 = vrot.lane.b32.xlu0 %v3466, 8
        %v3504 = vpop.permute.xlu0 %3503
        %3505 = vrot.lane.b32.xlu0 %v3468, 8
        %v3506 = vpop.permute.xlu0 %3505
        %3507 = vrot.lane.b32.xlu0 %v3470, 8
        %v3508 = vpop.permute.xlu0 %3507
        %3509 = vrot.lane.b32.xlu0 %v3472, 8
        %v3510 = vpop.permute.xlu0 %3509
        %3511 = vrot.lane.b32.xlu0 %v3474, 8
        %v3512 = vpop.permute.xlu0 %3511
        %3513 = vrot.lane.b32.xlu0 %v3476, 8
        %v3514 = vpop.permute.xlu0 %3513
        %3515 = vrot.lane.b32.xlu0 %v3475, 8
        %v3516 = vpop.permute.xlu0 %3515
        %v3521 = vunpack.c.l.b16 %v3121
        %v3522 = vunpack.c.l.b16 %v3122
        %v3523 = vunpack.c.l.b16 %v3123
        %v3524 = vunpack.c.l.b16 %v3124
        %v3525 = vpack.c.b16 %v3175, %v3521
        %v3526 = vpack.c.b16 %v3523, %v3522
        %v3527 = vpack.c.b16 %v3524, %v3524
        %v3528 = vrot.slane %v3525, 1
        %v3529 = vsel %vm3437, %v3528, %v3441
        %v3530 = vrot.slane %v3526, 1
        %v3531 = vsel %vm3437, %v3473, %v3530
        %v3532 = vrot.slane %v3527, 1
        %v3533 = vsel %vm3437, %v3530, %v3532
        %3534 = vrot.lane.b32.xlu0 %v3529, 12
        %v3535 = vpop.permute.xlu0 %3534
        %3536 = vrot.lane.b32.xlu0 %v3444, 12
        %v3537 = vpop.permute.xlu0 %3536
        %3538 = vrot.lane.b32.xlu0 %v3446, 12
        %v3539 = vpop.permute.xlu0 %3538
        %3540 = vrot.lane.b32.xlu0 %v3448, 12
        %v3541 = vpop.permute.xlu0 %3540
        %3542 = vrot.lane.b32.xlu0 %v3450, 12
        %v3543 = vpop.permute.xlu0 %3542
        %3544 = vrot.lane.b32.xlu0 %v3452, 12
        %v3545 = vpop.permute.xlu0 %3544
        %3546 = vrot.lane.b32.xlu0 %v3454, 12
        %v3547 = vpop.permute.xlu0 %3546
        %3548 = vrot.lane.b32.xlu0 %v3456, 12
        %v3549 = vpop.permute.xlu0 %3548
        %3550 = vrot.lane.b32.xlu0 %v3458, 12
        %v3551 = vpop.permute.xlu0 %3550
        %3552 = vrot.lane.b32.xlu0 %v3460, 12
        %v3553 = vpop.permute.xlu0 %3552
        %3554 = vrot.lane.b32.xlu0 %v3462, 12
        %v3555 = vpop.permute.xlu0 %3554
        %3556 = vrot.lane.b32.xlu0 %v3464, 12
        %v3557 = vpop.permute.xlu0 %3556
        %3558 = vrot.lane.b32.xlu0 %v3466, 12
        %v3559 = vpop.permute.xlu0 %3558
        %3560 = vrot.lane.b32.xlu0 %v3468, 12
        %v3561 = vpop.permute.xlu0 %3560
        %3562 = vrot.lane.b32.xlu0 %v3470, 12
        %v3563 = vpop.permute.xlu0 %3562
        %3564 = vrot.lane.b32.xlu0 %v3472, 12
        %v3565 = vpop.permute.xlu0 %3564
        %3566 = vrot.lane.b32.xlu0 %v3474, 12
        %v3567 = vpop.permute.xlu0 %3566
        %3568 = vrot.lane.b32.xlu0 %v3531, 12
        %v3569 = vpop.permute.xlu0 %3568
        %3570 = vrot.lane.b32.xlu0 %v3533, 12
        %v3571 = vpop.permute.xlu0 %3570
        %3572 = vrot.lane.b32.xlu0 %v3532, 12
        %v3573 = vpop.permute.xlu0 %3572
        %v3575 = vunpack.c.l.b16 %v3125
        %v3576 = vpack.c.b16 %v3575, %v3575
        %vm3577 = vsmask.f32 6400
        %v3579 = vshrl.u32 %v3525, 16
        %v3581 = vrot.slane %v3579, 1
        %v3582 = vshll.u32 %v3525, 16
        %v3584 = vrot.slane %v3582, 2
        %v3585 = vor.u32 %v3581, %v3584
        %v3586 = vrot.slane %v3255, 1
        %v3587 = vrot.slane %v3251, 2
        %v3588 = vor.u32 %v3586, %v3587
        %v3589 = vsel %vm3577, %v3585, %v3588
        %v3590 = vrot.slane %v3263, 1
        %v3591 = vrot.slane %v3259, 2
        %v3592 = vor.u32 %v3590, %v3591
        %v3593 = vsel %vm3577, %v3588, %v3592
        %v3594 = vrot.slane %v3271, 1
        %v3595 = vrot.slane %v3267, 2
        %v3596 = vor.u32 %v3594, %v3595
        %v3597 = vsel %vm3577, %v3592, %v3596
        %v3598 = vrot.slane %v3279, 1
        %v3599 = vrot.slane %v3275, 2
        %v3600 = vor.u32 %v3598, %v3599
        %v3601 = vsel %vm3577, %v3596, %v3600
        %v3602 = vrot.slane %v3287, 1
        %v3603 = vrot.slane %v3283, 2
        %v3604 = vor.u32 %v3602, %v3603
        %v3605 = vsel %vm3577, %v3600, %v3604
        %v3606 = vrot.slane %v3295, 1
        %v3607 = vrot.slane %v3291, 2
        %v3608 = vor.u32 %v3606, %v3607
        %v3609 = vsel %vm3577, %v3604, %v3608
        %v3610 = vrot.slane %v3303, 1
        %v3611 = vrot.slane %v3299, 2
        %v3612 = vor.u32 %v3610, %v3611
        %v3613 = vsel %vm3577, %v3608, %v3612
        %v3614 = vrot.slane %v3311, 1
        %v3615 = vrot.slane %v3307, 2
        %v3616 = vor.u32 %v3614, %v3615
        %v3617 = vsel %vm3577, %v3612, %v3616
        %v3618 = vrot.slane %v3319, 1
        %v3619 = vrot.slane %v3315, 2
        %v3620 = vor.u32 %v3618, %v3619
        %v3621 = vsel %vm3577, %v3616, %v3620
        %v3622 = vrot.slane %v3327, 1
        %v3623 = vrot.slane %v3323, 2
        %v3624 = vor.u32 %v3622, %v3623
        %v3625 = vsel %vm3577, %v3620, %v3624
        %v3626 = vrot.slane %v3335, 1
        %v3627 = vrot.slane %v3331, 2
        %v3628 = vor.u32 %v3626, %v3627
        %v3629 = vsel %vm3577, %v3624, %v3628
        %v3630 = vrot.slane %v3343, 1
        %v3631 = vrot.slane %v3339, 2
        %v3632 = vor.u32 %v3630, %v3631
        %v3633 = vsel %vm3577, %v3628, %v3632
        %v3634 = vrot.slane %v3351, 1
        %v3635 = vrot.slane %v3347, 2
        %v3636 = vor.u32 %v3634, %v3635
        %v3637 = vsel %vm3577, %v3632, %v3636
        %v3638 = vrot.slane %v3359, 1
        %v3639 = vrot.slane %v3355, 2
        %v3640 = vor.u32 %v3638, %v3639
        %v3641 = vsel %vm3577, %v3636, %v3640
        %v3642 = vrot.slane %v3367, 1
        %v3643 = vrot.slane %v3363, 2
        %v3644 = vor.u32 %v3642, %v3643
        %v3645 = vsel %vm3577, %v3640, %v3644
        %v3646 = vrot.slane %v3375, 1
        %v3647 = vrot.slane %v3371, 2
        %v3648 = vor.u32 %v3646, %v3647
        %v3649 = vsel %vm3577, %v3644, %v3648
        %v3650 = vrot.slane %v3383, 1
        %v3651 = vrot.slane %v3379, 2
        %v3652 = vor.u32 %v3650, %v3651
        %v3653 = vsel %vm3577, %v3648, %v3652
        %v3655 = vshrl.u32 %v3526, 16
        %v3657 = vrot.slane %v3655, 1
        %v3658 = vshll.u32 %v3526, 16
        %v3660 = vrot.slane %v3658, 2
        %v3661 = vor.u32 %v3657, %v3660
        %v3662 = vsel %vm3577, %v3652, %v3661
        %v3664 = vshrl.u32 %v3576, 16
        %v3666 = vrot.slane %v3664, 1
        %v3667 = vshll.u32 %v3576, 16
        %v3669 = vrot.slane %v3667, 2
        %v3670 = vor.u32 %v3666, %v3669
        %v3671 = vsel %vm3577, %v3661, %v3670
        %3672 = vrot.lane.b32.xlu0 %v3589, 16
        %v3673 = vpop.permute.xlu0 %3672
        %3674 = vrot.lane.b32.xlu0 %v3593, 16
        %v3675 = vpop.permute.xlu0 %3674
        %3676 = vrot.lane.b32.xlu0 %v3597, 16
        %v3677 = vpop.permute.xlu0 %3676
        %3678 = vrot.lane.b32.xlu0 %v3601, 16
        %v3679 = vpop.permute.xlu0 %3678
        %3680 = vrot.lane.b32.xlu0 %v3605, 16
        %v3681 = vpop.permute.xlu0 %3680
        %3682 = vrot.lane.b32.xlu0 %v3609, 16
        %v3683 = vpop.permute.xlu0 %3682
        %3684 = vrot.lane.b32.xlu0 %v3613, 16
        %v3685 = vpop.permute.xlu0 %3684
        %3686 = vrot.lane.b32.xlu0 %v3617, 16
        %v3687 = vpop.permute.xlu0 %3686
        %3688 = vrot.lane.b32.xlu0 %v3621, 16
        %v3689 = vpop.permute.xlu0 %3688
        %3690 = vrot.lane.b32.xlu0 %v3625, 16
        %v3691 = vpop.permute.xlu0 %3690
        %3692 = vrot.lane.b32.xlu0 %v3629, 16
        %v3693 = vpop.permute.xlu0 %3692
        %3694 = vrot.lane.b32.xlu0 %v3633, 16
        %v3695 = vpop.permute.xlu0 %3694
        %3696 = vrot.lane.b32.xlu0 %v3637, 16
        %v3697 = vpop.permute.xlu0 %3696
        %3698 = vrot.lane.b32.xlu0 %v3641, 16
        %v3699 = vpop.permute.xlu0 %3698
        %3700 = vrot.lane.b32.xlu0 %v3645, 16
        %v3701 = vpop.permute.xlu0 %3700
        %3702 = vrot.lane.b32.xlu0 %v3649, 16
        %v3703 = vpop.permute.xlu0 %3702
        %3704 = vrot.lane.b32.xlu0 %v3653, 16
        %v3705 = vpop.permute.xlu0 %3704
        %3706 = vrot.lane.b32.xlu0 %v3662, 16
        %v3707 = vpop.permute.xlu0 %3706
        %3708 = vrot.lane.b32.xlu0 %v3671, 16
        %v3709 = vpop.permute.xlu0 %3708
        %3710 = vrot.lane.b32.xlu0 %v3670, 16
        %v3711 = vpop.permute.xlu0 %3710
        %v3713 = vunpack.c.l.b16 %v3126
        %v3714 = vpack.c.b16 %v3175, %v3713
        %vm3715 = vcmask 1045504
        %v3716 = vrot.slane %v3714, 2
        %v3717 = vrot.slane %v3213, 2
        %v3718 = vsel %vm3715, %v3716, %v3717
        %v3719 = vrot.slane %v3214, 2
        %v3720 = vsel %vm3715, %v3717, %v3719
        %v3721 = vrot.slane %v3215, 2
        %v3722 = vsel %vm3715, %v3719, %v3721
        %v3723 = vrot.slane %v3216, 2
        %v3724 = vsel %vm3715, %v3721, %v3723
        %v3725 = vrot.slane %v3217, 2
        %v3726 = vsel %vm3715, %v3723, %v3725
        %v3727 = vrot.slane %v3218, 2
        %v3728 = vsel %vm3715, %v3725, %v3727
        %v3729 = vrot.slane %v3219, 2
        %v3730 = vsel %vm3715, %v3727, %v3729
        %v3731 = vrot.slane %v3220, 2
        %v3732 = vsel %vm3715, %v3729, %v3731
        %v3733 = vrot.slane %v3221, 2
        %v3734 = vsel %vm3715, %v3731, %v3733
        %v3735 = vrot.slane %v3222, 2
        %v3736 = vsel %vm3715, %v3733, %v3735
        %v3737 = vrot.slane %v3223, 2
        %v3738 = vsel %vm3715, %v3735, %v3737
        %v3739 = vrot.slane %v3224, 2
        %v3740 = vsel %vm3715, %v3737, %v3739
        %v3741 = vrot.slane %v3225, 2
        %v3742 = vsel %vm3715, %v3739, %v3741
        %v3743 = vrot.slane %v3226, 2
        %v3744 = vsel %vm3715, %v3741, %v3743
        %v3745 = vrot.slane %v3227, 2
        %v3746 = vsel %vm3715, %v3743, %v3745
        %v3747 = vrot.slane %v3228, 2
        %v3748 = vsel %vm3715, %v3745, %v3747
        %v3749 = vrot.slane %v3229, 2
        %v3750 = vsel %vm3715, %v3747, %v3749
        %v3751 = vrot.slane %v3526, 2
        %v3752 = vsel %vm3715, %v3749, %v3751
        %v3753 = vrot.slane %v3576, 2
        %v3754 = vsel %vm3715, %v3751, %v3753
        %3755 = vrot.lane.b32.xlu0 %v3718, 20
        %v3756 = vpop.permute.xlu0 %3755
        %3757 = vrot.lane.b32.xlu0 %v3720, 20
        %v3758 = vpop.permute.xlu0 %3757
        %3759 = vrot.lane.b32.xlu0 %v3722, 20
        %v3760 = vpop.permute.xlu0 %3759
        %3761 = vrot.lane.b32.xlu0 %v3724, 20
        %v3762 = vpop.permute.xlu0 %3761
        %3763 = vrot.lane.b32.xlu0 %v3726, 20
        %v3764 = vpop.permute.xlu0 %3763
        %3765 = vrot.lane.b32.xlu0 %v3728, 20
        %v3766 = vpop.permute.xlu0 %3765
        %3767 = vrot.lane.b32.xlu0 %v3730, 20
        %v3768 = vpop.permute.xlu0 %3767
        %3769 = vrot.lane.b32.xlu0 %v3732, 20
        %v3770 = vpop.permute.xlu0 %3769
        %3771 = vrot.lane.b32.xlu0 %v3734, 20
        %v3772 = vpop.permute.xlu0 %3771
        %3773 = vrot.lane.b32.xlu0 %v3736, 20
        %v3774 = vpop.permute.xlu0 %3773
        %3775 = vrot.lane.b32.xlu0 %v3738, 20
        %v3776 = vpop.permute.xlu0 %3775
        %3777 = vrot.lane.b32.xlu0 %v3740, 20
        %v3778 = vpop.permute.xlu0 %3777
        %3779 = vrot.lane.b32.xlu0 %v3742, 20
        %v3780 = vpop.permute.xlu0 %3779
        %3781 = vrot.lane.b32.xlu0 %v3744, 20
        %v3782 = vpop.permute.xlu0 %3781
        %3783 = vrot.lane.b32.xlu0 %v3746, 20
        %v3784 = vpop.permute.xlu0 %3783
        %3785 = vrot.lane.b32.xlu0 %v3748, 20
        %v3786 = vpop.permute.xlu0 %3785
        %3787 = vrot.lane.b32.xlu0 %v3750, 20
        %v3788 = vpop.permute.xlu0 %3787
        %3789 = vrot.lane.b32.xlu0 %v3752, 20
        %v3790 = vpop.permute.xlu0 %3789
        %3791 = vrot.lane.b32.xlu0 %v3754, 20
        %v3792 = vpop.permute.xlu0 %3791
        %3793 = vrot.lane.b32.xlu0 %v3753, 20
        %v3794 = vpop.permute.xlu0 %3793
        %v3799 = vunpack.c.l.b16 %v3127
        %v3800 = vunpack.c.l.b16 %v3128
        %v3801 = vunpack.c.l.b16 %v3129
        %v3802 = vunpack.c.l.b16 %v3130
        %v3803 = vpack.c.b16 %v3177, %v3799
        %v3804 = vpack.c.b16 %v3801, %v3800
        %v3805 = vpack.c.b16 %v3802, %v3802
        %v3806 = vrot.slane %v3803, 2
        %v3807 = vsel %vm3715, %v3806, %v3719
        %v3808 = vrot.slane %v3804, 2
        %v3809 = vsel %vm3715, %v3751, %v3808
        %v3810 = vrot.slane %v3805, 2
        %v3811 = vsel %vm3715, %v3808, %v3810
        %3812 = vrot.lane.b32.xlu0 %v3807, 24
        %v3813 = vpop.permute.xlu0 %3812
        %3814 = vrot.lane.b32.xlu0 %v3722, 24
        %v3815 = vpop.permute.xlu0 %3814
        %3816 = vrot.lane.b32.xlu0 %v3724, 24
        %v3817 = vpop.permute.xlu0 %3816
        %3818 = vrot.lane.b32.xlu0 %v3726, 24
        %v3819 = vpop.permute.xlu0 %3818
        %3820 = vrot.lane.b32.xlu0 %v3728, 24
        %v3821 = vpop.permute.xlu0 %3820
        %3822 = vrot.lane.b32.xlu0 %v3730, 24
        %v3823 = vpop.permute.xlu0 %3822
        %3824 = vrot.lane.b32.xlu0 %v3732, 24
        %v3825 = vpop.permute.xlu0 %3824
        %3826 = vrot.lane.b32.xlu0 %v3734, 24
        %v3827 = vpop.permute.xlu0 %3826
        %3828 = vrot.lane.b32.xlu0 %v3736, 24
        %v3829 = vpop.permute.xlu0 %3828
        %3830 = vrot.lane.b32.xlu0 %v3738, 24
        %v3831 = vpop.permute.xlu0 %3830
        %3832 = vrot.lane.b32.xlu0 %v3740, 24
        %v3833 = vpop.permute.xlu0 %3832
        %3834 = vrot.lane.b32.xlu0 %v3742, 24
        %v3835 = vpop.permute.xlu0 %3834
        %3836 = vrot.lane.b32.xlu0 %v3744, 24
        %v3837 = vpop.permute.xlu0 %3836
        %3838 = vrot.lane.b32.xlu0 %v3746, 24
        %v3839 = vpop.permute.xlu0 %3838
        %3840 = vrot.lane.b32.xlu0 %v3748, 24
        %v3841 = vpop.permute.xlu0 %3840
        %3842 = vrot.lane.b32.xlu0 %v3750, 24
        %v3843 = vpop.permute.xlu0 %3842
        %3844 = vrot.lane.b32.xlu0 %v3752, 24
        %v3845 = vpop.permute.xlu0 %3844
        %3846 = vrot.lane.b32.xlu0 %v3809, 24
        %v3847 = vpop.permute.xlu0 %3846
        %3848 = vrot.lane.b32.xlu0 %v3811, 24
        %v3849 = vpop.permute.xlu0 %3848
        %3850 = vrot.lane.b32.xlu0 %v3810, 24
        %v3851 = vpop.permute.xlu0 %3850
        %v3853 = vunpack.c.l.b16 %v3131
        %v3854 = vpack.c.b16 %v3853, %v3853
        %vm3855 = vsmask.f32 5376
        %v3857 = vshrl.u32 %v3803, 16
        %v3859 = vrot.slane %v3857, 2
        %v3860 = vshll.u32 %v3803, 16
        %v3862 = vrot.slane %v3860, 3
        %v3863 = vor.u32 %v3859, %v3862
        %v3864 = vrot.slane %v3263, 2
        %v3865 = vrot.slane %v3259, 3
        %v3866 = vor.u32 %v3864, %v3865
        %v3867 = vsel %vm3855, %v3863, %v3866
        %v3868 = vrot.slane %v3271, 2
        %v3869 = vrot.slane %v3267, 3
        %v3870 = vor.u32 %v3868, %v3869
        %v3871 = vsel %vm3855, %v3866, %v3870
        %v3872 = vrot.slane %v3279, 2
        %v3873 = vrot.slane %v3275, 3
        %v3874 = vor.u32 %v3872, %v3873
        %v3875 = vsel %vm3855, %v3870, %v3874
        %v3876 = vrot.slane %v3287, 2
        %v3877 = vrot.slane %v3283, 3
        %v3878 = vor.u32 %v3876, %v3877
        %v3879 = vsel %vm3855, %v3874, %v3878
        %v3880 = vrot.slane %v3295, 2
        %v3881 = vrot.slane %v3291, 3
        %v3882 = vor.u32 %v3880, %v3881
        %v3883 = vsel %vm3855, %v3878, %v3882
        %v3884 = vrot.slane %v3303, 2
        %v3885 = vrot.slane %v3299, 3
        %v3886 = vor.u32 %v3884, %v3885
        %v3887 = vsel %vm3855, %v3882, %v3886
        %v3888 = vrot.slane %v3311, 2
        %v3889 = vrot.slane %v3307, 3
        %v3890 = vor.u32 %v3888, %v3889
        %v3891 = vsel %vm3855, %v3886, %v3890
        %v3892 = vrot.slane %v3319, 2
        %v3893 = vrot.slane %v3315, 3
        %v3894 = vor.u32 %v3892, %v3893
        %v3895 = vsel %vm3855, %v3890, %v3894
        %v3896 = vrot.slane %v3327, 2
        %v3897 = vrot.slane %v3323, 3
        %v3898 = vor.u32 %v3896, %v3897
        %v3899 = vsel %vm3855, %v3894, %v3898
        %v3900 = vrot.slane %v3335, 2
        %v3901 = vrot.slane %v3331, 3
        %v3902 = vor.u32 %v3900, %v3901
        %v3903 = vsel %vm3855, %v3898, %v3902
        %v3904 = vrot.slane %v3343, 2
        %v3905 = vrot.slane %v3339, 3
        %v3906 = vor.u32 %v3904, %v3905
        %v3907 = vsel %vm3855, %v3902, %v3906
        %v3908 = vrot.slane %v3351, 2
        %v3909 = vrot.slane %v3347, 3
        %v3910 = vor.u32 %v3908, %v3909
        %v3911 = vsel %vm3855, %v3906, %v3910
        %v3912 = vrot.slane %v3359, 2
        %v3913 = vrot.slane %v3355, 3
        %v3914 = vor.u32 %v3912, %v3913
        %v3915 = vsel %vm3855, %v3910, %v3914
        %v3916 = vrot.slane %v3367, 2
        %v3917 = vrot.slane %v3363, 3
        %v3918 = vor.u32 %v3916, %v3917
        %v3919 = vsel %vm3855, %v3914, %v3918
        %v3920 = vrot.slane %v3375, 2
        %v3921 = vrot.slane %v3371, 3
        %v3922 = vor.u32 %v3920, %v3921
        %v3923 = vsel %vm3855, %v3918, %v3922
        %v3924 = vrot.slane %v3383, 2
        %v3925 = vrot.slane %v3379, 3
        %v3926 = vor.u32 %v3924, %v3925
        %v3927 = vsel %vm3855, %v3922, %v3926
        %v3928 = vrot.slane %v3655, 2
        %v3929 = vrot.slane %v3658, 3
        %v3930 = vor.u32 %v3928, %v3929
        %v3931 = vsel %vm3855, %v3926, %v3930
        %v3933 = vshrl.u32 %v3804, 16
        %v3935 = vrot.slane %v3933, 2
        %v3936 = vshll.u32 %v3804, 16
        %v3938 = vrot.slane %v3936, 3
        %v3939 = vor.u32 %v3935, %v3938
        %v3940 = vsel %vm3855, %v3930, %v3939
        %v3942 = vshrl.u32 %v3854, 16
        %v3944 = vrot.slane %v3942, 2
        %v3945 = vshll.u32 %v3854, 16
        %v3947 = vrot.slane %v3945, 3
        %v3948 = vor.u32 %v3944, %v3947
        %v3949 = vsel %vm3855, %v3939, %v3948
        %3950 = vrot.lane.b32.xlu0 %v3867, 28
        %v3951 = vpop.permute.xlu0 %3950
        %3952 = vrot.lane.b32.xlu0 %v3871, 28
        %v3953 = vpop.permute.xlu0 %3952
        %3954 = vrot.lane.b32.xlu0 %v3875, 28
        %v3955 = vpop.permute.xlu0 %3954
        %3956 = vrot.lane.b32.xlu0 %v3879, 28
        %v3957 = vpop.permute.xlu0 %3956
        %3958 = vrot.lane.b32.xlu0 %v3883, 28
        %v3959 = vpop.permute.xlu0 %3958
        %3960 = vrot.lane.b32.xlu0 %v3887, 28
        %v3961 = vpop.permute.xlu0 %3960
        %3962 = vrot.lane.b32.xlu0 %v3891, 28
        %v3963 = vpop.permute.xlu0 %3962
        %3964 = vrot.lane.b32.xlu0 %v3895, 28
        %v3965 = vpop.permute.xlu0 %3964
        %3966 = vrot.lane.b32.xlu0 %v3899, 28
        %v3967 = vpop.permute.xlu0 %3966
        %3968 = vrot.lane.b32.xlu0 %v3903, 28
        %v3969 = vpop.permute.xlu0 %3968
        %3970 = vrot.lane.b32.xlu0 %v3907, 28
        %v3971 = vpop.permute.xlu0 %3970
        %3972 = vrot.lane.b32.xlu0 %v3911, 28
        %v3973 = vpop.permute.xlu0 %3972
        %3974 = vrot.lane.b32.xlu0 %v3915, 28
        %v3975 = vpop.permute.xlu0 %3974
        %3976 = vrot.lane.b32.xlu0 %v3919, 28
        %v3977 = vpop.permute.xlu0 %3976
        %3978 = vrot.lane.b32.xlu0 %v3923, 28
        %v3979 = vpop.permute.xlu0 %3978
        %3980 = vrot.lane.b32.xlu0 %v3927, 28
        %v3981 = vpop.permute.xlu0 %3980
        %3982 = vrot.lane.b32.xlu0 %v3931, 28
        %v3983 = vpop.permute.xlu0 %3982
        %3984 = vrot.lane.b32.xlu0 %v3940, 28
        %v3985 = vpop.permute.xlu0 %3984
        %3986 = vrot.lane.b32.xlu0 %v3949, 28
        %v3987 = vpop.permute.xlu0 %3986
        %3988 = vrot.lane.b32.xlu0 %v3948, 28
        %v3989 = vpop.permute.xlu0 %3988
        %v3991 = vunpack.c.l.b16 %v3132
        %v3992 = vpack.c.b16 %v3177, %v3991
        %vm3993 = vcmask 1044480
        %v3994 = vrot.slane %v3992, 3
        %v3995 = vrot.slane %v3214, 3
        %v3996 = vsel %vm3993, %v3994, %v3995
        %v3997 = vrot.slane %v3215, 3
        %v3998 = vsel %vm3993, %v3995, %v3997
        %v3999 = vrot.slane %v3216, 3
        %v4000 = vsel %vm3993, %v3997, %v3999
        %v4001 = vrot.slane %v3217, 3
        %v4002 = vsel %vm3993, %v3999, %v4001
        %v4003 = vrot.slane %v3218, 3
        %v4004 = vsel %vm3993, %v4001, %v4003
        %v4005 = vrot.slane %v3219, 3
        %v4006 = vsel %vm3993, %v4003, %v4005
        %v4007 = vrot.slane %v3220, 3
        %v4008 = vsel %vm3993, %v4005, %v4007
        %v4009 = vrot.slane %v3221, 3
        %v4010 = vsel %vm3993, %v4007, %v4009
        %v4011 = vrot.slane %v3222, 3
        %v4012 = vsel %vm3993, %v4009, %v4011
        %v4013 = vrot.slane %v3223, 3
        %v4014 = vsel %vm3993, %v4011, %v4013
        %v4015 = vrot.slane %v3224, 3
        %v4016 = vsel %vm3993, %v4013, %v4015
        %v4017 = vrot.slane %v3225, 3
        %v4018 = vsel %vm3993, %v4015, %v4017
        %v4019 = vrot.slane %v3226, 3
        %v4020 = vsel %vm3993, %v4017, %v4019
        %v4021 = vrot.slane %v3227, 3
        %v4022 = vsel %vm3993, %v4019, %v4021
        %v4023 = vrot.slane %v3228, 3
        %v4024 = vsel %vm3993, %v4021, %v4023
        %v4025 = vrot.slane %v3229, 3
        %v4026 = vsel %vm3993, %v4023, %v4025
        %v4027 = vrot.slane %v3526, 3
        %v4028 = vsel %vm3993, %v4025, %v4027
        %v4029 = vrot.slane %v3804, 3
        %v4030 = vsel %vm3993, %v4027, %v4029
        %v4031 = vrot.slane %v3854, 3
        %v4032 = vsel %vm3993, %v4029, %v4031
        %4033 = vrot.lane.b32.xlu0 %v3996, 32
        %v4034 = vpop.permute.xlu0 %4033
        %4035 = vrot.lane.b32.xlu0 %v3998, 32
        %v4036 = vpop.permute.xlu0 %4035
        %4037 = vrot.lane.b32.xlu0 %v4000, 32
        %v4038 = vpop.permute.xlu0 %4037
        %4039 = vrot.lane.b32.xlu0 %v4002, 32
        %v4040 = vpop.permute.xlu0 %4039
        %4041 = vrot.lane.b32.xlu0 %v4004, 32
        %v4042 = vpop.permute.xlu0 %4041
        %4043 = vrot.lane.b32.xlu0 %v4006, 32
        %v4044 = vpop.permute.xlu0 %4043
        %4045 = vrot.lane.b32.xlu0 %v4008, 32
        %v4046 = vpop.permute.xlu0 %4045
        %4047 = vrot.lane.b32.xlu0 %v4010, 32
        %v4048 = vpop.permute.xlu0 %4047
        %4049 = vrot.lane.b32.xlu0 %v4012, 32
        %v4050 = vpop.permute.xlu0 %4049
        %4051 = vrot.lane.b32.xlu0 %v4014, 32
        %v4052 = vpop.permute.xlu0 %4051
        %4053 = vrot.lane.b32.xlu0 %v4016, 32
        %v4054 = vpop.permute.xlu0 %4053
        %4055 = vrot.lane.b32.xlu0 %v4018, 32
        %v4056 = vpop.permute.xlu0 %4055
        %4057 = vrot.lane.b32.xlu0 %v4020, 32
        %v4058 = vpop.permute.xlu0 %4057
        %4059 = vrot.lane.b32.xlu0 %v4022, 32
        %v4060 = vpop.permute.xlu0 %4059
        %4061 = vrot.lane.b32.xlu0 %v4024, 32
        %v4062 = vpop.permute.xlu0 %4061
        %4063 = vrot.lane.b32.xlu0 %v4026, 32
        %v4064 = vpop.permute.xlu0 %4063
        %4065 = vrot.lane.b32.xlu0 %v4028, 32
        %v4066 = vpop.permute.xlu0 %4065
        %4067 = vrot.lane.b32.xlu0 %v4030, 32
        %v4068 = vpop.permute.xlu0 %4067
        %4069 = vrot.lane.b32.xlu0 %v4032, 32
        %v4070 = vpop.permute.xlu0 %4069
        %4071 = vrot.lane.b32.xlu0 %v4031, 32
        %v4072 = vpop.permute.xlu0 %4071
        %vm4073 = vcmask 31744
        %v4075 = vsel %vm4073, %v3211, %v3395
        %v4077 = vsel %vm4073, %v3212, %v3397
        %v4079 = vsel %vm4073, %v3213, %v3399
        %v4081 = vsel %vm4073, %v3214, %v3401
        %v4083 = vsel %vm4073, %v3215, %v3403
        %v4085 = vsel %vm4073, %v3216, %v3405
        %v4087 = vsel %vm4073, %v3217, %v3407
        %v4089 = vsel %vm4073, %v3218, %v3409
        %v4091 = vsel %vm4073, %v3219, %v3411
        %v4093 = vsel %vm4073, %v3220, %v3413
        %v4095 = vsel %vm4073, %v3221, %v3415
        %v4097 = vsel %vm4073, %v3222, %v3417
        %v4099 = vsel %vm4073, %v3223, %v3419
        %v4101 = vsel %vm4073, %v3224, %v3421
        %v4103 = vsel %vm4073, %v3225, %v3423
        %v4105 = vsel %vm4073, %v3226, %v3425
        %v4107 = vsel %vm4073, %v3227, %v3427
        %v4109 = vsel %vm4073, %v3228, %v3429
        %v4111 = vsel %vm4073, %v3229, %v3431
        %v4114 = vsel %vm4073, %v3230, %v3433
        %vm4115 = vcmask 64512
        %v4117 = vsel %vm4115, %v4075, %v3478
        %v4119 = vsel %vm4115, %v4077, %v3480
        %v4121 = vsel %vm4115, %v4079, %v3482
        %v4123 = vsel %vm4115, %v4081, %v3484
        %v4125 = vsel %vm4115, %v4083, %v3486
        %v4127 = vsel %vm4115, %v4085, %v3488
        %v4129 = vsel %vm4115, %v4087, %v3490
        %v4131 = vsel %vm4115, %v4089, %v3492
        %v4133 = vsel %vm4115, %v4091, %v3494
        %v4135 = vsel %vm4115, %v4093, %v3496
        %v4137 = vsel %vm4115, %v4095, %v3498
        %v4139 = vsel %vm4115, %v4097, %v3500
        %v4141 = vsel %vm4115, %v4099, %v3502
        %v4143 = vsel %vm4115, %v4101, %v3504
        %v4145 = vsel %vm4115, %v4103, %v3506
        %v4147 = vsel %vm4115, %v4105, %v3508
        %v4149 = vsel %vm4115, %v4107, %v3510
        %v4151 = vsel %vm4115, %v4109, %v3512
        %v4153 = vsel %vm4115, %v4111, %v3514
        %v4155 = vsel %vm4115, %v4114, %v3516
        %vm4156 = vcmask 97280
        %v4158 = vsel %vm4156, %v4117, %v3535
        %v4160 = vsel %vm4156, %v4119, %v3537
        %v4162 = vsel %vm4156, %v4121, %v3539
        %v4164 = vsel %vm4156, %v4123, %v3541
        %v4166 = vsel %vm4156, %v4125, %v3543
        %v4168 = vsel %vm4156, %v4127, %v3545
        %v4170 = vsel %vm4156, %v4129, %v3547
        %v4172 = vsel %vm4156, %v4131, %v3549
        %v4174 = vsel %vm4156, %v4133, %v3551
        %v4176 = vsel %vm4156, %v4135, %v3553
        %v4178 = vsel %vm4156, %v4137, %v3555
        %v4180 = vsel %vm4156, %v4139, %v3557
        %v4182 = vsel %vm4156, %v4141, %v3559
        %v4184 = vsel %vm4156, %v4143, %v3561
        %v4186 = vsel %vm4156, %v4145, %v3563
        %v4188 = vsel %vm4156, %v4147, %v3565
        %v4190 = vsel %vm4156, %v4149, %v3567
        %v4192 = vsel %vm4156, %v4151, %v3569
        %v4194 = vsel %vm4156, %v4153, %v3571
        %v4196 = vsel %vm4156, %v4155, %v3573
        %v4198 = vsel %vm490, %v4158, %v3673
        %v4200 = vsel %vm490, %v4160, %v3675
        %v4202 = vsel %vm490, %v4162, %v3677
        %v4204 = vsel %vm490, %v4164, %v3679
        %v4206 = vsel %vm490, %v4166, %v3681
        %v4208 = vsel %vm490, %v4168, %v3683
        %v4210 = vsel %vm490, %v4170, %v3685
        %v4212 = vsel %vm490, %v4172, %v3687
        %v4214 = vsel %vm490, %v4174, %v3689
        %v4216 = vsel %vm490, %v4176, %v3691
        %v4218 = vsel %vm490, %v4178, %v3693
        %v4220 = vsel %vm490, %v4180, %v3695
        %v4222 = vsel %vm490, %v4182, %v3697
        %v4224 = vsel %vm490, %v4184, %v3699
        %v4226 = vsel %vm490, %v4186, %v3701
        %v4228 = vsel %vm490, %v4188, %v3703
        %v4230 = vsel %vm490, %v4190, %v3705
        %v4232 = vsel %vm490, %v4192, %v3707
        %v4234 = vsel %vm490, %v4194, %v3709
        %v4236 = vsel %vm490, %v4196, %v3711
        %vm4237 = vcmask 162816
        %v4239 = vsel %vm4237, %v4198, %v3756
        %v4241 = vsel %vm4237, %v4200, %v3758
        %v4243 = vsel %vm4237, %v4202, %v3760
        %v4245 = vsel %vm4237, %v4204, %v3762
        %v4247 = vsel %vm4237, %v4206, %v3764
        %v4249 = vsel %vm4237, %v4208, %v3766
        %v4251 = vsel %vm4237, %v4210, %v3768
        %v4253 = vsel %vm4237, %v4212, %v3770
        %v4255 = vsel %vm4237, %v4214, %v3772
        %v4257 = vsel %vm4237, %v4216, %v3774
        %v4259 = vsel %vm4237, %v4218, %v3776
        %v4261 = vsel %vm4237, %v4220, %v3778
        %v4263 = vsel %vm4237, %v4222, %v3780
        %v4265 = vsel %vm4237, %v4224, %v3782
        %v4267 = vsel %vm4237, %v4226, %v3784
        %v4269 = vsel %vm4237, %v4228, %v3786
        %v4271 = vsel %vm4237, %v4230, %v3788
        %v4273 = vsel %vm4237, %v4232, %v3790
        %v4275 = vsel %vm4237, %v4234, %v3792
        %v4277 = vsel %vm4237, %v4236, %v3794
        %vm4278 = vcmask 195584
        %v4280 = vsel %vm4278, %v4239, %v3813
        %v4282 = vsel %vm4278, %v4241, %v3815
        %v4284 = vsel %vm4278, %v4243, %v3817
        %v4286 = vsel %vm4278, %v4245, %v3819
        %v4288 = vsel %vm4278, %v4247, %v3821
        %v4290 = vsel %vm4278, %v4249, %v3823
        %v4292 = vsel %vm4278, %v4251, %v3825
        %v4294 = vsel %vm4278, %v4253, %v3827
        %v4296 = vsel %vm4278, %v4255, %v3829
        %v4298 = vsel %vm4278, %v4257, %v3831
        %v4300 = vsel %vm4278, %v4259, %v3833
        %v4302 = vsel %vm4278, %v4261, %v3835
        %v4304 = vsel %vm4278, %v4263, %v3837
        %v4306 = vsel %vm4278, %v4265, %v3839
        %v4308 = vsel %vm4278, %v4267, %v3841
        %v4310 = vsel %vm4278, %v4269, %v3843
        %v4312 = vsel %vm4278, %v4271, %v3845
        %v4314 = vsel %vm4278, %v4273, %v3847
        %v4316 = vsel %vm4278, %v4275, %v3849
        %v4318 = vsel %vm4278, %v4277, %v3851
        %vm4319 = vcmask 228352
        %v4321 = vsel %vm4319, %v4280, %v3951
        %v4323 = vsel %vm4319, %v4282, %v3953
        %v4325 = vsel %vm4319, %v4284, %v3955
        %v4327 = vsel %vm4319, %v4286, %v3957
        %v4329 = vsel %vm4319, %v4288, %v3959
        %v4331 = vsel %vm4319, %v4290, %v3961
        %v4333 = vsel %vm4319, %v4292, %v3963
        %v4335 = vsel %vm4319, %v4294, %v3965
        %v4337 = vsel %vm4319, %v4296, %v3967
        %v4339 = vsel %vm4319, %v4298, %v3969
        %v4341 = vsel %vm4319, %v4300, %v3971
        %v4343 = vsel %vm4319, %v4302, %v3973
        %v4345 = vsel %vm4319, %v4304, %v3975
        %v4347 = vsel %vm4319, %v4306, %v3977
        %v4349 = vsel %vm4319, %v4308, %v3979
        %v4351 = vsel %vm4319, %v4310, %v3981
        %v4353 = vsel %vm4319, %v4312, %v3983
        %v4355 = vsel %vm4319, %v4314, %v3985
        %v4357 = vsel %vm4319, %v4316, %v3987
        %v4359 = vsel %vm4319, %v4318, %v3989
        %vm4360 = vcmask 261120
        %v4362 = vsel %vm4360, %v4321, %v4034
        %v4364 = vsel %vm4360, %v4323, %v4036
        %v4366 = vsel %vm4360, %v4325, %v4038
        %v4368 = vsel %vm4360, %v4327, %v4040
        %v4370 = vsel %vm4360, %v4329, %v4042
        %v4372 = vsel %vm4360, %v4331, %v4044
        %v4374 = vsel %vm4360, %v4333, %v4046
        %v4376 = vsel %vm4360, %v4335, %v4048
        %v4378 = vsel %vm4360, %v4337, %v4050
        %v4380 = vsel %vm4360, %v4339, %v4052
        %v4382 = vsel %vm4360, %v4341, %v4054
        %v4384 = vsel %vm4360, %v4343, %v4056
        %v4386 = vsel %vm4360, %v4345, %v4058
        %v4388 = vsel %vm4360, %v4347, %v4060
        %v4390 = vsel %vm4360, %v4349, %v4062
        %v4392 = vsel %vm4360, %v4351, %v4064
        %v4394 = vsel %vm4360, %v4353, %v4066
        %v4396 = vsel %vm4360, %v4355, %v4068
        %v4398 = vsel %vm4360, %v4357, %v4070
        %v4400 = vsel %vm4360, %v4359, %v4072
        %v4401 = vld [vmem:[%s4] sm:$0xf]
        %v4402 = vld [vmem:[%s4 + $0x4] sm:$0xf]
        %v4403 = vld [vmem:[%s4 + $0x8] sm:$0xf]
        %v4404 = vld [vmem:[%s4 + $0xc] sm:$0xf]
        %v4405 = vld [vmem:[%s4 + $0x10] sm:$0x3]
        %v4411 = vunpack.c.l.b16 %v4401
        %v4412 = vunpack.c.l.b16 %v4402
        %v4413 = vunpack.c.l.b16 %v4403
        %v4414 = vunpack.c.l.b16 %v4404
        %v4415 = vunpack.c.l.b16 %v4405
        %v4416 = vpack.c.b16 %v4412, %v4411
        %v4417 = vpack.c.b16 %v4414, %v4413
        %v4418 = vpack.c.b16 %v4415, %v4415
        %vm4421 = vcmask 293888
        %v4422 = vsel %vm4421, %v4362, 0
        %v4424 = vsel %vm4421, %v4364, 0
        %v4426 = vsel %vm4421, %v4366, 0
        %v4428 = vsel %vm4421, %v4368, 0
        %v4430 = vsel %vm4421, %v4370, 0
        %v4432 = vsel %vm4421, %v4372, 0
        %v4434 = vsel %vm4421, %v4374, 0
        %v4436 = vsel %vm4421, %v4376, 0
        %v4438 = vsel %vm4421, %v4378, 0
        %v4440 = vsel %vm4421, %v4380, 0
        %v4442 = vsel %vm4421, %v4382, 0
        %v4444 = vsel %vm4421, %v4384, 0
        %v4446 = vsel %vm4421, %v4386, 0
        %v4448 = vsel %vm4421, %v4388, 0
        %v4450 = vsel %vm4421, %v4390, 0
        %v4452 = vsel %vm4421, %v4392, 0
        %v4454 = vsel %vm4421, %v4394, 0
        %v4456 = vsel %vm4421, %v4396, 0
        %v4458 = vsel %vm4421, %v4398, 0
        %v4460 = vsel %vm4421, %v4400, 0
        %vm4462 = vcmask 1041408
        %v4464 = vsel %vm4462, %v4418, 0
        %4466 = vmatprep.subr.bf16.mxu0 0
        %4467 = vmatpush1.bf16.msra.mxu0 %v4416
        %4468 = vmatprep.subr.bf16.mxu0 0
        %4469 = vmatpush1.bf16.msra.mxu0 %v4417
        %4470 = vmatprep.subr.bf16.mxu0 0
        %4471 = vmatpush1.bf16.msra.mxu0 %v4464
        %4472 = vmatprep.subr.bf16.mxu0 0
        %4473 = vmatpush1.bf16.msra.mxu0 0
        %4474 = vmatprep.subr.bf16.mxu0 0
        %4475 = vmatpush1.bf16.msra.mxu0 0
        %4476 = vmatprep.subr.bf16.mxu0 0
        %4477 = vmatpush1.bf16.msra.mxu0 0
        %4478 = vmatprep.subr.bf16.mxu0 0
        %4479 = vmatpush1.bf16.msra.mxu0 0
        %4480 = vmatprep.subr.bf16.mxu0 0
        %4481 = vmatpush1.bf16.msra.mxu0 0
        %4482 = vmatprep.subr.bf16.mxu0 0
        %4483 = vmatpush1.bf16.msra.mxu0 0
        %4484 = vmatprep.subr.bf16.mxu0 0
        %4485 = vmatpush1.bf16.msra.mxu0 0
        %4486 = vmatprep.subr.bf16.mxu0 0
        %4487 = vmatpush1.bf16.msra.mxu0 0
        %4488 = vmatprep.subr.bf16.mxu0 0
        %4489 = vmatpush1.bf16.msra.mxu0 0
        %4490 = vmatprep.subr.bf16.mxu0 0
        %4491 = vmatpush1.bf16.msra.mxu0 0
        %4492 = vmatprep.subr.bf16.mxu0 0
        %4493 = vmatpush1.bf16.msra.mxu0 0
        %4494 = vmatprep.subr.bf16.mxu0 0
        %4495 = vmatpush1.bf16.msra.mxu0 0
        %4496 = vmatprep.subr.bf16.mxu0 0
        %4497 = vmatpush1.bf16.msra.mxu0 0
        %4498 = vmatprep.mubr.bf16.mxu0 0
        %4499 = vmatmul.mubr.bf16.gmra.mrb[0].mxu0 %v4422
        %v4500 = vpop.f32.mrb[0].mxu0
        %v4501 = vadd.f32 0.0, %v4500
        %v4502 = vpop.f32.mrb[0].mxu0
        %v4503 = vpop.f32.mrb[0].mxu0
        %v4504 = vadd.f32 0.0, %v4503
        %v4505 = vpop.f32.mrb[0].mxu0
        %4506 = vmatprep.mubr.bf16.mxu0 0
        %4507 = vmatmul.mubr.bf16.gmra.mrb[0].mxu0 %v4424
        %v4508 = vpop.f32.mrb[0].mxu0
        %v4509 = vadd.f32 0.0, %v4508
        %v4510 = vpop.f32.mrb[0].mxu0
        %v4511 = vpop.f32.mrb[0].mxu0
        %v4512 = vadd.f32 0.0, %v4511
        %v4513 = vpop.f32.mrb[0].mxu0
        %4514 = vmatprep.mubr.bf16.mxu0 0
        %4515 = vmatmul.mubr.bf16.gmra.mrb[0].mxu0 %v4426
        %v4516 = vpop.f32.mrb[0].mxu0
        %v4517 = vadd.f32 0.0, %v4516
        %v4518 = vpop.f32.mrb[0].mxu0
        %v4519 = vpop.f32.mrb[0].mxu0
        %v4520 = vadd.f32 0.0, %v4519
        %v4521 = vpop.f32.mrb[0].mxu0
        %4522 = vmatprep.mubr.bf16.mxu0 0
        %4523 = vmatmul.mubr.bf16.gmra.mrb[0].mxu0 %v4428
        %v4524 = vpop.f32.mrb[0].mxu0
        %v4525 = vadd.f32 0.0, %v4524
        %v4526 = vpop.f32.mrb[0].mxu0
        %v4527 = vpop.f32.mrb[0].mxu0
        %v4528 = vadd.f32 0.0, %v4527
        %v4529 = vpop.f32.mrb[0].mxu0
        %4530 = vmatprep.mubr.bf16.mxu0 0
        %4531 = vmatmul.mubr.bf16.gmra.mrb[0].mxu0 %v4430
        %v4532 = vpop.f32.mrb[0].mxu0
        %v4533 = vadd.f32 0.0, %v4532
        %v4534 = vpop.f32.mrb[0].mxu0
        %v4535 = vpop.f32.mrb[0].mxu0
        %v4536 = vadd.f32 0.0, %v4535
        %v4537 = vpop.f32.mrb[0].mxu0
        %4538 = vmatprep.mubr.bf16.mxu0 0
        %4539 = vmatmul.mubr.bf16.gmra.mrb[0].mxu0 %v4432
        %v4540 = vpop.f32.mrb[0].mxu0
        %v4541 = vadd.f32 0.0, %v4540
        %v4542 = vpop.f32.mrb[0].mxu0
        %v4543 = vpop.f32.mrb[0].mxu0
        %v4544 = vadd.f32 0.0, %v4543
        %v4545 = vpop.f32.mrb[0].mxu0
        %4546 = vmatprep.mubr.bf16.mxu0 0
        %4547 = vmatmul.mubr.bf16.gmra.mrb[0].mxu0 %v4434
        %v4548 = vpop.f32.mrb[0].mxu0
        %v4549 = vadd.f32 0.0, %v4548
        %v4550 = vpop.f32.mrb[0].mxu0
        %v4551 = vpop.f32.mrb[0].mxu0
        %v4552 = vadd.f32 0.0, %v4551
        %v4553 = vpop.f32.mrb[0].mxu0
        %4554 = vmatprep.mubr.bf16.mxu0 0
        %4555 = vmatmul.mubr.bf16.gmra.mrb[0].mxu0 %v4436
        %v4556 = vpop.f32.mrb[0].mxu0
        %v4557 = vadd.f32 0.0, %v4556
        %v4558 = vpop.f32.mrb[0].mxu0
        %v4559 = vpop.f32.mrb[0].mxu0
        %v4560 = vadd.f32 0.0, %v4559
        %v4561 = vpop.f32.mrb[0].mxu0
        %4562 = vmatprep.mubr.bf16.mxu0 0
        %4563 = vmatmul.mubr.bf16.gmra.mrb[0].mxu0 %v4438
        %v4564 = vpop.f32.mrb[0].mxu0
        %v4565 = vadd.f32 0.0, %v4564
        %v4566 = vpop.f32.mrb[0].mxu0
        %v4567 = vpop.f32.mrb[0].mxu0
        %v4568 = vadd.f32 0.0, %v4567
        %v4569 = vpop.f32.mrb[0].mxu0
        %4570 = vmatprep.mubr.bf16.mxu0 0
        %4571 = vmatmul.mubr.bf16.gmra.mrb[0].mxu0 %v4440
        %v4572 = vpop.f32.mrb[0].mxu0
        %v4573 = vadd.f32 0.0, %v4572
        %v4574 = vpop.f32.mrb[0].mxu0
        %v4575 = vpop.f32.mrb[0].mxu0
        %v4576 = vadd.f32 0.0, %v4575
        %v4577 = vpop.f32.mrb[0].mxu0
        %4578 = vmatprep.mubr.bf16.mxu0 0
        %4579 = vmatmul.mubr.bf16.gmra.mrb[0].mxu0 %v4442
        %v4580 = vpop.f32.mrb[0].mxu0
        %v4581 = vadd.f32 0.0, %v4580
        %v4582 = vpop.f32.mrb[0].mxu0
        %v4583 = vpop.f32.mrb[0].mxu0
        %v4584 = vadd.f32 0.0, %v4583
        %v4585 = vpop.f32.mrb[0].mxu0
        %4586 = vmatprep.mubr.bf16.mxu0 0
        %4587 = vmatmul.mubr.bf16.gmra.mrb[0].mxu0 %v4444
        %v4588 = vpop.f32.mrb[0].mxu0
        %v4589 = vadd.f32 0.0, %v4588
        %v4590 = vpop.f32.mrb[0].mxu0
        %v4591 = vpop.f32.mrb[0].mxu0
        %v4592 = vadd.f32 0.0, %v4591
        %v4593 = vpop.f32.mrb[0].mxu0
        %4594 = vmatprep.mubr.bf16.mxu0 0
        %4595 = vmatmul.mubr.bf16.gmra.mrb[0].mxu0 %v4446
        %v4596 = vpop.f32.mrb[0].mxu0
        %v4597 = vadd.f32 0.0, %v4596
        %v4598 = vpop.f32.mrb[0].mxu0
        %v4599 = vpop.f32.mrb[0].mxu0
        %v4600 = vadd.f32 0.0, %v4599
        %v4601 = vpop.f32.mrb[0].mxu0
        %4602 = vmatprep.mubr.bf16.mxu0 0
        %4603 = vmatmul.mubr.bf16.gmra.mrb[0].mxu0 %v4448
        %v4604 = vpop.f32.mrb[0].mxu0
        %v4605 = vadd.f32 0.0, %v4604
        %v4606 = vpop.f32.mrb[0].mxu0
        %v4607 = vpop.f32.mrb[0].mxu0
        %v4608 = vadd.f32 0.0, %v4607
        %v4609 = vpop.f32.mrb[0].mxu0
        %4610 = vmatprep.mubr.bf16.mxu0 0
        %4611 = vmatmul.mubr.bf16.gmra.mrb[0].mxu0 %v4450
        %v4612 = vpop.f32.mrb[0].mxu0
        %v4613 = vadd.f32 0.0, %v4612
        %v4614 = vpop.f32.mrb[0].mxu0
        %v4615 = vpop.f32.mrb[0].mxu0
        %v4616 = vadd.f32 0.0, %v4615
        %v4617 = vpop.f32.mrb[0].mxu0
        %4618 = vmatprep.mubr.bf16.mxu0 0
        %4619 = vmatmul.mubr.bf16.gmra.mrb[0].mxu0 %v4452
        %v4620 = vpop.f32.mrb[0].mxu0
        %v4621 = vadd.f32 0.0, %v4620
        %v4622 = vpop.f32.mrb[0].mxu0
        %v4623 = vpop.f32.mrb[0].mxu0
        %v4624 = vadd.f32 0.0, %v4623
        %v4625 = vpop.f32.mrb[0].mxu0
        %4626 = vmatprep.mubr.bf16.mxu0 0
        %4627 = vmatmul.mubr.bf16.gmra.mrb[0].mxu0 %v4454
        %v4628 = vpop.f32.mrb[0].mxu0
        %v4629 = vadd.f32 0.0, %v4628
        %v4630 = vpop.f32.mrb[0].mxu0
        %v4631 = vpop.f32.mrb[0].mxu0
        %v4632 = vadd.f32 0.0, %v4631
        %v4633 = vpop.f32.mrb[0].mxu0
        %4634 = vmatprep.mubr.bf16.mxu0 0
        %4635 = vmatmul.mubr.bf16.gmra.mrb[0].mxu0 %v4456
        %v4636 = vpop.f32.mrb[0].mxu0
        %v4637 = vadd.f32 0.0, %v4636
        %v4638 = vpop.f32.mrb[0].mxu0
        %v4639 = vpop.f32.mrb[0].mxu0
        %v4640 = vadd.f32 0.0, %v4639
        %v4641 = vpop.f32.mrb[0].mxu0
        %4642 = vmatprep.mubr.bf16.mxu0 0
        %4643 = vmatmul.mubr.bf16.gmra.mrb[0].mxu0 %v4458
        %v4644 = vpop.f32.mrb[0].mxu0
        %v4645 = vadd.f32 0.0, %v4644
        %v4646 = vpop.f32.mrb[0].mxu0
        %v4647 = vpop.f32.mrb[0].mxu0
        %v4648 = vadd.f32 0.0, %v4647
        %v4649 = vpop.f32.mrb[0].mxu0
        %4650 = vmatprep.mubr.bf16.mxu0 0
        %4651 = vmatmul.mubr.bf16.gmra.mrb[0].mxu0 %v4460
        %v4652 = vpop.f32.mrb[0].mxu0
        %v4653 = vadd.f32 0.0, %v4652
        %v4654 = vpop.f32.mrb[0].mxu0
        %v4655 = vpop.f32.mrb[0].mxu0
        %v4656 = vpop.f32.mrb[0].mxu0
        %4657 = vdwg.mxu0
        %v4658 = vld [vmem:[%s5] sm:$0x1]
        %v4660 = vlaneseq
        %v4661 = vshrl.u32 %v4660, 7
        %v4662 = vsub.s32 0, %v4661
        %v4663 = vrot.slane %v4658, %v4662
        %v4665 = vmul.f32 %v4501, %v4663
        %v4666 = vmul.f32 %v4504, %v4663
        %v4667 = vmul.f32 %v4509, %v4663
        %v4668 = vmul.f32 %v4512, %v4663
        %v4669 = vmul.f32 %v4517, %v4663
        %v4670 = vmul.f32 %v4520, %v4663
        %v4671 = vmul.f32 %v4525, %v4663
        %v4672 = vmul.f32 %v4528, %v4663
        %v4673 = vmul.f32 %v4533, %v4663
        %v4674 = vmul.f32 %v4536, %v4663
        %v4675 = vmul.f32 %v4541, %v4663
        %v4676 = vmul.f32 %v4544, %v4663
        %v4677 = vmul.f32 %v4549, %v4663
        %v4678 = vmul.f32 %v4552, %v4663
        %v4679 = vmul.f32 %v4557, %v4663
        %v4680 = vmul.f32 %v4560, %v4663
        %v4681 = vmul.f32 %v4565, %v4663
        %v4682 = vmul.f32 %v4568, %v4663
        %v4683 = vmul.f32 %v4573, %v4663
        %v4684 = vmul.f32 %v4576, %v4663
        %v4685 = vmul.f32 %v4581, %v4663
        %v4686 = vmul.f32 %v4584, %v4663
        %v4687 = vmul.f32 %v4589, %v4663
        %v4688 = vmul.f32 %v4592, %v4663
        %v4689 = vmul.f32 %v4597, %v4663
        %v4690 = vmul.f32 %v4600, %v4663
        %v4691 = vmul.f32 %v4605, %v4663
        %v4692 = vmul.f32 %v4608, %v4663
        %v4693 = vmul.f32 %v4613, %v4663
        %v4694 = vmul.f32 %v4616, %v4663
        %v4695 = vmul.f32 %v4621, %v4663
        %v4696 = vmul.f32 %v4624, %v4663
        %v4697 = vmul.f32 %v4629, %v4663
        %v4698 = vmul.f32 %v4632, %v4663
        %v4699 = vmul.f32 %v4637, %v4663
        %v4700 = vmul.f32 %v4640, %v4663
        %v4701 = vmul.f32 %v4645, %v4663
        %v4702 = vmul.f32 %v4648, %v4663
        %v4703 = vmul.f32 %v4653, %v4663
        %v4704 = vld [vmem:[%s6] sm:$0x1]
        %v4706 = vlaneseq
        %v4707 = vshrl.u32 %v4706, 7
        %v4708 = vsub.s32 0, %v4707
        %v4709 = vrot.slane %v4704, %v4708
        %v4711 = vadd.f32 %v4665, %v4709
        %v4712 = vadd.f32 %v4666, %v4709
        %v4713 = vadd.f32 %v4667, %v4709
        %v4714 = vadd.f32 %v4668, %v4709
        %v4715 = vadd.f32 %v4669, %v4709
        %v4716 = vadd.f32 %v4670, %v4709
        %v4717 = vadd.f32 %v4671, %v4709
        %v4718 = vadd.f32 %v4672, %v4709
        %v4719 = vadd.f32 %v4673, %v4709
        %v4720 = vadd.f32 %v4674, %v4709
        %v4721 = vadd.f32 %v4675, %v4709
        %v4722 = vadd.f32 %v4676, %v4709
        %v4723 = vadd.f32 %v4677, %v4709
        %v4724 = vadd.f32 %v4678, %v4709
        %v4725 = vadd.f32 %v4679, %v4709
        %v4726 = vadd.f32 %v4680, %v4709
        %v4727 = vadd.f32 %v4681, %v4709
        %v4728 = vadd.f32 %v4682, %v4709
        %v4729 = vadd.f32 %v4683, %v4709
        %v4730 = vadd.f32 %v4684, %v4709
        %v4731 = vadd.f32 %v4685, %v4709
        %v4732 = vadd.f32 %v4686, %v4709
        %v4733 = vadd.f32 %v4687, %v4709
        %v4734 = vadd.f32 %v4688, %v4709
        %v4735 = vadd.f32 %v4689, %v4709
        %v4736 = vadd.f32 %v4690, %v4709
        %v4737 = vadd.f32 %v4691, %v4709
        %v4738 = vadd.f32 %v4692, %v4709
        %v4739 = vadd.f32 %v4693, %v4709
        %v4740 = vadd.f32 %v4694, %v4709
        %v4741 = vadd.f32 %v4695, %v4709
        %v4742 = vadd.f32 %v4696, %v4709
        %v4743 = vadd.f32 %v4697, %v4709
        %v4744 = vadd.f32 %v4698, %v4709
        %v4745 = vadd.f32 %v4699, %v4709
        %v4746 = vadd.f32 %v4700, %v4709
        %v4747 = vadd.f32 %v4701, %v4709
        %v4748 = vadd.f32 %v4702, %v4709
        %v4749 = vadd.f32 %v4703, %v4709
        %v4750 = vmax.f32 %v4711, 0.0
        %v4751 = vmax.f32 %v4712, 0.0
        %v4752 = vmax.f32 %v4713, 0.0
        %v4753 = vmax.f32 %v4714, 0.0
        %v4754 = vmax.f32 %v4715, 0.0
        %v4755 = vmax.f32 %v4716, 0.0
        %v4756 = vmax.f32 %v4717, 0.0
        %v4757 = vmax.f32 %v4718, 0.0
        %v4758 = vmax.f32 %v4719, 0.0
        %v4759 = vmax.f32 %v4720, 0.0
        %v4760 = vmax.f32 %v4721, 0.0
        %v4761 = vmax.f32 %v4722, 0.0
        %v4762 = vmax.f32 %v4723, 0.0
        %v4763 = vmax.f32 %v4724, 0.0
        %v4764 = vmax.f32 %v4725, 0.0
        %v4765 = vmax.f32 %v4726, 0.0
        %v4766 = vmax.f32 %v4727, 0.0
        %v4767 = vmax.f32 %v4728, 0.0
        %v4768 = vmax.f32 %v4729, 0.0
        %v4769 = vmax.f32 %v4730, 0.0
        %v4770 = vmax.f32 %v4731, 0.0
        %v4771 = vmax.f32 %v4732, 0.0
        %v4772 = vmax.f32 %v4733, 0.0
        %v4773 = vmax.f32 %v4734, 0.0
        %v4774 = vmax.f32 %v4735, 0.0
        %v4775 = vmax.f32 %v4736, 0.0
        %v4776 = vmax.f32 %v4737, 0.0
        %v4777 = vmax.f32 %v4738, 0.0
        %v4778 = vmax.f32 %v4739, 0.0
        %v4779 = vmax.f32 %v4740, 0.0
        %v4780 = vmax.f32 %v4741, 0.0
        %v4781 = vmax.f32 %v4742, 0.0
        %v4782 = vmax.f32 %v4743, 0.0
        %v4783 = vmax.f32 %v4744, 0.0
        %v4784 = vmax.f32 %v4745, 0.0
        %v4785 = vmax.f32 %v4746, 0.0
        %v4786 = vmax.f32 %v4747, 0.0
        %v4787 = vmax.f32 %v4748, 0.0
        %v4788 = vmax.f32 %v4749, 0.0
        %v4789 = vpack.c.bf16 %v4751, %v4750
        %v4790 = vpack.c.bf16 %v4753, %v4752
        %v4791 = vpack.c.bf16 %v4755, %v4754
        %v4792 = vpack.c.bf16 %v4757, %v4756
        %v4793 = vpack.c.bf16 %v4759, %v4758
        %v4794 = vpack.c.bf16 %v4761, %v4760
        %v4795 = vpack.c.bf16 %v4763, %v4762
        %v4796 = vpack.c.bf16 %v4765, %v4764
        %v4797 = vpack.c.bf16 %v4767, %v4766
        %v4798 = vpack.c.bf16 %v4769, %v4768
        %v4799 = vpack.c.bf16 %v4771, %v4770
        %v4800 = vpack.c.bf16 %v4773, %v4772
        %v4801 = vpack.c.bf16 %v4775, %v4774
        %v4802 = vpack.c.bf16 %v4777, %v4776
        %v4803 = vpack.c.bf16 %v4779, %v4778
        %v4804 = vpack.c.bf16 %v4781, %v4780
        %v4805 = vpack.c.bf16 %v4783, %v4782
        %v4806 = vpack.c.bf16 %v4785, %v4784
        %v4807 = vpack.c.bf16 %v4787, %v4786
        %v4808 = vpack.c.bf16 %v4788, %v4788
        %v4809 = vld [vmem:[%s7] sm:$0x3]
        %v4811 = vsel %vm4073, %v4789, 0
        %v4814 = vsel %vm4073, %v4790, 0
        %v4817 = vsel %vm4073, %v4791, 0
        %v4820 = vsel %vm4073, %v4792, 0
        %v4823 = vsel %vm4073, %v4793, 0
        %v4826 = vsel %vm4073, %v4794, 0
        %v4829 = vsel %vm4073, %v4795, 0
        %v4832 = vsel %vm4073, %v4796, 0
        %v4835 = vsel %vm4073, %v4797, 0
        %v4838 = vsel %vm4073, %v4798, 0
        %v4841 = vsel %vm4073, %v4799, 0
        %v4844 = vsel %vm4073, %v4800, 0
        %v4847 = vsel %vm4073, %v4801, 0
        %v4850 = vsel %vm4073, %v4802, 0
        %v4853 = vsel %vm4073, %v4803, 0
        %v4856 = vsel %vm4073, %v4804, 0
        %v4859 = vsel %vm4073, %v4805, 0
        %v4862 = vsel %vm4073, %v4806, 0
        %v4865 = vsel %vm4073, %v4807, 0
        %v4868 = vsel %vm4073, %v4808, 0
        %v4871 = vsel %vm4462, %v4809, 0
        %4873 = vmatprep.subr.bf16.mxu0 0
        %4874 = vmatpush1.bf16.msra.mxu0 %v4871
        %4875 = vmatprep.subr.bf16.mxu0 0
        %4876 = vmatpush1.bf16.msra.mxu0 0
        %4877 = vmatprep.subr.bf16.mxu0 0
        %4878 = vmatpush1.bf16.msra.mxu0 0
        %4879 = vmatprep.subr.bf16.mxu0 0
        %4880 = vmatpush1.bf16.msra.mxu0 0
        %4881 = vmatprep.subr.bf16.mxu0 0
        %4882 = vmatpush1.bf16.msra.mxu0 0
        %4883 = vmatprep.subr.bf16.mxu0 0
        %4884 = vmatpush1.bf16.msra.mxu0 0
        %4885 = vmatprep.subr.bf16.mxu0 0
        %4886 = vmatpush1.bf16.msra.mxu0 0
        %4887 = vmatprep.subr.bf16.mxu0 0
        %4888 = vmatpush1.bf16.msra.mxu0 0
        %4889 = vmatprep.subr.bf16.mxu0 0
        %4890 = vmatpush1.bf16.msra.mxu0 0
        %4891 = vmatprep.subr.bf16.mxu0 0
        %4892 = vmatpush1.bf16.msra.mxu0 0
        %4893 = vmatprep.subr.bf16.mxu0 0
        %4894 = vmatpush1.bf16.msra.mxu0 0
        %4895 = vmatprep.subr.bf16.mxu0 0
        %4896 = vmatpush1.bf16.msra.mxu0 0
        %4897 = vmatprep.subr.bf16.mxu0 0
        %4898 = vmatpush1.bf16.msra.mxu0 0
        %4899 = vmatprep.subr.bf16.mxu0 0
        %4900 = vmatpush1.bf16.msra.mxu0 0
        %4901 = vmatprep.subr.bf16.mxu0 0
        %4902 = vmatpush1.bf16.msra.mxu0 0
        %4903 = vmatprep.subr.bf16.mxu0 0
        %4904 = vmatpush1.bf16.msra.mxu0 0
        %4905 = vmatprep.mubr.bf16.mxu0 0
        %4906 = vmatmul.mubr.bf16.gmra.mrb[0].mxu0 %v4811
        %v4907 = vpop.f32.mrb[0].mxu0
        %v4908 = vadd.f32 0.0, %v4907
        %v4909 = vpop.f32.mrb[0].mxu0
        %v4910 = vpop.f32.mrb[0].mxu0
        %v4911 = vadd.f32 0.0, %v4910
        %v4912 = vpop.f32.mrb[0].mxu0
        %4913 = vmatprep.mubr.bf16.mxu0 0
        %4914 = vmatmul.mubr.bf16.gmra.mrb[0].mxu0 %v4814
        %v4915 = vpop.f32.mrb[0].mxu0
        %v4916 = vadd.f32 0.0, %v4915
        %v4917 = vpop.f32.mrb[0].mxu0
        %v4918 = vpop.f32.mrb[0].mxu0
        %v4919 = vadd.f32 0.0, %v4918
        %v4920 = vpop.f32.mrb[0].mxu0
        %4921 = vmatprep.mubr.bf16.mxu0 0
        %4922 = vmatmul.mubr.bf16.gmra.mrb[0].mxu0 %v4817
        %v4923 = vpop.f32.mrb[0].mxu0
        %v4924 = vadd.f32 0.0, %v4923
        %v4925 = vpop.f32.mrb[0].mxu0
        %v4926 = vpop.f32.mrb[0].mxu0
        %v4927 = vadd.f32 0.0, %v4926
        %v4928 = vpop.f32.mrb[0].mxu0
        %4929 = vmatprep.mubr.bf16.mxu0 0
        %4930 = vmatmul.mubr.bf16.gmra.mrb[0].mxu0 %v4820
        %v4931 = vpop.f32.mrb[0].mxu0
        %v4932 = vadd.f32 0.0, %v4931
        %v4933 = vpop.f32.mrb[0].mxu0
        %v4934 = vpop.f32.mrb[0].mxu0
        %v4935 = vadd.f32 0.0, %v4934
        %v4936 = vpop.f32.mrb[0].mxu0
        %4937 = vmatprep.mubr.bf16.mxu0 0
        %4938 = vmatmul.mubr.bf16.gmra.mrb[0].mxu0 %v4823
        %v4939 = vpop.f32.mrb[0].mxu0
        %v4940 = vadd.f32 0.0, %v4939
        %v4941 = vpop.f32.mrb[0].mxu0
        %v4942 = vpop.f32.mrb[0].mxu0
        %v4943 = vadd.f32 0.0, %v4942
        %v4944 = vpop.f32.mrb[0].mxu0
        %4945 = vmatprep.mubr.bf16.mxu0 0
        %4946 = vmatmul.mubr.bf16.gmra.mrb[0].mxu0 %v4826
        %v4947 = vpop.f32.mrb[0].mxu0
        %v4948 = vadd.f32 0.0, %v4947
        %v4949 = vpop.f32.mrb[0].mxu0
        %v4950 = vpop.f32.mrb[0].mxu0
        %v4951 = vadd.f32 0.0, %v4950
        %v4952 = vpop.f32.mrb[0].mxu0
        %4953 = vmatprep.mubr.bf16.mxu0 0
        %4954 = vmatmul.mubr.bf16.gmra.mrb[0].mxu0 %v4829
        %v4955 = vpop.f32.mrb[0].mxu0
        %v4956 = vadd.f32 0.0, %v4955
        %v4957 = vpop.f32.mrb[0].mxu0
        %v4958 = vpop.f32.mrb[0].mxu0
        %v4959 = vadd.f32 0.0, %v4958
        %v4960 = vpop.f32.mrb[0].mxu0
        %4961 = vmatprep.mubr.bf16.mxu0 0
        %4962 = vmatmul.mubr.bf16.gmra.mrb[0].mxu0 %v4832
        %v4963 = vpop.f32.mrb[0].mxu0
        %v4964 = vadd.f32 0.0, %v4963
        %v4965 = vpop.f32.mrb[0].mxu0
        %v4966 = vpop.f32.mrb[0].mxu0
        %v4967 = vadd.f32 0.0, %v4966
        %v4968 = vpop.f32.mrb[0].mxu0
        %4969 = vmatprep.mubr.bf16.mxu0 0
        %4970 = vmatmul.mubr.bf16.gmra.mrb[0].mxu0 %v4835
        %v4971 = vpop.f32.mrb[0].mxu0
        %v4972 = vadd.f32 0.0, %v4971
        %v4973 = vpop.f32.mrb[0].mxu0
        %v4974 = vpop.f32.mrb[0].mxu0
        %v4975 = vadd.f32 0.0, %v4974
        %v4976 = vpop.f32.mrb[0].mxu0
        %4977 = vmatprep.mubr.bf16.mxu0 0
        %4978 = vmatmul.mubr.bf16.gmra.mrb[0].mxu0 %v4838
        %v4979 = vpop.f32.mrb[0].mxu0
        %v4980 = vadd.f32 0.0, %v4979
        %v4981 = vpop.f32.mrb[0].mxu0
        %v4982 = vpop.f32.mrb[0].mxu0
        %v4983 = vadd.f32 0.0, %v4982
        %v4984 = vpop.f32.mrb[0].mxu0
        %4985 = vmatprep.mubr.bf16.mxu0 0
        %4986 = vmatmul.mubr.bf16.gmra.mrb[0].mxu0 %v4841
        %v4987 = vpop.f32.mrb[0].mxu0
        %v4988 = vadd.f32 0.0, %v4987
        %v4989 = vpop.f32.mrb[0].mxu0
        %v4990 = vpop.f32.mrb[0].mxu0
        %v4991 = vadd.f32 0.0, %v4990
        %v4992 = vpop.f32.mrb[0].mxu0
        %4993 = vmatprep.mubr.bf16.mxu0 0
        %4994 = vmatmul.mubr.bf16.gmra.mrb[0].mxu0 %v4844
        %v4995 = vpop.f32.mrb[0].mxu0
        %v4996 = vadd.f32 0.0, %v4995
        %v4997 = vpop.f32.mrb[0].mxu0
        %v4998 = vpop.f32.mrb[0].mxu0
        %v4999 = vadd.f32 0.0, %v4998
        %v5000 = vpop.f32.mrb[0].mxu0
        %5001 = vmatprep.mubr.bf16.mxu0 0
        %5002 = vmatmul.mubr.bf16.gmra.mrb[0].mxu0 %v4847
        %v5003 = vpop.f32.mrb[0].mxu0
        %v5004 = vadd.f32 0.0, %v5003
        %v5005 = vpop.f32.mrb[0].mxu0
        %v5006 = vpop.f32.mrb[0].mxu0
        %v5007 = vadd.f32 0.0, %v5006
        %v5008 = vpop.f32.mrb[0].mxu0
        %5009 = vmatprep.mubr.bf16.mxu0 0
        %5010 = vmatmul.mubr.bf16.gmra.mrb[0].mxu0 %v4850
        %v5011 = vpop.f32.mrb[0].mxu0
        %v5012 = vadd.f32 0.0, %v5011
        %v5013 = vpop.f32.mrb[0].mxu0
        %v5014 = vpop.f32.mrb[0].mxu0
        %v5015 = vadd.f32 0.0, %v5014
        %v5016 = vpop.f32.mrb[0].mxu0
        %5017 = vmatprep.mubr.bf16.mxu0 0
        %5018 = vmatmul.mubr.bf16.gmra.mrb[0].mxu0 %v4853
        %v5019 = vpop.f32.mrb[0].mxu0
        %v5020 = vadd.f32 0.0, %v5019
        %v5021 = vpop.f32.mrb[0].mxu0
        %v5022 = vpop.f32.mrb[0].mxu0
        %v5023 = vadd.f32 0.0, %v5022
        %v5024 = vpop.f32.mrb[0].mxu0
        %5025 = vmatprep.mubr.bf16.mxu0 0
        %5026 = vmatmul.mubr.bf16.gmra.mrb[0].mxu0 %v4856
        %v5027 = vpop.f32.mrb[0].mxu0
        %v5028 = vadd.f32 0.0, %v5027
        %v5029 = vpop.f32.mrb[0].mxu0
        %v5030 = vpop.f32.mrb[0].mxu0
        %v5031 = vadd.f32 0.0, %v5030
        %v5032 = vpop.f32.mrb[0].mxu0
        %5033 = vmatprep.mubr.bf16.mxu0 0
        %5034 = vmatmul.mubr.bf16.gmra.mrb[0].mxu0 %v4859
        %v5035 = vpop.f32.mrb[0].mxu0
        %v5036 = vadd.f32 0.0, %v5035
        %v5037 = vpop.f32.mrb[0].mxu0
        %v5038 = vpop.f32.mrb[0].mxu0
        %v5039 = vadd.f32 0.0, %v5038
        %v5040 = vpop.f32.mrb[0].mxu0
        %5041 = vmatprep.mubr.bf16.mxu0 0
        %5042 = vmatmul.mubr.bf16.gmra.mrb[0].mxu0 %v4862
        %v5043 = vpop.f32.mrb[0].mxu0
        %v5044 = vadd.f32 0.0, %v5043
        %v5045 = vpop.f32.mrb[0].mxu0
        %v5046 = vpop.f32.mrb[0].mxu0
        %v5047 = vadd.f32 0.0, %v5046
        %v5048 = vpop.f32.mrb[0].mxu0
        %5049 = vmatprep.mubr.bf16.mxu0 0
        %5050 = vmatmul.mubr.bf16.gmra.mrb[0].mxu0 %v4865
        %v5051 = vpop.f32.mrb[0].mxu0
        %v5052 = vpop.f32.mrb[0].mxu0
        %v5053 = vpop.f32.mrb[0].mxu0
        %v5054 = vpop.f32.mrb[0].mxu0
        %5055 = vmatprep.mubr.bf16.mxu0 0
        %5056 = vmatmul.mubr.bf16.gmra.mrb[0].mxu0 %v4868
        %v5057 = vpop.f32.mrb[0].mxu0
        %v5058 = vpop.f32.mrb[0].mxu0
        %v5059 = vpop.f32.mrb[0].mxu0
        %v5060 = vpop.f32.mrb[0].mxu0
        %5061 = vdwg.mxu0
        %v5062 = vld [vmem:[%s8] sm:$0x1]
        %v5064 = vlaneseq
        %v5065 = vshrl.u32 %v5064, 7
        %v5066 = vsub.s32 0, %v5065
        %v5067 = vrot.slane %v5062, %v5066
        %v5069 = vmul.f32 %v4908, %v5067
        %v5070 = vmul.f32 %v4911, %v5067
        %v5071 = vmul.f32 %v4916, %v5067
        %v5072 = vmul.f32 %v4919, %v5067
        %v5073 = vmul.f32 %v4924, %v5067
        %v5074 = vmul.f32 %v4927, %v5067
        %v5075 = vmul.f32 %v4932, %v5067
        %v5076 = vmul.f32 %v4935, %v5067
        %v5077 = vmul.f32 %v4940, %v5067
        %v5078 = vmul.f32 %v4943, %v5067
        %v5079 = vmul.f32 %v4948, %v5067
        %v5080 = vmul.f32 %v4951, %v5067
        %v5081 = vmul.f32 %v4956, %v5067
        %v5082 = vmul.f32 %v4959, %v5067
        %v5083 = vmul.f32 %v4964, %v5067
        %v5084 = vmul.f32 %v4967, %v5067
        %v5085 = vmul.f32 %v4972, %v5067
        %v5086 = vmul.f32 %v4975, %v5067
        %v5087 = vmul.f32 %v4980, %v5067
        %v5088 = vmul.f32 %v4983, %v5067
        %v5089 = vmul.f32 %v4988, %v5067
        %v5090 = vmul.f32 %v4991, %v5067
        %v5091 = vmul.f32 %v4996, %v5067
        %v5092 = vmul.f32 %v4999, %v5067
        %v5093 = vmul.f32 %v5004, %v5067
        %v5094 = vmul.f32 %v5007, %v5067
        %v5095 = vmul.f32 %v5012, %v5067
        %v5096 = vmul.f32 %v5015, %v5067
        %v5097 = vmul.f32 %v5020, %v5067
        %v5098 = vmul.f32 %v5023, %v5067
        %v5099 = vmul.f32 %v5028, %v5067
        %v5100 = vmul.f32 %v5031, %v5067
        %v5101 = vmul.f32 %v5036, %v5067
        %v5102 = vmul.f32 %v5039, %v5067
        %v5103 = vmul.f32 %v5044, %v5067
        %v5104 = vmul.f32 %v5047, %v5067
        %v5105 = vld [vmem:[%s9] sm:$0x1]
        %v5107 = vlaneseq
        %v5108 = vshrl.u32 %v5107, 7
        %v5109 = vsub.s32 0, %v5108
        %v5110 = vrot.slane %v5105, %v5109
        %v5112 = vadd.f32 %v5069, %v5110
        %v5113 = vadd.f32 %v5070, %v5110
        %v5114 = vadd.f32 %v5071, %v5110
        %v5115 = vadd.f32 %v5072, %v5110
        %v5116 = vadd.f32 %v5073, %v5110
        %v5117 = vadd.f32 %v5074, %v5110
        %v5118 = vadd.f32 %v5075, %v5110
        %v5119 = vadd.f32 %v5076, %v5110
        %v5120 = vadd.f32 %v5077, %v5110
        %v5121 = vadd.f32 %v5078, %v5110
        %v5122 = vadd.f32 %v5079, %v5110
        %v5123 = vadd.f32 %v5080, %v5110
        %v5124 = vadd.f32 %v5081, %v5110
        %v5125 = vadd.f32 %v5082, %v5110
        %v5126 = vadd.f32 %v5083, %v5110
        %v5127 = vadd.f32 %v5084, %v5110
        %v5128 = vadd.f32 %v5085, %v5110
        %v5129 = vadd.f32 %v5086, %v5110
        %v5130 = vadd.f32 %v5087, %v5110
        %v5131 = vadd.f32 %v5088, %v5110
        %v5132 = vadd.f32 %v5089, %v5110
        %v5133 = vadd.f32 %v5090, %v5110
        %v5134 = vadd.f32 %v5091, %v5110
        %v5135 = vadd.f32 %v5092, %v5110
        %v5136 = vadd.f32 %v5093, %v5110
        %v5137 = vadd.f32 %v5094, %v5110
        %v5138 = vadd.f32 %v5095, %v5110
        %v5139 = vadd.f32 %v5096, %v5110
        %v5140 = vadd.f32 %v5097, %v5110
        %v5141 = vadd.f32 %v5098, %v5110
        %v5142 = vadd.f32 %v5099, %v5110
        %v5143 = vadd.f32 %v5100, %v5110
        %v5144 = vadd.f32 %v5101, %v5110
        %v5145 = vadd.f32 %v5102, %v5110
        %v5146 = vadd.f32 %v5103, %v5110
        %v5147 = vadd.f32 %v5104, %v5110
        %v5184 = vcombine.high %v5112, %v5112
        %v5186 = vunpack.c.l.s4 1983009808
        %v5187 = vunpack.c.0.s8 %v5186
        %v5188 = vlaneseq
        %v5189 = vshrl.u32 %v5188, 7
        %v5190 = vsub.s32 %v5187, %v5189
        %v5191 = vrot.slane %v5112, %v5190
        %v5193 = vunpack.c.l.s4 1983009808
        %v5194 = vunpack.c.0.s8 %v5193
        %v5195 = vlaneseq
        %v5196 = vshrl.u32 %v5195, 7
        %v5197 = vsub.s32 %v5194, %v5196
        %v5198 = vrot.slane %v5184, %v5197
        %v5199 = vcombine.high %v5191, %v5191
        %v5200 = vcombine.high %v5198, %v5198
        %v5201 = vcombine.high %v5113, %v5113
        %v5203 = vunpack.c.l.s4 1983009808
        %v5204 = vunpack.c.0.s8 %v5203
        %v5205 = vlaneseq
        %v5206 = vshrl.u32 %v5205, 7
        %v5207 = vsub.s32 %v5204, %v5206
        %v5208 = vrot.slane %v5113, %v5207
        %v5210 = vunpack.c.l.s4 1983009808
        %v5211 = vunpack.c.0.s8 %v5210
        %v5212 = vlaneseq
        %v5213 = vshrl.u32 %v5212, 7
        %v5214 = vsub.s32 %v5211, %v5213
        %v5215 = vrot.slane %v5201, %v5214
        %v5216 = vcombine.high %v5208, %v5208
        %v5217 = vcombine.high %v5215, %v5215
        %v5218 = vcombine.high %v5114, %v5114
        %v5220 = vunpack.c.l.s4 1983009808
        %v5221 = vunpack.c.0.s8 %v5220
        %v5222 = vlaneseq
        %v5223 = vshrl.u32 %v5222, 7
        %v5224 = vsub.s32 %v5221, %v5223
        %v5225 = vrot.slane %v5114, %v5224
        %v5227 = vunpack.c.l.s4 1983009808
        %v5228 = vunpack.c.0.s8 %v5227
        %v5229 = vlaneseq
        %v5230 = vshrl.u32 %v5229, 7
        %v5231 = vsub.s32 %v5228, %v5230
        %v5232 = vrot.slane %v5218, %v5231
        %v5233 = vcombine.high %v5225, %v5225
        %v5234 = vcombine.high %v5232, %v5232
        %v5235 = vcombine.high %v5115, %v5115
        %v5237 = vunpack.c.l.s4 1983009808
        %v5238 = vunpack.c.0.s8 %v5237
        %v5239 = vlaneseq
        %v5240 = vshrl.u32 %v5239, 7
        %v5241 = vsub.s32 %v5238, %v5240
        %v5242 = vrot.slane %v5115, %v5241
        %v5244 = vunpack.c.l.s4 1983009808
        %v5245 = vunpack.c.0.s8 %v5244
        %v5246 = vlaneseq
        %v5247 = vshrl.u32 %v5246, 7
        %v5248 = vsub.s32 %v5245, %v5247
        %v5249 = vrot.slane %v5235, %v5248
        %v5250 = vcombine.high %v5242, %v5242
        %v5251 = vcombine.high %v5249, %v5249
        %v5252 = vcombine.high %v5116, %v5116
        %v5254 = vunpack.c.l.s4 1983009808
        %v5255 = vunpack.c.0.s8 %v5254
        %v5256 = vlaneseq
        %v5257 = vshrl.u32 %v5256, 7
        %v5258 = vsub.s32 %v5255, %v5257
        %v5259 = vrot.slane %v5116, %v5258
        %v5261 = vunpack.c.l.s4 1983009808
        %v5262 = vunpack.c.0.s8 %v5261
        %v5263 = vlaneseq
        %v5264 = vshrl.u32 %v5263, 7
        %v5265 = vsub.s32 %v5262, %v5264
        %v5266 = vrot.slane %v5252, %v5265
        %v5267 = vcombine.high %v5266, %v5266
        %v5268 = vcombine.high %v5117, %v5117
        %v5270 = vunpack.c.l.s4 1983009808
        %v5271 = vunpack.c.0.s8 %v5270
        %v5272 = vlaneseq
        %v5273 = vshrl.u32 %v5272, 7
        %v5274 = vsub.s32 %v5271, %v5273
        %v5275 = vrot.slane %v5117, %v5274
        %v5277 = vunpack.c.l.s4 1983009808
        %v5278 = vunpack.c.0.s8 %v5277
        %v5279 = vlaneseq
        %v5280 = vshrl.u32 %v5279, 7
        %v5281 = vsub.s32 %v5278, %v5280
        %v5282 = vrot.slane %v5268, %v5281
        %v5283 = vcombine.high %v5275, %v5275
        %v5284 = vcombine.high %v5282, %v5282
        %v5285 = vcombine.high %v5118, %v5118
        %v5287 = vunpack.c.l.s4 1983009808
        %v5288 = vunpack.c.0.s8 %v5287
        %v5289 = vlaneseq
        %v5290 = vshrl.u32 %v5289, 7
        %v5291 = vsub.s32 %v5288, %v5290
        %v5292 = vrot.slane %v5118, %v5291
        %v5294 = vunpack.c.l.s4 1983009808
        %v5295 = vunpack.c.0.s8 %v5294
        %v5296 = vlaneseq
        %v5297 = vshrl.u32 %v5296, 7
        %v5298 = vsub.s32 %v5295, %v5297
        %v5299 = vrot.slane %v5285, %v5298
        %v5300 = vcombine.high %v5292, %v5292
        %v5301 = vcombine.high %v5299, %v5299
        %v5302 = vcombine.high %v5119, %v5119
        %v5304 = vunpack.c.l.s4 1983009808
        %v5305 = vunpack.c.0.s8 %v5304
        %v5306 = vlaneseq
        %v5307 = vshrl.u32 %v5306, 7
        %v5308 = vsub.s32 %v5305, %v5307
        %v5309 = vrot.slane %v5119, %v5308
        %v5311 = vunpack.c.l.s4 1983009808
        %v5312 = vunpack.c.0.s8 %v5311
        %v5313 = vlaneseq
        %v5314 = vshrl.u32 %v5313, 7
        %v5315 = vsub.s32 %v5312, %v5314
        %v5316 = vrot.slane %v5302, %v5315
        %v5317 = vcombine.high %v5309, %v5309
        %v5318 = vcombine.high %v5316, %v5316
        %v5319 = vcombine.high %v5120, %v5120
        %v5321 = vunpack.c.l.s4 1983009808
        %v5322 = vunpack.c.0.s8 %v5321
        %v5323 = vlaneseq
        %v5324 = vshrl.u32 %v5323, 7
        %v5325 = vsub.s32 %v5322, %v5324
        %v5326 = vrot.slane %v5120, %v5325
        %v5328 = vunpack.c.l.s4 1983009808
        %v5329 = vunpack.c.0.s8 %v5328
        %v5330 = vlaneseq
        %v5331 = vshrl.u32 %v5330, 7
        %v5332 = vsub.s32 %v5329, %v5331
        %v5333 = vrot.slane %v5319, %v5332
        %v5334 = vcombine.high %v5326, %v5326
        %v5335 = vcombine.high %v5121, %v5121
        %v5337 = vunpack.c.l.s4 1983009808
        %v5338 = vunpack.c.0.s8 %v5337
        %v5339 = vlaneseq
        %v5340 = vshrl.u32 %v5339, 7
        %v5341 = vsub.s32 %v5338, %v5340
        %v5342 = vrot.slane %v5121, %v5341
        %v5344 = vunpack.c.l.s4 1983009808
        %v5345 = vunpack.c.0.s8 %v5344
        %v5346 = vlaneseq
        %v5347 = vshrl.u32 %v5346, 7
        %v5348 = vsub.s32 %v5345, %v5347
        %v5349 = vrot.slane %v5335, %v5348
        %v5350 = vcombine.high %v5342, %v5342
        %v5351 = vcombine.high %v5349, %v5349
        %v5352 = vcombine.high %v5122, %v5122
        %v5354 = vunpack.c.l.s4 1983009808
        %v5355 = vunpack.c.0.s8 %v5354
        %v5356 = vlaneseq
        %v5357 = vshrl.u32 %v5356, 7
        %v5358 = vsub.s32 %v5355, %v5357
        %v5359 = vrot.slane %v5122, %v5358
        %v5361 = vunpack.c.l.s4 1983009808
        %v5362 = vunpack.c.0.s8 %v5361
        %v5363 = vlaneseq
        %v5364 = vshrl.u32 %v5363, 7
        %v5365 = vsub.s32 %v5362, %v5364
        %v5366 = vrot.slane %v5352, %v5365
        %v5367 = vcombine.high %v5359, %v5359
        %v5368 = vcombine.high %v5366, %v5366
        %v5369 = vcombine.high %v5123, %v5123
        %v5371 = vunpack.c.l.s4 1983009808
        %v5372 = vunpack.c.0.s8 %v5371
        %v5373 = vlaneseq
        %v5374 = vshrl.u32 %v5373, 7
        %v5375 = vsub.s32 %v5372, %v5374
        %v5376 = vrot.slane %v5123, %v5375
        %v5378 = vunpack.c.l.s4 1983009808
        %v5379 = vunpack.c.0.s8 %v5378
        %v5380 = vlaneseq
        %v5381 = vshrl.u32 %v5380, 7
        %v5382 = vsub.s32 %v5379, %v5381
        %v5383 = vrot.slane %v5369, %v5382
        %v5384 = vcombine.high %v5376, %v5376
        %v5385 = vcombine.high %v5383, %v5383
        %v5386 = vcombine.high %v5124, %v5124
        %v5388 = vunpack.c.l.s4 1983009808
        %v5389 = vunpack.c.0.s8 %v5388
        %v5390 = vlaneseq
        %v5391 = vshrl.u32 %v5390, 7
        %v5392 = vsub.s32 %v5389, %v5391
        %v5393 = vrot.slane %v5124, %v5392
        %v5395 = vunpack.c.l.s4 1983009808
        %v5396 = vunpack.c.0.s8 %v5395
        %v5397 = vlaneseq
        %v5398 = vshrl.u32 %v5397, 7
        %v5399 = vsub.s32 %v5396, %v5398
        %v5400 = vrot.slane %v5386, %v5399
        %v5401 = vcombine.high %v5393, %v5393
        %v5402 = vcombine.high %v5400, %v5400
        %v5403 = vcombine.high %v5125, %v5125
        %v5405 = vunpack.c.l.s4 1983009808
        %v5406 = vunpack.c.0.s8 %v5405
        %v5407 = vlaneseq
        %v5408 = vshrl.u32 %v5407, 7
        %v5409 = vsub.s32 %v5406, %v5408
        %v5410 = vrot.slane %v5125, %v5409
        %v5412 = vunpack.c.l.s4 1983009808
        %v5413 = vunpack.c.0.s8 %v5412
        %v5414 = vlaneseq
        %v5415 = vshrl.u32 %v5414, 7
        %v5416 = vsub.s32 %v5413, %v5415
        %v5417 = vrot.slane %v5403, %v5416
        %v5418 = vcombine.high %v5417, %v5417
        %v5419 = vcombine.high %v5126, %v5126
        %v5421 = vunpack.c.l.s4 1983009808
        %v5422 = vunpack.c.0.s8 %v5421
        %v5423 = vlaneseq
        %v5424 = vshrl.u32 %v5423, 7
        %v5425 = vsub.s32 %v5422, %v5424
        %v5426 = vrot.slane %v5126, %v5425
        %v5428 = vunpack.c.l.s4 1983009808
        %v5429 = vunpack.c.0.s8 %v5428
        %v5430 = vlaneseq
        %v5431 = vshrl.u32 %v5430, 7
        %v5432 = vsub.s32 %v5429, %v5431
        %v5433 = vrot.slane %v5419, %v5432
        %v5434 = vcombine.high %v5426, %v5426
        %v5435 = vcombine.high %v5433, %v5433
        %v5436 = vcombine.high %v5127, %v5127
        %v5438 = vunpack.c.l.s4 1983009808
        %v5439 = vunpack.c.0.s8 %v5438
        %v5440 = vlaneseq
        %v5441 = vshrl.u32 %v5440, 7
        %v5442 = vsub.s32 %v5439, %v5441
        %v5443 = vrot.slane %v5127, %v5442
        %v5445 = vunpack.c.l.s4 1983009808
        %v5446 = vunpack.c.0.s8 %v5445
        %v5447 = vlaneseq
        %v5448 = vshrl.u32 %v5447, 7
        %v5449 = vsub.s32 %v5446, %v5448
        %v5450 = vrot.slane %v5436, %v5449
        %v5451 = vcombine.high %v5443, %v5443
        %v5452 = vcombine.high %v5450, %v5450
        %v5453 = vcombine.high %v5128, %v5128
        %v5455 = vunpack.c.l.s4 1983009808
        %v5456 = vunpack.c.0.s8 %v5455
        %v5457 = vlaneseq
        %v5458 = vshrl.u32 %v5457, 7
        %v5459 = vsub.s32 %v5456, %v5458
        %v5460 = vrot.slane %v5128, %v5459
        %v5462 = vunpack.c.l.s4 1983009808
        %v5463 = vunpack.c.0.s8 %v5462
        %v5464 = vlaneseq
        %v5465 = vshrl.u32 %v5464, 7
        %v5466 = vsub.s32 %v5463, %v5465
        %v5467 = vrot.slane %v5453, %v5466
        %v5468 = vcombine.high %v5460, %v5460
        %v5469 = vcombine.high %v5467, %v5467
        %v5470 = vcombine.high %v5129, %v5129
        %v5472 = vunpack.c.l.s4 1983009808
        %v5473 = vunpack.c.0.s8 %v5472
        %v5474 = vlaneseq
        %v5475 = vshrl.u32 %v5474, 7
        %v5476 = vsub.s32 %v5473, %v5475
        %v5477 = vrot.slane %v5129, %v5476
        %v5479 = vunpack.c.l.s4 1983009808
        %v5480 = vunpack.c.0.s8 %v5479
        %v5481 = vlaneseq
        %v5482 = vshrl.u32 %v5481, 7
        %v5483 = vsub.s32 %v5480, %v5482
        %v5484 = vrot.slane %v5470, %v5483
        %v5485 = vcombine.high %v5477, %v5477
        %v5486 = vcombine.high %v5130, %v5130
        %v5488 = vunpack.c.l.s4 1983009808
        %v5489 = vunpack.c.0.s8 %v5488
        %v5490 = vlaneseq
        %v5491 = vshrl.u32 %v5490, 7
        %v5492 = vsub.s32 %v5489, %v5491
        %v5493 = vrot.slane %v5130, %v5492
        %v5495 = vunpack.c.l.s4 1983009808
        %v5496 = vunpack.c.0.s8 %v5495
        %v5497 = vlaneseq
        %v5498 = vshrl.u32 %v5497, 7
        %v5499 = vsub.s32 %v5496, %v5498
        %v5500 = vrot.slane %v5486, %v5499
        %v5501 = vcombine.high %v5493, %v5493
        %v5502 = vcombine.high %v5500, %v5500
        %v5503 = vcombine.high %v5131, %v5131
        %v5505 = vunpack.c.l.s4 1983009808
        %v5506 = vunpack.c.0.s8 %v5505
        %v5507 = vlaneseq
        %v5508 = vshrl.u32 %v5507, 7
        %v5509 = vsub.s32 %v5506, %v5508
        %v5510 = vrot.slane %v5131, %v5509
        %v5512 = vunpack.c.l.s4 1983009808
        %v5513 = vunpack.c.0.s8 %v5512
        %v5514 = vlaneseq
        %v5515 = vshrl.u32 %v5514, 7
        %v5516 = vsub.s32 %v5513, %v5515
        %v5517 = vrot.slane %v5503, %v5516
        %v5518 = vcombine.high %v5510, %v5510
        %v5519 = vcombine.high %v5517, %v5517
        %v5520 = vcombine.high %v5132, %v5132
        %v5522 = vunpack.c.l.s4 1983009808
        %v5523 = vunpack.c.0.s8 %v5522
        %v5524 = vlaneseq
        %v5525 = vshrl.u32 %v5524, 7
        %v5526 = vsub.s32 %v5523, %v5525
        %v5527 = vrot.slane %v5132, %v5526
        %v5529 = vunpack.c.l.s4 1983009808
        %v5530 = vunpack.c.0.s8 %v5529
        %v5531 = vlaneseq
        %v5532 = vshrl.u32 %v5531, 7
        %v5533 = vsub.s32 %v5530, %v5532
        %v5534 = vrot.slane %v5520, %v5533
        %v5535 = vcombine.high %v5527, %v5527
        %v5536 = vcombine.high %v5534, %v5534
        %v5537 = vcombine.high %v5133, %v5133
        %v5539 = vunpack.c.l.s4 1983009808
        %v5540 = vunpack.c.0.s8 %v5539
        %v5541 = vlaneseq
        %v5542 = vshrl.u32 %v5541, 7
        %v5543 = vsub.s32 %v5540, %v5542
        %v5544 = vrot.slane %v5133, %v5543
        %v5546 = vunpack.c.l.s4 1983009808
        %v5547 = vunpack.c.0.s8 %v5546
        %v5548 = vlaneseq
        %v5549 = vshrl.u32 %v5548, 7
        %v5550 = vsub.s32 %v5547, %v5549
        %v5551 = vrot.slane %v5537, %v5550
        %v5552 = vcombine.high %v5544, %v5544
        %v5553 = vcombine.high %v5551, %v5551
        %v5554 = vcombine.high %v5134, %v5134
        %v5556 = vunpack.c.l.s4 1983009808
        %v5557 = vunpack.c.0.s8 %v5556
        %v5558 = vlaneseq
        %v5559 = vshrl.u32 %v5558, 7
        %v5560 = vsub.s32 %v5557, %v5559
        %v5561 = vrot.slane %v5134, %v5560
        %v5563 = vunpack.c.l.s4 1983009808
        %v5564 = vunpack.c.0.s8 %v5563
        %v5565 = vlaneseq
        %v5566 = vshrl.u32 %v5565, 7
        %v5567 = vsub.s32 %v5564, %v5566
        %v5568 = vrot.slane %v5554, %v5567
        %v5569 = vcombine.high %v5568, %v5568
        %v5570 = vcombine.high %v5135, %v5135
        %v5572 = vunpack.c.l.s4 1983009808
        %v5573 = vunpack.c.0.s8 %v5572
        %v5574 = vlaneseq
        %v5575 = vshrl.u32 %v5574, 7
        %v5576 = vsub.s32 %v5573, %v5575
        %v5577 = vrot.slane %v5135, %v5576
        %v5579 = vunpack.c.l.s4 1983009808
        %v5580 = vunpack.c.0.s8 %v5579
        %v5581 = vlaneseq
        %v5582 = vshrl.u32 %v5581, 7
        %v5583 = vsub.s32 %v5580, %v5582
        %v5584 = vrot.slane %v5570, %v5583
        %v5585 = vcombine.high %v5577, %v5577
        %v5586 = vcombine.high %v5584, %v5584
        %v5587 = vcombine.high %v5136, %v5136
        %v5589 = vunpack.c.l.s4 1983009808
        %v5590 = vunpack.c.0.s8 %v5589
        %v5591 = vlaneseq
        %v5592 = vshrl.u32 %v5591, 7
        %v5593 = vsub.s32 %v5590, %v5592
        %v5594 = vrot.slane %v5136, %v5593
        %v5596 = vunpack.c.l.s4 1983009808
        %v5597 = vunpack.c.0.s8 %v5596
        %v5598 = vlaneseq
        %v5599 = vshrl.u32 %v5598, 7
        %v5600 = vsub.s32 %v5597, %v5599
        %v5601 = vrot.slane %v5587, %v5600
        %v5602 = vcombine.high %v5594, %v5594
        %v5603 = vcombine.high %v5601, %v5601
        %v5604 = vcombine.high %v5137, %v5137
        %v5606 = vunpack.c.l.s4 1983009808
        %v5607 = vunpack.c.0.s8 %v5606
        %v5608 = vlaneseq
        %v5609 = vshrl.u32 %v5608, 7
        %v5610 = vsub.s32 %v5607, %v5609
        %v5611 = vrot.slane %v5137, %v5610
        %v5613 = vunpack.c.l.s4 1983009808
        %v5614 = vunpack.c.0.s8 %v5613
        %v5615 = vlaneseq
        %v5616 = vshrl.u32 %v5615, 7
        %v5617 = vsub.s32 %v5614, %v5616
        %v5618 = vrot.slane %v5604, %v5617
        %v5619 = vcombine.high %v5611, %v5611
        %v5620 = vcombine.high %v5618, %v5618
        %v5621 = vcombine.high %v5138, %v5138
        %v5623 = vunpack.c.l.s4 1983009808
        %v5624 = vunpack.c.0.s8 %v5623
        %v5625 = vlaneseq
        %v5626 = vshrl.u32 %v5625, 7
        %v5627 = vsub.s32 %v5624, %v5626
        %v5628 = vrot.slane %v5138, %v5627
        %v5630 = vunpack.c.l.s4 1983009808
        %v5631 = vunpack.c.0.s8 %v5630
        %v5632 = vlaneseq
        %v5633 = vshrl.u32 %v5632, 7
        %v5634 = vsub.s32 %v5631, %v5633
        %v5635 = vrot.slane %v5621, %v5634
        %v5636 = vcombine.high %v5628, %v5628
        %v5637 = vcombine.high %v5139, %v5139
        %v5639 = vunpack.c.l.s4 1983009808
        %v5640 = vunpack.c.0.s8 %v5639
        %v5641 = vlaneseq
        %v5642 = vshrl.u32 %v5641, 7
        %v5643 = vsub.s32 %v5640, %v5642
        %v5644 = vrot.slane %v5139, %v5643
        %v5646 = vunpack.c.l.s4 1983009808
        %v5647 = vunpack.c.0.s8 %v5646
        %v5648 = vlaneseq
        %v5649 = vshrl.u32 %v5648, 7
        %v5650 = vsub.s32 %v5647, %v5649
        %v5651 = vrot.slane %v5637, %v5650
        %v5652 = vcombine.high %v5644, %v5644
        %v5653 = vcombine.high %v5651, %v5651
        %v5654 = vcombine.high %v5140, %v5140
        %v5656 = vunpack.c.l.s4 1983009808
        %v5657 = vunpack.c.0.s8 %v5656
        %v5658 = vlaneseq
        %v5659 = vshrl.u32 %v5658, 7
        %v5660 = vsub.s32 %v5657, %v5659
        %v5661 = vrot.slane %v5140, %v5660
        %v5663 = vunpack.c.l.s4 1983009808
        %v5664 = vunpack.c.0.s8 %v5663
        %v5665 = vlaneseq
        %v5666 = vshrl.u32 %v5665, 7
        %v5667 = vsub.s32 %v5664, %v5666
        %v5668 = vrot.slane %v5654, %v5667
        %v5669 = vcombine.high %v5661, %v5661
        %v5670 = vcombine.high %v5668, %v5668
        %v5671 = vcombine.high %v5141, %v5141
        %v5673 = vunpack.c.l.s4 1983009808
        %v5674 = vunpack.c.0.s8 %v5673
        %v5675 = vlaneseq
        %v5676 = vshrl.u32 %v5675, 7
        %v5677 = vsub.s32 %v5674, %v5676
        %v5678 = vrot.slane %v5141, %v5677
        %v5680 = vunpack.c.l.s4 1983009808
        %v5681 = vunpack.c.0.s8 %v5680
        %v5682 = vlaneseq
        %v5683 = vshrl.u32 %v5682, 7
        %v5684 = vsub.s32 %v5681, %v5683
        %v5685 = vrot.slane %v5671, %v5684
        %v5686 = vcombine.high %v5678, %v5678
        %v5687 = vcombine.high %v5685, %v5685
        %v5688 = vcombine.high %v5142, %v5142
        %v5690 = vunpack.c.l.s4 1983009808
        %v5691 = vunpack.c.0.s8 %v5690
        %v5692 = vlaneseq
        %v5693 = vshrl.u32 %v5692, 7
        %v5694 = vsub.s32 %v5691, %v5693
        %v5695 = vrot.slane %v5142, %v5694
        %v5697 = vunpack.c.l.s4 1983009808
        %v5698 = vunpack.c.0.s8 %v5697
        %v5699 = vlaneseq
        %v5700 = vshrl.u32 %v5699, 7
        %v5701 = vsub.s32 %v5698, %v5700
        %v5702 = vrot.slane %v5688, %v5701
        %v5703 = vcombine.high %v5695, %v5695
        %v5704 = vcombine.high %v5702, %v5702
        %v5705 = vcombine.high %v5143, %v5143
        %v5707 = vunpack.c.l.s4 1983009808
        %v5708 = vunpack.c.0.s8 %v5707
        %v5709 = vlaneseq
        %v5710 = vshrl.u32 %v5709, 7
        %v5711 = vsub.s32 %v5708, %v5710
        %v5712 = vrot.slane %v5143, %v5711
        %v5714 = vunpack.c.l.s4 1983009808
        %v5715 = vunpack.c.0.s8 %v5714
        %v5716 = vlaneseq
        %v5717 = vshrl.u32 %v5716, 7
        %v5718 = vsub.s32 %v5715, %v5717
        %v5719 = vrot.slane %v5705, %v5718
        %v5720 = vcombine.high %v5719, %v5719
        %v5721 = vcombine.high %v5144, %v5144
        %v5723 = vunpack.c.l.s4 1983009808
        %v5724 = vunpack.c.0.s8 %v5723
        %v5725 = vlaneseq
        %v5726 = vshrl.u32 %v5725, 7
        %v5727 = vsub.s32 %v5724, %v5726
        %v5728 = vrot.slane %v5144, %v5727
        %v5730 = vunpack.c.l.s4 1983009808
        %v5731 = vunpack.c.0.s8 %v5730
        %v5732 = vlaneseq
        %v5733 = vshrl.u32 %v5732, 7
        %v5734 = vsub.s32 %v5731, %v5733
        %v5735 = vrot.slane %v5721, %v5734
        %v5736 = vcombine.high %v5728, %v5728
        %v5737 = vcombine.high %v5735, %v5735
        %v5738 = vcombine.high %v5145, %v5145
        %v5740 = vunpack.c.l.s4 1983009808
        %v5741 = vunpack.c.0.s8 %v5740
        %v5742 = vlaneseq
        %v5743 = vshrl.u32 %v5742, 7
        %v5744 = vsub.s32 %v5741, %v5743
        %v5745 = vrot.slane %v5145, %v5744
        %v5747 = vunpack.c.l.s4 1983009808
        %v5748 = vunpack.c.0.s8 %v5747
        %v5749 = vlaneseq
        %v5750 = vshrl.u32 %v5749, 7
        %v5751 = vsub.s32 %v5748, %v5750
        %v5752 = vrot.slane %v5738, %v5751
        %v5753 = vcombine.high %v5745, %v5745
        %v5754 = vcombine.high %v5752, %v5752
        %v5755 = vcombine.high %v5146, %v5146
        %v5757 = vunpack.c.l.s4 1983009808
        %v5758 = vunpack.c.0.s8 %v5757
        %v5759 = vlaneseq
        %v5760 = vshrl.u32 %v5759, 7
        %v5761 = vsub.s32 %v5758, %v5760
        %v5762 = vrot.slane %v5146, %v5761
        %v5764 = vunpack.c.l.s4 1983009808
        %v5765 = vunpack.c.0.s8 %v5764
        %v5766 = vlaneseq
        %v5767 = vshrl.u32 %v5766, 7
        %v5768 = vsub.s32 %v5765, %v5767
        %v5769 = vrot.slane %v5755, %v5768
        %v5770 = vcombine.high %v5762, %v5762
        %v5771 = vcombine.high %v5769, %v5769
        %v5772 = vcombine.high %v5147, %v5147
        %v5774 = vunpack.c.l.s4 1983009808
        %v5775 = vunpack.c.0.s8 %v5774
        %v5776 = vlaneseq
        %v5777 = vshrl.u32 %v5776, 7
        %v5778 = vsub.s32 %v5775, %v5777
        %v5779 = vrot.slane %v5147, %v5778
        %v5781 = vunpack.c.l.s4 1983009808
        %v5782 = vunpack.c.0.s8 %v5781
        %v5783 = vlaneseq
        %v5784 = vshrl.u32 %v5783, 7
        %v5785 = vsub.s32 %v5782, %v5784
        %v5786 = vrot.slane %v5772, %v5785
        %v5787 = vcombine.high %v5779, %v5779
        %v5948 = vcombine.high %v418, %v418
        %v5950 = vunpack.c.l.s4 1983009808
        %v5951 = vunpack.c.0.s8 %v5950
        %v5952 = vlaneseq
        %v5953 = vshrl.u32 %v5952, 7
        %v5954 = vsub.s32 %v5951, %v5953
        %v5955 = vrot.slane %v418, %v5954
        %v5957 = vunpack.c.l.s4 1983009808
        %v5958 = vunpack.c.0.s8 %v5957
        %v5959 = vlaneseq
        %v5960 = vshrl.u32 %v5959, 7
        %v5961 = vsub.s32 %v5958, %v5960
        %v5962 = vrot.slane %v5948, %v5961
        %v5963 = vcombine.high %v5955, %v5955
        %v5964 = vcombine.high %v5962, %v5962
        %v5965 = vcombine.high %v419, %v419
        %v5967 = vunpack.c.l.s4 1983009808
        %v5968 = vunpack.c.0.s8 %v5967
        %v5969 = vlaneseq
        %v5970 = vshrl.u32 %v5969, 7
        %v5971 = vsub.s32 %v5968, %v5970
        %v5972 = vrot.slane %v419, %v5971
        %v5974 = vunpack.c.l.s4 1983009808
        %v5975 = vunpack.c.0.s8 %v5974
        %v5976 = vlaneseq
        %v5977 = vshrl.u32 %v5976, 7
        %v5978 = vsub.s32 %v5975, %v5977
        %v5979 = vrot.slane %v5965, %v5978
        %v5980 = vcombine.high %v5972, %v5972
        %v5981 = vcombine.high %v5979, %v5979
        %v5982 = vcombine.high %v420, %v420
        %v5984 = vunpack.c.l.s4 1983009808
        %v5985 = vunpack.c.0.s8 %v5984
        %v5986 = vlaneseq
        %v5987 = vshrl.u32 %v5986, 7
        %v5988 = vsub.s32 %v5985, %v5987
        %v5989 = vrot.slane %v420, %v5988
        %v5991 = vunpack.c.l.s4 1983009808
        %v5992 = vunpack.c.0.s8 %v5991
        %v5993 = vlaneseq
        %v5994 = vshrl.u32 %v5993, 7
        %v5995 = vsub.s32 %v5992, %v5994
        %v5996 = vrot.slane %v5982, %v5995
        %v5997 = vcombine.high %v5989, %v5989
        %v5998 = vcombine.high %v5996, %v5996
        %v5999 = vcombine.high %v421, %v421
        %v6001 = vunpack.c.l.s4 1983009808
        %v6002 = vunpack.c.0.s8 %v6001
        %v6003 = vlaneseq
        %v6004 = vshrl.u32 %v6003, 7
        %v6005 = vsub.s32 %v6002, %v6004
        %v6006 = vrot.slane %v421, %v6005
        %v6008 = vunpack.c.l.s4 1983009808
        %v6009 = vunpack.c.0.s8 %v6008
        %v6010 = vlaneseq
        %v6011 = vshrl.u32 %v6010, 7
        %v6012 = vsub.s32 %v6009, %v6011
        %v6013 = vrot.slane %v5999, %v6012
        %v6014 = vcombine.high %v6006, %v6006
        %v6015 = vcombine.high %v6013, %v6013
        %v6016 = vcombine.high %v422, %v422
        %v6018 = vunpack.c.l.s4 1983009808
        %v6019 = vunpack.c.0.s8 %v6018
        %v6020 = vlaneseq
        %v6021 = vshrl.u32 %v6020, 7
        %v6022 = vsub.s32 %v6019, %v6021
        %v6023 = vrot.slane %v422, %v6022
        %v6025 = vunpack.c.l.s4 1983009808
        %v6026 = vunpack.c.0.s8 %v6025
        %v6027 = vlaneseq
        %v6028 = vshrl.u32 %v6027, 7
        %v6029 = vsub.s32 %v6026, %v6028
        %v6030 = vrot.slane %v6016, %v6029
        %v6031 = vcombine.high %v6023, %v6023
        %v6032 = vcombine.high %v6030, %v6030
        %v6033 = vcombine.high %v423, %v423
        %v6035 = vunpack.c.l.s4 1983009808
        %v6036 = vunpack.c.0.s8 %v6035
        %v6037 = vlaneseq
        %v6038 = vshrl.u32 %v6037, 7
        %v6039 = vsub.s32 %v6036, %v6038
        %v6040 = vrot.slane %v423, %v6039
        %v6042 = vunpack.c.l.s4 1983009808
        %v6043 = vunpack.c.0.s8 %v6042
        %v6044 = vlaneseq
        %v6045 = vshrl.u32 %v6044, 7
        %v6046 = vsub.s32 %v6043, %v6045
        %v6047 = vrot.slane %v6033, %v6046
        %v6048 = vcombine.high %v6040, %v6040
        %v6049 = vcombine.high %v6047, %v6047
        %v6050 = vcombine.high %v424, %v424
        %v6052 = vunpack.c.l.s4 1983009808
        %v6053 = vunpack.c.0.s8 %v6052
        %v6054 = vlaneseq
        %v6055 = vshrl.u32 %v6054, 7
        %v6056 = vsub.s32 %v6053, %v6055
        %v6057 = vrot.slane %v424, %v6056
        %v6059 = vunpack.c.l.s4 1983009808
        %v6060 = vunpack.c.0.s8 %v6059
        %v6061 = vlaneseq
        %v6062 = vshrl.u32 %v6061, 7
        %v6063 = vsub.s32 %v6060, %v6062
        %v6064 = vrot.slane %v6050, %v6063
        %v6065 = vcombine.high %v6057, %v6057
        %v6066 = vcombine.high %v6064, %v6064
        %v6067 = vcombine.high %v425, %v425
        %v6069 = vunpack.c.l.s4 1983009808
        %v6070 = vunpack.c.0.s8 %v6069
        %v6071 = vlaneseq
        %v6072 = vshrl.u32 %v6071, 7
        %v6073 = vsub.s32 %v6070, %v6072
        %v6074 = vrot.slane %v425, %v6073
        %v6076 = vunpack.c.l.s4 1983009808
        %v6077 = vunpack.c.0.s8 %v6076
        %v6078 = vlaneseq
        %v6079 = vshrl.u32 %v6078, 7
        %v6080 = vsub.s32 %v6077, %v6079
        %v6081 = vrot.slane %v6067, %v6080
        %v6082 = vcombine.high %v6074, %v6074
        %v6083 = vcombine.high %v6081, %v6081
        %v6084 = vcombine.high %v426, %v426
        %v6086 = vunpack.c.l.s4 1983009808
        %v6087 = vunpack.c.0.s8 %v6086
        %v6088 = vlaneseq
        %v6089 = vshrl.u32 %v6088, 7
        %v6090 = vsub.s32 %v6087, %v6089
        %v6091 = vrot.slane %v426, %v6090
        %v6093 = vunpack.c.l.s4 1983009808
        %v6094 = vunpack.c.0.s8 %v6093
        %v6095 = vlaneseq
        %v6096 = vshrl.u32 %v6095, 7
        %v6097 = vsub.s32 %v6094, %v6096
        %v6098 = vrot.slane %v6084, %v6097
        %v6099 = vcombine.high %v6091, %v6091
        %v6100 = vcombine.high %v6098, %v6098
        %v6101 = vcombine.high %v427, %v427
        %v6103 = vunpack.c.l.s4 1983009808
        %v6104 = vunpack.c.0.s8 %v6103
        %v6105 = vlaneseq
        %v6106 = vshrl.u32 %v6105, 7
        %v6107 = vsub.s32 %v6104, %v6106
        %v6108 = vrot.slane %v427, %v6107
        %v6110 = vunpack.c.l.s4 1983009808
        %v6111 = vunpack.c.0.s8 %v6110
        %v6112 = vlaneseq
        %v6113 = vshrl.u32 %v6112, 7
        %v6114 = vsub.s32 %v6111, %v6113
        %v6115 = vrot.slane %v6101, %v6114
        %v6116 = vcombine.high %v6108, %v6108
        %v6117 = vcombine.high %v6115, %v6115
        %v6118 = vcombine.high %v428, %v428
        %v6120 = vunpack.c.l.s4 1983009808
        %v6121 = vunpack.c.0.s8 %v6120
        %v6122 = vlaneseq
        %v6123 = vshrl.u32 %v6122, 7
        %v6124 = vsub.s32 %v6121, %v6123
        %v6125 = vrot.slane %v428, %v6124
        %v6127 = vunpack.c.l.s4 1983009808
        %v6128 = vunpack.c.0.s8 %v6127
        %v6129 = vlaneseq
        %v6130 = vshrl.u32 %v6129, 7
        %v6131 = vsub.s32 %v6128, %v6130
        %v6132 = vrot.slane %v6118, %v6131
        %v6133 = vcombine.high %v6125, %v6125
        %v6134 = vcombine.high %v6132, %v6132
        %v6135 = vcombine.high %v429, %v429
        %v6137 = vunpack.c.l.s4 1983009808
        %v6138 = vunpack.c.0.s8 %v6137
        %v6139 = vlaneseq
        %v6140 = vshrl.u32 %v6139, 7
        %v6141 = vsub.s32 %v6138, %v6140
        %v6142 = vrot.slane %v429, %v6141
        %v6144 = vunpack.c.l.s4 1983009808
        %v6145 = vunpack.c.0.s8 %v6144
        %v6146 = vlaneseq
        %v6147 = vshrl.u32 %v6146, 7
        %v6148 = vsub.s32 %v6145, %v6147
        %v6149 = vrot.slane %v6135, %v6148
        %v6150 = vcombine.high %v6142, %v6142
        %v6151 = vcombine.high %v6149, %v6149
        %v6152 = vcombine.high %v430, %v430
        %v6154 = vunpack.c.l.s4 1983009808
        %v6155 = vunpack.c.0.s8 %v6154
        %v6156 = vlaneseq
        %v6157 = vshrl.u32 %v6156, 7
        %v6158 = vsub.s32 %v6155, %v6157
        %v6159 = vrot.slane %v430, %v6158
        %v6161 = vunpack.c.l.s4 1983009808
        %v6162 = vunpack.c.0.s8 %v6161
        %v6163 = vlaneseq
        %v6164 = vshrl.u32 %v6163, 7
        %v6165 = vsub.s32 %v6162, %v6164
        %v6166 = vrot.slane %v6152, %v6165
        %v6167 = vcombine.high %v6159, %v6159
        %v6168 = vcombine.high %v6166, %v6166
        %v6169 = vcombine.high %v431, %v431
        %v6171 = vunpack.c.l.s4 1983009808
        %v6172 = vunpack.c.0.s8 %v6171
        %v6173 = vlaneseq
        %v6174 = vshrl.u32 %v6173, 7
        %v6175 = vsub.s32 %v6172, %v6174
        %v6176 = vrot.slane %v431, %v6175
        %v6178 = vunpack.c.l.s4 1983009808
        %v6179 = vunpack.c.0.s8 %v6178
        %v6180 = vlaneseq
        %v6181 = vshrl.u32 %v6180, 7
        %v6182 = vsub.s32 %v6179, %v6181
        %v6183 = vrot.slane %v6169, %v6182
        %v6184 = vcombine.high %v6176, %v6176
        %v6185 = vcombine.high %v6183, %v6183
        %v6186 = vcombine.high %v432, %v432
        %v6188 = vunpack.c.l.s4 1983009808
        %v6189 = vunpack.c.0.s8 %v6188
        %v6190 = vlaneseq
        %v6191 = vshrl.u32 %v6190, 7
        %v6192 = vsub.s32 %v6189, %v6191
        %v6193 = vrot.slane %v432, %v6192
        %v6195 = vunpack.c.l.s4 1983009808
        %v6196 = vunpack.c.0.s8 %v6195
        %v6197 = vlaneseq
        %v6198 = vshrl.u32 %v6197, 7
        %v6199 = vsub.s32 %v6196, %v6198
        %v6200 = vrot.slane %v6186, %v6199
        %v6201 = vcombine.high %v6193, %v6193
        %v6202 = vcombine.high %v6200, %v6200
        %v6203 = vcombine.high %v433, %v433
        %v6205 = vunpack.c.l.s4 1983009808
        %v6206 = vunpack.c.0.s8 %v6205
        %v6207 = vlaneseq
        %v6208 = vshrl.u32 %v6207, 7
        %v6209 = vsub.s32 %v6206, %v6208
        %v6210 = vrot.slane %v433, %v6209
        %v6212 = vunpack.c.l.s4 1983009808
        %v6213 = vunpack.c.0.s8 %v6212
        %v6214 = vlaneseq
        %v6215 = vshrl.u32 %v6214, 7
        %v6216 = vsub.s32 %v6213, %v6215
        %v6217 = vrot.slane %v6203, %v6216
        %v6218 = vcombine.high %v6210, %v6210
        %v6219 = vcombine.high %v6217, %v6217
        %v6220 = vcombine.high %v450, %v450
        %v6222 = vunpack.c.l.s4 1983009808
        %v6223 = vunpack.c.0.s8 %v6222
        %v6224 = vlaneseq
        %v6225 = vshrl.u32 %v6224, 7
        %v6226 = vsub.s32 %v6223, %v6225
        %v6227 = vrot.slane %v450, %v6226
        %v6229 = vunpack.c.l.s4 1983009808
        %v6230 = vunpack.c.0.s8 %v6229
        %v6231 = vlaneseq
        %v6232 = vshrl.u32 %v6231, 7
        %v6233 = vsub.s32 %v6230, %v6232
        %v6234 = vrot.slane %v6220, %v6233
        %v6235 = vcombine.high %v6227, %v6227
        %v6236 = vcombine.high %v6234, %v6234
        %v6237 = vcombine.high %v451, %v451
        %v6239 = vunpack.c.l.s4 1983009808
        %v6240 = vunpack.c.0.s8 %v6239
        %v6241 = vlaneseq
        %v6242 = vshrl.u32 %v6241, 7
        %v6243 = vsub.s32 %v6240, %v6242
        %v6244 = vrot.slane %v451, %v6243
        %v6246 = vunpack.c.l.s4 1983009808
        %v6247 = vunpack.c.0.s8 %v6246
        %v6248 = vlaneseq
        %v6249 = vshrl.u32 %v6248, 7
        %v6250 = vsub.s32 %v6247, %v6249
        %v6251 = vrot.slane %v6237, %v6250
        %v6252 = vcombine.high %v6244, %v6244
        %v6253 = vcombine.high %v6251, %v6251
        %v6254 = vcombine.high %v452, %v452
        %v6256 = vunpack.c.l.s4 1983009808
        %v6257 = vunpack.c.0.s8 %v6256
        %v6258 = vlaneseq
        %v6259 = vshrl.u32 %v6258, 7
        %v6260 = vsub.s32 %v6257, %v6259
        %v6261 = vrot.slane %v452, %v6260
        %v6263 = vunpack.c.l.s4 1983009808
        %v6264 = vunpack.c.0.s8 %v6263
        %v6265 = vlaneseq
        %v6266 = vshrl.u32 %v6265, 7
        %v6267 = vsub.s32 %v6264, %v6266
        %v6268 = vrot.slane %v6254, %v6267
        %v6269 = vcombine.high %v6261, %v6261
        %v6270 = vcombine.high %v6268, %v6268
        %v6271 = vcombine.high %v453, %v453
        %v6273 = vunpack.c.l.s4 1983009808
        %v6274 = vunpack.c.0.s8 %v6273
        %v6275 = vlaneseq
        %v6276 = vshrl.u32 %v6275, 7
        %v6277 = vsub.s32 %v6274, %v6276
        %v6278 = vrot.slane %v453, %v6277
        %v6280 = vunpack.c.l.s4 1983009808
        %v6281 = vunpack.c.0.s8 %v6280
        %v6282 = vlaneseq
        %v6283 = vshrl.u32 %v6282, 7
        %v6284 = vsub.s32 %v6281, %v6283
        %v6285 = vrot.slane %v6271, %v6284
        %v6286 = vcombine.high %v6278, %v6278
        %v6287 = vcombine.high %v6285, %v6285
        %v6288 = vcombine.high %v454, %v454
        %v6290 = vunpack.c.l.s4 1983009808
        %v6291 = vunpack.c.0.s8 %v6290
        %v6292 = vlaneseq
        %v6293 = vshrl.u32 %v6292, 7
        %v6294 = vsub.s32 %v6291, %v6293
        %v6295 = vrot.slane %v454, %v6294
        %v6297 = vunpack.c.l.s4 1983009808
        %v6298 = vunpack.c.0.s8 %v6297
        %v6299 = vlaneseq
        %v6300 = vshrl.u32 %v6299, 7
        %v6301 = vsub.s32 %v6298, %v6300
        %v6302 = vrot.slane %v6288, %v6301
        %v6303 = vcombine.high %v6295, %v6295
        %v6304 = vcombine.high %v6302, %v6302
        %v6305 = vcombine.high %v455, %v455
        %v6307 = vunpack.c.l.s4 1983009808
        %v6308 = vunpack.c.0.s8 %v6307
        %v6309 = vlaneseq
        %v6310 = vshrl.u32 %v6309, 7
        %v6311 = vsub.s32 %v6308, %v6310
        %v6312 = vrot.slane %v455, %v6311
        %v6314 = vunpack.c.l.s4 1983009808
        %v6315 = vunpack.c.0.s8 %v6314
        %v6316 = vlaneseq
        %v6317 = vshrl.u32 %v6316, 7
        %v6318 = vsub.s32 %v6315, %v6317
        %v6319 = vrot.slane %v6305, %v6318
        %v6320 = vcombine.high %v6312, %v6312
        %v6321 = vcombine.high %v6319, %v6319
        %v6322 = vcombine.high %v456, %v456
        %v6324 = vunpack.c.l.s4 1983009808
        %v6325 = vunpack.c.0.s8 %v6324
        %v6326 = vlaneseq
        %v6327 = vshrl.u32 %v6326, 7
        %v6328 = vsub.s32 %v6325, %v6327
        %v6329 = vrot.slane %v456, %v6328
        %v6331 = vunpack.c.l.s4 1983009808
        %v6332 = vunpack.c.0.s8 %v6331
        %v6333 = vlaneseq
        %v6334 = vshrl.u32 %v6333, 7
        %v6335 = vsub.s32 %v6332, %v6334
        %v6336 = vrot.slane %v6322, %v6335
        %v6337 = vcombine.high %v6329, %v6329
        %v6338 = vcombine.high %v6336, %v6336
        %v6339 = vcombine.high %v457, %v457
        %v6341 = vunpack.c.l.s4 1983009808
        %v6342 = vunpack.c.0.s8 %v6341
        %v6343 = vlaneseq
        %v6344 = vshrl.u32 %v6343, 7
        %v6345 = vsub.s32 %v6342, %v6344
        %v6346 = vrot.slane %v457, %v6345
        %v6348 = vunpack.c.l.s4 1983009808
        %v6349 = vunpack.c.0.s8 %v6348
        %v6350 = vlaneseq
        %v6351 = vshrl.u32 %v6350, 7
        %v6352 = vsub.s32 %v6349, %v6351
        %v6353 = vrot.slane %v6339, %v6352
        %v6354 = vcombine.high %v6346, %v6346
        %v6355 = vcombine.high %v6353, %v6353
        %v6356 = vcombine.high %v458, %v458
        %v6358 = vunpack.c.l.s4 1983009808
        %v6359 = vunpack.c.0.s8 %v6358
        %v6360 = vlaneseq
        %v6361 = vshrl.u32 %v6360, 7
        %v6362 = vsub.s32 %v6359, %v6361
        %v6363 = vrot.slane %v458, %v6362
        %v6365 = vunpack.c.l.s4 1983009808
        %v6366 = vunpack.c.0.s8 %v6365
        %v6367 = vlaneseq
        %v6368 = vshrl.u32 %v6367, 7
        %v6369 = vsub.s32 %v6366, %v6368
        %v6370 = vrot.slane %v6356, %v6369
        %v6371 = vcombine.high %v6363, %v6363
        %v6372 = vcombine.high %v6370, %v6370
        %v6373 = vcombine.high %v459, %v459
        %v6375 = vunpack.c.l.s4 1983009808
        %v6376 = vunpack.c.0.s8 %v6375
        %v6377 = vlaneseq
        %v6378 = vshrl.u32 %v6377, 7
        %v6379 = vsub.s32 %v6376, %v6378
        %v6380 = vrot.slane %v459, %v6379
        %v6382 = vunpack.c.l.s4 1983009808
        %v6383 = vunpack.c.0.s8 %v6382
        %v6384 = vlaneseq
        %v6385 = vshrl.u32 %v6384, 7
        %v6386 = vsub.s32 %v6383, %v6385
        %v6387 = vrot.slane %v6373, %v6386
        %v6388 = vcombine.high %v6380, %v6380
        %v6389 = vcombine.high %v6387, %v6387
        %v6390 = vcombine.high %v460, %v460
        %v6392 = vunpack.c.l.s4 1983009808
        %v6393 = vunpack.c.0.s8 %v6392
        %v6394 = vlaneseq
        %v6395 = vshrl.u32 %v6394, 7
        %v6396 = vsub.s32 %v6393, %v6395
        %v6397 = vrot.slane %v460, %v6396
        %v6399 = vunpack.c.l.s4 1983009808
        %v6400 = vunpack.c.0.s8 %v6399
        %v6401 = vlaneseq
        %v6402 = vshrl.u32 %v6401, 7
        %v6403 = vsub.s32 %v6400, %v6402
        %v6404 = vrot.slane %v6390, %v6403
        %v6405 = vcombine.high %v6397, %v6397
        %v6406 = vcombine.high %v6404, %v6404
        %v6407 = vcombine.high %v461, %v461
        %v6409 = vunpack.c.l.s4 1983009808
        %v6410 = vunpack.c.0.s8 %v6409
        %v6411 = vlaneseq
        %v6412 = vshrl.u32 %v6411, 7
        %v6413 = vsub.s32 %v6410, %v6412
        %v6414 = vrot.slane %v461, %v6413
        %v6416 = vunpack.c.l.s4 1983009808
        %v6417 = vunpack.c.0.s8 %v6416
        %v6418 = vlaneseq
        %v6419 = vshrl.u32 %v6418, 7
        %v6420 = vsub.s32 %v6417, %v6419
        %v6421 = vrot.slane %v6407, %v6420
        %v6422 = vcombine.high %v6414, %v6414
        %v6423 = vcombine.high %v6421, %v6421
        %v6424 = vcombine.high %v462, %v462
        %v6426 = vunpack.c.l.s4 1983009808
        %v6427 = vunpack.c.0.s8 %v6426
        %v6428 = vlaneseq
        %v6429 = vshrl.u32 %v6428, 7
        %v6430 = vsub.s32 %v6427, %v6429
        %v6431 = vrot.slane %v462, %v6430
        %v6433 = vunpack.c.l.s4 1983009808
        %v6434 = vunpack.c.0.s8 %v6433
        %v6435 = vlaneseq
        %v6436 = vshrl.u32 %v6435, 7
        %v6437 = vsub.s32 %v6434, %v6436
        %v6438 = vrot.slane %v6424, %v6437
        %v6439 = vcombine.high %v6431, %v6431
        %v6440 = vcombine.high %v6438, %v6438
        %v6441 = vcombine.high %v463, %v463
        %v6443 = vunpack.c.l.s4 1983009808
        %v6444 = vunpack.c.0.s8 %v6443
        %v6445 = vlaneseq
        %v6446 = vshrl.u32 %v6445, 7
        %v6447 = vsub.s32 %v6444, %v6446
        %v6448 = vrot.slane %v463, %v6447
        %v6450 = vunpack.c.l.s4 1983009808
        %v6451 = vunpack.c.0.s8 %v6450
        %v6452 = vlaneseq
        %v6453 = vshrl.u32 %v6452, 7
        %v6454 = vsub.s32 %v6451, %v6453
        %v6455 = vrot.slane %v6441, %v6454
        %v6456 = vcombine.high %v6448, %v6448
        %v6457 = vcombine.high %v6455, %v6455
        %v6458 = vcombine.high %v464, %v464
        %v6460 = vunpack.c.l.s4 1983009808
        %v6461 = vunpack.c.0.s8 %v6460
        %v6462 = vlaneseq
        %v6463 = vshrl.u32 %v6462, 7
        %v6464 = vsub.s32 %v6461, %v6463
        %v6465 = vrot.slane %v464, %v6464
        %v6467 = vunpack.c.l.s4 1983009808
        %v6468 = vunpack.c.0.s8 %v6467
        %v6469 = vlaneseq
        %v6470 = vshrl.u32 %v6469, 7
        %v6471 = vsub.s32 %v6468, %v6470
        %v6472 = vrot.slane %v6458, %v6471
        %v6473 = vcombine.high %v6465, %v6465
        %v6474 = vcombine.high %v6472, %v6472
        %v6475 = vcombine.high %v465, %v465
        %v6477 = vunpack.c.l.s4 1983009808
        %v6478 = vunpack.c.0.s8 %v6477
        %v6479 = vlaneseq
        %v6480 = vshrl.u32 %v6479, 7
        %v6481 = vsub.s32 %v6478, %v6480
        %v6482 = vrot.slane %v465, %v6481
        %v6484 = vunpack.c.l.s4 1983009808
        %v6485 = vunpack.c.0.s8 %v6484
        %v6486 = vlaneseq
        %v6487 = vshrl.u32 %v6486, 7
        %v6488 = vsub.s32 %v6485, %v6487
        %v6489 = vrot.slane %v6475, %v6488
        %v6490 = vcombine.high %v6482, %v6482
        %v6491 = vcombine.high %v6489, %v6489
        %v6620 = vadd.f32 %v5191, %v5955
        %v6621 = vadd.f32 %v5199, %v5963
        %v6622 = vadd.f32 %v5198, %v5962
        %v6623 = vadd.f32 %v5200, %v5964
        %v6624 = vadd.f32 %v5208, %v5972
        %v6625 = vadd.f32 %v5216, %v5980
        %v6626 = vadd.f32 %v5215, %v5979
        %v6627 = vadd.f32 %v5217, %v5981
        %v6628 = vadd.f32 %v5233, %v5989
        %v6629 = vadd.f32 %v5232, %v5997
        %v6630 = vadd.f32 %v5234, %v5996
        %v6631 = vadd.f32 %v5242, %v5998
        %v6632 = vadd.f32 %v5250, %v6006
        %v6633 = vadd.f32 %v5249, %v6014
        %v6634 = vadd.f32 %v5251, %v6013
        %v6635 = vadd.f32 %v5259, %v6015
        %v6636 = vadd.f32 %v5266, %v6023
        %v6637 = vadd.f32 %v5267, %v6031
        %v6638 = vadd.f32 %v5275, %v6030
        %v6639 = vadd.f32 %v5283, %v6032
        %v6640 = vadd.f32 %v5282, %v6040
        %v6641 = vadd.f32 %v5284, %v6048
        %v6642 = vadd.f32 %v5292, %v6047
        %v6643 = vadd.f32 %v5300, %v6049
        %v6644 = vadd.f32 %v5301, %v6057
        %v6645 = vadd.f32 %v5309, %v6065
        %v6646 = vadd.f32 %v5317, %v6064
        %v6647 = vadd.f32 %v5316, %v6066
        %v6648 = vadd.f32 %v5318, %v6074
        %v6649 = vadd.f32 %v5326, %v6082
        %v6650 = vadd.f32 %v5334, %v6081
        %v6651 = vadd.f32 %v5333, %v6083
        %v6652 = vadd.f32 %v5342, %v6091
        %v6653 = vadd.f32 %v5350, %v6099
        %v6654 = vadd.f32 %v5349, %v6098
        %v6655 = vadd.f32 %v5351, %v6100
        %v6656 = vadd.f32 %v5359, %v6108
        %v6657 = vadd.f32 %v5367, %v6116
        %v6658 = vadd.f32 %v5366, %v6115
        %v6659 = vadd.f32 %v5368, %v6117
        %v6660 = vadd.f32 %v5384, %v6125
        %v6661 = vadd.f32 %v5383, %v6133
        %v6662 = vadd.f32 %v5385, %v6132
        %v6663 = vadd.f32 %v5393, %v6134
        %v6664 = vadd.f32 %v5401, %v6142
        %v6665 = vadd.f32 %v5400, %v6150
        %v6666 = vadd.f32 %v5402, %v6149
        %v6667 = vadd.f32 %v5410, %v6151
        %v6668 = vadd.f32 %v5417, %v6159
        %v6669 = vadd.f32 %v5418, %v6167
        %v6670 = vadd.f32 %v5426, %v6166
        %v6671 = vadd.f32 %v5434, %v6168
        %v6672 = vadd.f32 %v5433, %v6176
        %v6673 = vadd.f32 %v5435, %v6184
        %v6674 = vadd.f32 %v5443, %v6183
        %v6675 = vadd.f32 %v5451, %v6185
        %v6676 = vadd.f32 %v5452, %v6193
        %v6677 = vadd.f32 %v5460, %v6201
        %v6678 = vadd.f32 %v5468, %v6200
        %v6679 = vadd.f32 %v5467, %v6202
        %v6680 = vadd.f32 %v5469, %v6210
        %v6681 = vadd.f32 %v5477, %v6218
        %v6682 = vadd.f32 %v5485, %v6217
        %v6683 = vadd.f32 %v5484, %v6219
        %v6684 = vadd.f32 %v5493, %v6227
        %v6685 = vadd.f32 %v5501, %v6235
        %v6686 = vadd.f32 %v5500, %v6234
        %v6687 = vadd.f32 %v5502, %v6236
        %v6688 = vadd.f32 %v5510, %v6244
        %v6689 = vadd.f32 %v5518, %v6252
        %v6690 = vadd.f32 %v5517, %v6251
        %v6691 = vadd.f32 %v5519, %v6253
        %v6692 = vadd.f32 %v5535, %v6261
        %v6693 = vadd.f32 %v5534, %v6269
        %v6694 = vadd.f32 %v5536, %v6268
        %v6695 = vadd.f32 %v5544, %v6270
        %v6696 = vadd.f32 %v5552, %v6278
        %v6697 = vadd.f32 %v5551, %v6286
        %v6698 = vadd.f32 %v5553, %v6285
        %v6699 = vadd.f32 %v5561, %v6287
        %v6700 = vadd.f32 %v5568, %v6295
        %v6701 = vadd.f32 %v5569, %v6303
        %v6702 = vadd.f32 %v5577, %v6302
        %v6703 = vadd.f32 %v5585, %v6304
        %v6704 = vadd.f32 %v5584, %v6312
        %v6705 = vadd.f32 %v5586, %v6320
        %v6706 = vadd.f32 %v5594, %v6319
        %v6707 = vadd.f32 %v5602, %v6321
        %v6708 = vadd.f32 %v5603, %v6329
        %v6709 = vadd.f32 %v5611, %v6337
        %v6710 = vadd.f32 %v5619, %v6336
        %v6711 = vadd.f32 %v5618, %v6338
        %v6712 = vadd.f32 %v5620, %v6346
        %v6713 = vadd.f32 %v5628, %v6354
        %v6714 = vadd.f32 %v5636, %v6353
        %v6715 = vadd.f32 %v5635, %v6355
        %v6716 = vadd.f32 %v5644, %v6363
        %v6717 = vadd.f32 %v5652, %v6371
        %v6718 = vadd.f32 %v5651, %v6370
        %v6719 = vadd.f32 %v5653, %v6372
        %v6720 = vadd.f32 %v5661, %v6380
        %v6721 = vadd.f32 %v5669, %v6388
        %v6722 = vadd.f32 %v5668, %v6387
        %v6723 = vadd.f32 %v5670, %v6389
        %v6724 = vadd.f32 %v5686, %v6397
        %v6725 = vadd.f32 %v5685, %v6405
        %v6726 = vadd.f32 %v5687, %v6404
        %v6727 = vadd.f32 %v5695, %v6406
        %v6728 = vadd.f32 %v5703, %v6414
        %v6729 = vadd.f32 %v5702, %v6422
        %v6730 = vadd.f32 %v5704, %v6421
        %v6731 = vadd.f32 %v5712, %v6423
        %v6732 = vadd.f32 %v5719, %v6431
        %v6733 = vadd.f32 %v5720, %v6439
        %v6734 = vadd.f32 %v5728, %v6438
        %v6735 = vadd.f32 %v5736, %v6440
        %v6736 = vadd.f32 %v5735, %v6448
        %v6737 = vadd.f32 %v5737, %v6456
        %v6738 = vadd.f32 %v5745, %v6455
        %v6739 = vadd.f32 %v5753, %v6457
        %v6740 = vadd.f32 %v5754, %v6465
        %v6741 = vadd.f32 %v5762, %v6473
        %v6742 = vadd.f32 %v5770, %v6472
        %v6743 = vadd.f32 %v5769, %v6474
        %v6744 = vadd.f32 %v5771, %v6482
        %v6745 = vadd.f32 %v5779, %v6490
        %v6746 = vadd.f32 %v5787, %v6489
        %v6747 = vadd.f32 %v5786, %v6491
        %v6748 = vmax.f32 %v6620, 0.0
        %v6749 = vmax.f32 %v6621, 0.0
        %v6750 = vmax.f32 %v6622, 0.0
        %v6751 = vmax.f32 %v6623, 0.0
        %v6752 = vmax.f32 %v6624, 0.0
        %v6753 = vmax.f32 %v6625, 0.0
        %v6754 = vmax.f32 %v6626, 0.0
        %v6755 = vmax.f32 %v6627, 0.0
        %v6756 = vmax.f32 %v6628, 0.0
        %v6757 = vmax.f32 %v6629, 0.0
        %v6758 = vmax.f32 %v6630, 0.0
        %v6759 = vmax.f32 %v6631, 0.0
        %v6760 = vmax.f32 %v6632, 0.0
        %v6761 = vmax.f32 %v6633, 0.0
        %v6762 = vmax.f32 %v6634, 0.0
        %v6763 = vmax.f32 %v6635, 0.0
        %v6764 = vmax.f32 %v6636, 0.0
        %v6765 = vmax.f32 %v6637, 0.0
        %v6766 = vmax.f32 %v6638, 0.0
        %v6767 = vmax.f32 %v6639, 0.0
        %v6768 = vmax.f32 %v6640, 0.0
        %v6769 = vmax.f32 %v6641, 0.0
        %v6770 = vmax.f32 %v6642, 0.0
        %v6771 = vmax.f32 %v6643, 0.0
        %v6772 = vmax.f32 %v6644, 0.0
        %v6773 = vmax.f32 %v6645, 0.0
        %v6774 = vmax.f32 %v6646, 0.0
        %v6775 = vmax.f32 %v6647, 0.0
        %v6776 = vmax.f32 %v6648, 0.0
        %v6777 = vmax.f32 %v6649, 0.0
        %v6778 = vmax.f32 %v6650, 0.0
        %v6779 = vmax.f32 %v6651, 0.0
        %v6780 = vmax.f32 %v6652, 0.0
        %v6781 = vmax.f32 %v6653, 0.0
        %v6782 = vmax.f32 %v6654, 0.0
        %v6783 = vmax.f32 %v6655, 0.0
        %v6784 = vmax.f32 %v6656, 0.0
        %v6785 = vmax.f32 %v6657, 0.0
        %v6786 = vmax.f32 %v6658, 0.0
        %v6787 = vmax.f32 %v6659, 0.0
        %v6788 = vmax.f32 %v6660, 0.0
        %v6789 = vmax.f32 %v6661, 0.0
        %v6790 = vmax.f32 %v6662, 0.0
        %v6791 = vmax.f32 %v6663, 0.0
        %v6792 = vmax.f32 %v6664, 0.0
        %v6793 = vmax.f32 %v6665, 0.0
        %v6794 = vmax.f32 %v6666, 0.0
        %v6795 = vmax.f32 %v6667, 0.0
        %v6796 = vmax.f32 %v6668, 0.0
        %v6797 = vmax.f32 %v6669, 0.0
        %v6798 = vmax.f32 %v6670, 0.0
        %v6799 = vmax.f32 %v6671, 0.0
        %v6800 = vmax.f32 %v6672, 0.0
        %v6801 = vmax.f32 %v6673, 0.0
        %v6802 = vmax.f32 %v6674, 0.0
        %v6803 = vmax.f32 %v6675, 0.0
        %v6804 = vmax.f32 %v6676, 0.0
        %v6805 = vmax.f32 %v6677, 0.0
        %v6806 = vmax.f32 %v6678, 0.0
        %v6807 = vmax.f32 %v6679, 0.0
        %v6808 = vmax.f32 %v6680, 0.0
        %v6809 = vmax.f32 %v6681, 0.0
        %v6810 = vmax.f32 %v6682, 0.0
        %v6811 = vmax.f32 %v6683, 0.0
        %v6812 = vmax.f32 %v6684, 0.0
        %v6813 = vmax.f32 %v6685, 0.0
        %v6814 = vmax.f32 %v6686, 0.0
        %v6815 = vmax.f32 %v6687, 0.0
        %v6816 = vmax.f32 %v6688, 0.0
        %v6817 = vmax.f32 %v6689, 0.0
        %v6818 = vmax.f32 %v6690, 0.0
        %v6819 = vmax.f32 %v6691, 0.0
        %v6820 = vmax.f32 %v6692, 0.0
        %v6821 = vmax.f32 %v6693, 0.0
        %v6822 = vmax.f32 %v6694, 0.0
        %v6823 = vmax.f32 %v6695, 0.0
        %v6824 = vmax.f32 %v6696, 0.0
        %v6825 = vmax.f32 %v6697, 0.0
        %v6826 = vmax.f32 %v6698, 0.0
        %v6827 = vmax.f32 %v6699, 0.0
        %v6828 = vmax.f32 %v6700, 0.0
        %v6829 = vmax.f32 %v6701, 0.0
        %v6830 = vmax.f32 %v6702, 0.0
        %v6831 = vmax.f32 %v6703, 0.0
        %v6832 = vmax.f32 %v6704, 0.0
        %v6833 = vmax.f32 %v6705, 0.0
        %v6834 = vmax.f32 %v6706, 0.0
        %v6835 = vmax.f32 %v6707, 0.0
        %v6836 = vmax.f32 %v6708, 0.0
        %v6837 = vmax.f32 %v6709, 0.0
        %v6838 = vmax.f32 %v6710, 0.0
        %v6839 = vmax.f32 %v6711, 0.0
        %v6840 = vmax.f32 %v6712, 0.0
        %v6841 = vmax.f32 %v6713, 0.0
        %v6842 = vmax.f32 %v6714, 0.0
        %v6843 = vmax.f32 %v6715, 0.0
        %v6844 = vmax.f32 %v6716, 0.0
        %v6845 = vmax.f32 %v6717, 0.0
        %v6846 = vmax.f32 %v6718, 0.0
        %v6847 = vmax.f32 %v6719, 0.0
        %v6848 = vmax.f32 %v6720, 0.0
        %v6849 = vmax.f32 %v6721, 0.0
        %v6850 = vmax.f32 %v6722, 0.0
        %v6851 = vmax.f32 %v6723, 0.0
        %v6852 = vmax.f32 %v6724, 0.0
        %v6853 = vmax.f32 %v6725, 0.0
        %v6854 = vmax.f32 %v6726, 0.0
        %v6855 = vmax.f32 %v6727, 0.0
        %v6856 = vmax.f32 %v6728, 0.0
        %v6857 = vmax.f32 %v6729, 0.0
        %v6858 = vmax.f32 %v6730, 0.0
        %v6859 = vmax.f32 %v6731, 0.0
        %v6860 = vmax.f32 %v6732, 0.0
        %v6861 = vmax.f32 %v6733, 0.0
        %v6862 = vmax.f32 %v6734, 0.0
        %v6863 = vmax.f32 %v6735, 0.0
        %v6864 = vmax.f32 %v6736, 0.0
        %v6865 = vmax.f32 %v6737, 0.0
        %v6866 = vmax.f32 %v6738, 0.0
        %v6867 = vmax.f32 %v6739, 0.0
        %v6868 = vmax.f32 %v6740, 0.0
        %v6869 = vmax.f32 %v6741, 0.0
        %v6870 = vmax.f32 %v6742, 0.0
        %v6871 = vmax.f32 %v6743, 0.0
        %v6872 = vmax.f32 %v6744, 0.0
        %v6873 = vmax.f32 %v6745, 0.0
        %v6874 = vmax.f32 %v6746, 0.0
        %v6875 = vmax.f32 %v6747, 0.0
        %v7004 = vcombine.low %v6748, %v6749
        %v7005 = vcombine.low %v6750, %v6751
        %v7007 = vunpack.c.l.s4 1983009808
        %v7008 = vunpack.c.0.s8 %v7007
        %v7009 = vlaneseq
        %v7010 = vshrl.u32 %v7009, 7
        %v7011 = vsub.s32 %v7008, %v7010
        %v7012 = vrot.slane %v7004, %v7011
        %v7014 = vunpack.c.l.s4 1983009808
        %v7015 = vunpack.c.0.s8 %v7014
        %v7016 = vlaneseq
        %v7017 = vshrl.u32 %v7016, 7
        %v7018 = vsub.s32 %v7015, %v7017
        %v7019 = vrot.slane %v7005, %v7018
        %v7020 = vcombine.low %v7012, %v7019
        %v7021 = vcombine.low %v6752, %v6753
        %v7022 = vcombine.low %v6754, %v6755
        %v7024 = vunpack.c.l.s4 1983009808
        %v7025 = vunpack.c.0.s8 %v7024
        %v7026 = vlaneseq
        %v7027 = vshrl.u32 %v7026, 7
        %v7028 = vsub.s32 %v7025, %v7027
        %v7029 = vrot.slane %v7021, %v7028
        %v7031 = vunpack.c.l.s4 1983009808
        %v7032 = vunpack.c.0.s8 %v7031
        %v7033 = vlaneseq
        %v7034 = vshrl.u32 %v7033, 7
        %v7035 = vsub.s32 %v7032, %v7034
        %v7036 = vrot.slane %v7022, %v7035
        %v7037 = vcombine.low %v7029, %v7036
        %v7038 = vcombine.low %v6756, %v6757
        %v7039 = vcombine.low %v6758, %v6759
        %v7041 = vunpack.c.l.s4 1983009808
        %v7042 = vunpack.c.0.s8 %v7041
        %v7043 = vlaneseq
        %v7044 = vshrl.u32 %v7043, 7
        %v7045 = vsub.s32 %v7042, %v7044
        %v7046 = vrot.slane %v7038, %v7045
        %v7048 = vunpack.c.l.s4 1983009808
        %v7049 = vunpack.c.0.s8 %v7048
        %v7050 = vlaneseq
        %v7051 = vshrl.u32 %v7050, 7
        %v7052 = vsub.s32 %v7049, %v7051
        %v7053 = vrot.slane %v7039, %v7052
        %v7054 = vcombine.low %v7046, %v7053
        %v7055 = vcombine.low %v6760, %v6761
        %v7056 = vcombine.low %v6762, %v6763
        %v7058 = vunpack.c.l.s4 1983009808
        %v7059 = vunpack.c.0.s8 %v7058
        %v7060 = vlaneseq
        %v7061 = vshrl.u32 %v7060, 7
        %v7062 = vsub.s32 %v7059, %v7061
        %v7063 = vrot.slane %v7055, %v7062
        %v7065 = vunpack.c.l.s4 1983009808
        %v7066 = vunpack.c.0.s8 %v7065
        %v7067 = vlaneseq
        %v7068 = vshrl.u32 %v7067, 7
        %v7069 = vsub.s32 %v7066, %v7068
        %v7070 = vrot.slane %v7056, %v7069
        %v7071 = vcombine.low %v7063, %v7070
        %v7072 = vcombine.low %v6764, %v6765
        %v7073 = vcombine.low %v6766, %v6767
        %v7075 = vunpack.c.l.s4 1983009808
        %v7076 = vunpack.c.0.s8 %v7075
        %v7077 = vlaneseq
        %v7078 = vshrl.u32 %v7077, 7
        %v7079 = vsub.s32 %v7076, %v7078
        %v7080 = vrot.slane %v7072, %v7079
        %v7082 = vunpack.c.l.s4 1983009808
        %v7083 = vunpack.c.0.s8 %v7082
        %v7084 = vlaneseq
        %v7085 = vshrl.u32 %v7084, 7
        %v7086 = vsub.s32 %v7083, %v7085
        %v7087 = vrot.slane %v7073, %v7086
        %v7088 = vcombine.low %v7080, %v7087
        %v7089 = vcombine.low %v6768, %v6769
        %v7090 = vcombine.low %v6770, %v6771
        %v7092 = vunpack.c.l.s4 1983009808
        %v7093 = vunpack.c.0.s8 %v7092
        %v7094 = vlaneseq
        %v7095 = vshrl.u32 %v7094, 7
        %v7096 = vsub.s32 %v7093, %v7095
        %v7097 = vrot.slane %v7089, %v7096
        %v7099 = vunpack.c.l.s4 1983009808
        %v7100 = vunpack.c.0.s8 %v7099
        %v7101 = vlaneseq
        %v7102 = vshrl.u32 %v7101, 7
        %v7103 = vsub.s32 %v7100, %v7102
        %v7104 = vrot.slane %v7090, %v7103
        %v7105 = vcombine.low %v7097, %v7104
        %v7106 = vcombine.low %v6772, %v6773
        %v7107 = vcombine.low %v6774, %v6775
        %v7109 = vunpack.c.l.s4 1983009808
        %v7110 = vunpack.c.0.s8 %v7109
        %v7111 = vlaneseq
        %v7112 = vshrl.u32 %v7111, 7
        %v7113 = vsub.s32 %v7110, %v7112
        %v7114 = vrot.slane %v7106, %v7113
        %v7116 = vunpack.c.l.s4 1983009808
        %v7117 = vunpack.c.0.s8 %v7116
        %v7118 = vlaneseq
        %v7119 = vshrl.u32 %v7118, 7
        %v7120 = vsub.s32 %v7117, %v7119
        %v7121 = vrot.slane %v7107, %v7120
        %v7122 = vcombine.low %v7114, %v7121
        %v7123 = vcombine.low %v6776, %v6777
        %v7124 = vcombine.low %v6778, %v6779
        %v7126 = vunpack.c.l.s4 1983009808
        %v7127 = vunpack.c.0.s8 %v7126
        %v7128 = vlaneseq
        %v7129 = vshrl.u32 %v7128, 7
        %v7130 = vsub.s32 %v7127, %v7129
        %v7131 = vrot.slane %v7123, %v7130
        %v7133 = vunpack.c.l.s4 1983009808
        %v7134 = vunpack.c.0.s8 %v7133
        %v7135 = vlaneseq
        %v7136 = vshrl.u32 %v7135, 7
        %v7137 = vsub.s32 %v7134, %v7136
        %v7138 = vrot.slane %v7124, %v7137
        %v7139 = vcombine.low %v7131, %v7138
        %v7140 = vcombine.low %v6780, %v6781
        %v7141 = vcombine.low %v6782, %v6783
        %v7143 = vunpack.c.l.s4 1983009808
        %v7144 = vunpack.c.0.s8 %v7143
        %v7145 = vlaneseq
        %v7146 = vshrl.u32 %v7145, 7
        %v7147 = vsub.s32 %v7144, %v7146
        %v7148 = vrot.slane %v7140, %v7147
        %v7150 = vunpack.c.l.s4 1983009808
        %v7151 = vunpack.c.0.s8 %v7150
        %v7152 = vlaneseq
        %v7153 = vshrl.u32 %v7152, 7
        %v7154 = vsub.s32 %v7151, %v7153
        %v7155 = vrot.slane %v7141, %v7154
        %v7156 = vcombine.low %v7148, %v7155
        %v7157 = vcombine.low %v6784, %v6785
        %v7158 = vcombine.low %v6786, %v6787
        %v7160 = vunpack.c.l.s4 1983009808
        %v7161 = vunpack.c.0.s8 %v7160
        %v7162 = vlaneseq
        %v7163 = vshrl.u32 %v7162, 7
        %v7164 = vsub.s32 %v7161, %v7163
        %v7165 = vrot.slane %v7157, %v7164
        %v7167 = vunpack.c.l.s4 1983009808
        %v7168 = vunpack.c.0.s8 %v7167
        %v7169 = vlaneseq
        %v7170 = vshrl.u32 %v7169, 7
        %v7171 = vsub.s32 %v7168, %v7170
        %v7172 = vrot.slane %v7158, %v7171
        %v7173 = vcombine.low %v7165, %v7172
        %v7174 = vcombine.low %v6788, %v6789
        %v7175 = vcombine.low %v6790, %v6791
        %v7177 = vunpack.c.l.s4 1983009808
        %v7178 = vunpack.c.0.s8 %v7177
        %v7179 = vlaneseq
        %v7180 = vshrl.u32 %v7179, 7
        %v7181 = vsub.s32 %v7178, %v7180
        %v7182 = vrot.slane %v7174, %v7181
        %v7184 = vunpack.c.l.s4 1983009808
        %v7185 = vunpack.c.0.s8 %v7184
        %v7186 = vlaneseq
        %v7187 = vshrl.u32 %v7186, 7
        %v7188 = vsub.s32 %v7185, %v7187
        %v7189 = vrot.slane %v7175, %v7188
        %v7190 = vcombine.low %v7182, %v7189
        %v7191 = vcombine.low %v6792, %v6793
        %v7192 = vcombine.low %v6794, %v6795
        %v7194 = vunpack.c.l.s4 1983009808
        %v7195 = vunpack.c.0.s8 %v7194
        %v7196 = vlaneseq
        %v7197 = vshrl.u32 %v7196, 7
        %v7198 = vsub.s32 %v7195, %v7197
        %v7199 = vrot.slane %v7191, %v7198
        %v7201 = vunpack.c.l.s4 1983009808
        %v7202 = vunpack.c.0.s8 %v7201
        %v7203 = vlaneseq
        %v7204 = vshrl.u32 %v7203, 7
        %v7205 = vsub.s32 %v7202, %v7204
        %v7206 = vrot.slane %v7192, %v7205
        %v7207 = vcombine.low %v7199, %v7206
        %v7208 = vcombine.low %v6796, %v6797
        %v7209 = vcombine.low %v6798, %v6799
        %v7211 = vunpack.c.l.s4 1983009808
        %v7212 = vunpack.c.0.s8 %v7211
        %v7213 = vlaneseq
        %v7214 = vshrl.u32 %v7213, 7
        %v7215 = vsub.s32 %v7212, %v7214
        %v7216 = vrot.slane %v7208, %v7215
        %v7218 = vunpack.c.l.s4 1983009808
        %v7219 = vunpack.c.0.s8 %v7218
        %v7220 = vlaneseq
        %v7221 = vshrl.u32 %v7220, 7
        %v7222 = vsub.s32 %v7219, %v7221
        %v7223 = vrot.slane %v7209, %v7222
        %v7224 = vcombine.low %v7216, %v7223
        %v7225 = vcombine.low %v6800, %v6801
        %v7226 = vcombine.low %v6802, %v6803
        %v7228 = vunpack.c.l.s4 1983009808
        %v7229 = vunpack.c.0.s8 %v7228
        %v7230 = vlaneseq
        %v7231 = vshrl.u32 %v7230, 7
        %v7232 = vsub.s32 %v7229, %v7231
        %v7233 = vrot.slane %v7225, %v7232
        %v7235 = vunpack.c.l.s4 1983009808
        %v7236 = vunpack.c.0.s8 %v7235
        %v7237 = vlaneseq
        %v7238 = vshrl.u32 %v7237, 7
        %v7239 = vsub.s32 %v7236, %v7238
        %v7240 = vrot.slane %v7226, %v7239
        %v7241 = vcombine.low %v7233, %v7240
        %v7242 = vcombine.low %v6804, %v6805
        %v7243 = vcombine.low %v6806, %v6807
        %v7245 = vunpack.c.l.s4 1983009808
        %v7246 = vunpack.c.0.s8 %v7245
        %v7247 = vlaneseq
        %v7248 = vshrl.u32 %v7247, 7
        %v7249 = vsub.s32 %v7246, %v7248
        %v7250 = vrot.slane %v7242, %v7249
        %v7252 = vunpack.c.l.s4 1983009808
        %v7253 = vunpack.c.0.s8 %v7252
        %v7254 = vlaneseq
        %v7255 = vshrl.u32 %v7254, 7
        %v7256 = vsub.s32 %v7253, %v7255
        %v7257 = vrot.slane %v7243, %v7256
        %v7258 = vcombine.low %v7250, %v7257
        %v7259 = vcombine.low %v6808, %v6809
        %v7260 = vcombine.low %v6810, %v6811
        %v7262 = vunpack.c.l.s4 1983009808
        %v7263 = vunpack.c.0.s8 %v7262
        %v7264 = vlaneseq
        %v7265 = vshrl.u32 %v7264, 7
        %v7266 = vsub.s32 %v7263, %v7265
        %v7267 = vrot.slane %v7259, %v7266
        %v7269 = vunpack.c.l.s4 1983009808
        %v7270 = vunpack.c.0.s8 %v7269
        %v7271 = vlaneseq
        %v7272 = vshrl.u32 %v7271, 7
        %v7273 = vsub.s32 %v7270, %v7272
        %v7274 = vrot.slane %v7260, %v7273
        %v7275 = vcombine.low %v7267, %v7274
        %v7276 = vcombine.low %v6812, %v6813
        %v7277 = vcombine.low %v6814, %v6815
        %v7279 = vunpack.c.l.s4 1983009808
        %v7280 = vunpack.c.0.s8 %v7279
        %v7281 = vlaneseq
        %v7282 = vshrl.u32 %v7281, 7
        %v7283 = vsub.s32 %v7280, %v7282
        %v7284 = vrot.slane %v7276, %v7283
        %v7286 = vunpack.c.l.s4 1983009808
        %v7287 = vunpack.c.0.s8 %v7286
        %v7288 = vlaneseq
        %v7289 = vshrl.u32 %v7288, 7
        %v7290 = vsub.s32 %v7287, %v7289
        %v7291 = vrot.slane %v7277, %v7290
        %v7292 = vcombine.low %v7284, %v7291
        %v7293 = vcombine.low %v6816, %v6817
        %v7294 = vcombine.low %v6818, %v6819
        %v7296 = vunpack.c.l.s4 1983009808
        %v7297 = vunpack.c.0.s8 %v7296
        %v7298 = vlaneseq
        %v7299 = vshrl.u32 %v7298, 7
        %v7300 = vsub.s32 %v7297, %v7299
        %v7301 = vrot.slane %v7293, %v7300
        %v7303 = vunpack.c.l.s4 1983009808
        %v7304 = vunpack.c.0.s8 %v7303
        %v7305 = vlaneseq
        %v7306 = vshrl.u32 %v7305, 7
        %v7307 = vsub.s32 %v7304, %v7306
        %v7308 = vrot.slane %v7294, %v7307
        %v7309 = vcombine.low %v7301, %v7308
        %v7310 = vcombine.low %v6820, %v6821
        %v7311 = vcombine.low %v6822, %v6823
        %v7313 = vunpack.c.l.s4 1983009808
        %v7314 = vunpack.c.0.s8 %v7313
        %v7315 = vlaneseq
        %v7316 = vshrl.u32 %v7315, 7
        %v7317 = vsub.s32 %v7314, %v7316
        %v7318 = vrot.slane %v7310, %v7317
        %v7320 = vunpack.c.l.s4 1983009808
        %v7321 = vunpack.c.0.s8 %v7320
        %v7322 = vlaneseq
        %v7323 = vshrl.u32 %v7322, 7
        %v7324 = vsub.s32 %v7321, %v7323
        %v7325 = vrot.slane %v7311, %v7324
        %v7326 = vcombine.low %v7318, %v7325
        %v7327 = vcombine.low %v6824, %v6825
        %v7328 = vcombine.low %v6826, %v6827
        %v7330 = vunpack.c.l.s4 1983009808
        %v7331 = vunpack.c.0.s8 %v7330
        %v7332 = vlaneseq
        %v7333 = vshrl.u32 %v7332, 7
        %v7334 = vsub.s32 %v7331, %v7333
        %v7335 = vrot.slane %v7327, %v7334
        %v7337 = vunpack.c.l.s4 1983009808
        %v7338 = vunpack.c.0.s8 %v7337
        %v7339 = vlaneseq
        %v7340 = vshrl.u32 %v7339, 7
        %v7341 = vsub.s32 %v7338, %v7340
        %v7342 = vrot.slane %v7328, %v7341
        %v7343 = vcombine.low %v7335, %v7342
        %v7344 = vcombine.low %v6828, %v6829
        %v7345 = vcombine.low %v6830, %v6831
        %v7347 = vunpack.c.l.s4 1983009808
        %v7348 = vunpack.c.0.s8 %v7347
        %v7349 = vlaneseq
        %v7350 = vshrl.u32 %v7349, 7
        %v7351 = vsub.s32 %v7348, %v7350
        %v7352 = vrot.slane %v7344, %v7351
        %v7354 = vunpack.c.l.s4 1983009808
        %v7355 = vunpack.c.0.s8 %v7354
        %v7356 = vlaneseq
        %v7357 = vshrl.u32 %v7356, 7
        %v7358 = vsub.s32 %v7355, %v7357
        %v7359 = vrot.slane %v7345, %v7358
        %v7360 = vcombine.low %v7352, %v7359
        %v7361 = vcombine.low %v6832, %v6833
        %v7362 = vcombine.low %v6834, %v6835
        %v7364 = vunpack.c.l.s4 1983009808
        %v7365 = vunpack.c.0.s8 %v7364
        %v7366 = vlaneseq
        %v7367 = vshrl.u32 %v7366, 7
        %v7368 = vsub.s32 %v7365, %v7367
        %v7369 = vrot.slane %v7361, %v7368
        %v7371 = vunpack.c.l.s4 1983009808
        %v7372 = vunpack.c.0.s8 %v7371
        %v7373 = vlaneseq
        %v7374 = vshrl.u32 %v7373, 7
        %v7375 = vsub.s32 %v7372, %v7374
        %v7376 = vrot.slane %v7362, %v7375
        %v7377 = vcombine.low %v7369, %v7376
        %v7378 = vcombine.low %v6836, %v6837
        %v7379 = vcombine.low %v6838, %v6839
        %v7381 = vunpack.c.l.s4 1983009808
        %v7382 = vunpack.c.0.s8 %v7381
        %v7383 = vlaneseq
        %v7384 = vshrl.u32 %v7383, 7
        %v7385 = vsub.s32 %v7382, %v7384
        %v7386 = vrot.slane %v7378, %v7385
        %v7388 = vunpack.c.l.s4 1983009808
        %v7389 = vunpack.c.0.s8 %v7388
        %v7390 = vlaneseq
        %v7391 = vshrl.u32 %v7390, 7
        %v7392 = vsub.s32 %v7389, %v7391
        %v7393 = vrot.slane %v7379, %v7392
        %v7394 = vcombine.low %v7386, %v7393
        %v7395 = vcombine.low %v6840, %v6841
        %v7396 = vcombine.low %v6842, %v6843
        %v7398 = vunpack.c.l.s4 1983009808
        %v7399 = vunpack.c.0.s8 %v7398
        %v7400 = vlaneseq
        %v7401 = vshrl.u32 %v7400, 7
        %v7402 = vsub.s32 %v7399, %v7401
        %v7403 = vrot.slane %v7395, %v7402
        %v7405 = vunpack.c.l.s4 1983009808
        %v7406 = vunpack.c.0.s8 %v7405
        %v7407 = vlaneseq
        %v7408 = vshrl.u32 %v7407, 7
        %v7409 = vsub.s32 %v7406, %v7408
        %v7410 = vrot.slane %v7396, %v7409
        %v7411 = vcombine.low %v7403, %v7410
        %v7412 = vcombine.low %v6844, %v6845
        %v7413 = vcombine.low %v6846, %v6847
        %v7415 = vunpack.c.l.s4 1983009808
        %v7416 = vunpack.c.0.s8 %v7415
        %v7417 = vlaneseq
        %v7418 = vshrl.u32 %v7417, 7
        %v7419 = vsub.s32 %v7416, %v7418
        %v7420 = vrot.slane %v7412, %v7419
        %v7422 = vunpack.c.l.s4 1983009808
        %v7423 = vunpack.c.0.s8 %v7422
        %v7424 = vlaneseq
        %v7425 = vshrl.u32 %v7424, 7
        %v7426 = vsub.s32 %v7423, %v7425
        %v7427 = vrot.slane %v7413, %v7426
        %v7428 = vcombine.low %v7420, %v7427
        %v7429 = vcombine.low %v6848, %v6849
        %v7430 = vcombine.low %v6850, %v6851
        %v7432 = vunpack.c.l.s4 1983009808
        %v7433 = vunpack.c.0.s8 %v7432
        %v7434 = vlaneseq
        %v7435 = vshrl.u32 %v7434, 7
        %v7436 = vsub.s32 %v7433, %v7435
        %v7437 = vrot.slane %v7429, %v7436
        %v7439 = vunpack.c.l.s4 1983009808
        %v7440 = vunpack.c.0.s8 %v7439
        %v7441 = vlaneseq
        %v7442 = vshrl.u32 %v7441, 7
        %v7443 = vsub.s32 %v7440, %v7442
        %v7444 = vrot.slane %v7430, %v7443
        %v7445 = vcombine.low %v7437, %v7444
        %v7446 = vcombine.low %v6852, %v6853
        %v7447 = vcombine.low %v6854, %v6855
        %v7449 = vunpack.c.l.s4 1983009808
        %v7450 = vunpack.c.0.s8 %v7449
        %v7451 = vlaneseq
        %v7452 = vshrl.u32 %v7451, 7
        %v7453 = vsub.s32 %v7450, %v7452
        %v7454 = vrot.slane %v7446, %v7453
        %v7456 = vunpack.c.l.s4 1983009808
        %v7457 = vunpack.c.0.s8 %v7456
        %v7458 = vlaneseq
        %v7459 = vshrl.u32 %v7458, 7
        %v7460 = vsub.s32 %v7457, %v7459
        %v7461 = vrot.slane %v7447, %v7460
        %v7462 = vcombine.low %v7454, %v7461
        %v7463 = vcombine.low %v6856, %v6857
        %v7464 = vcombine.low %v6858, %v6859
        %v7466 = vunpack.c.l.s4 1983009808
        %v7467 = vunpack.c.0.s8 %v7466
        %v7468 = vlaneseq
        %v7469 = vshrl.u32 %v7468, 7
        %v7470 = vsub.s32 %v7467, %v7469
        %v7471 = vrot.slane %v7463, %v7470
        %v7473 = vunpack.c.l.s4 1983009808
        %v7474 = vunpack.c.0.s8 %v7473
        %v7475 = vlaneseq
        %v7476 = vshrl.u32 %v7475, 7
        %v7477 = vsub.s32 %v7474, %v7476
        %v7478 = vrot.slane %v7464, %v7477
        %v7479 = vcombine.low %v7471, %v7478
        %v7480 = vcombine.low %v6860, %v6861
        %v7481 = vcombine.low %v6862, %v6863
        %v7483 = vunpack.c.l.s4 1983009808
        %v7484 = vunpack.c.0.s8 %v7483
        %v7485 = vlaneseq
        %v7486 = vshrl.u32 %v7485, 7
        %v7487 = vsub.s32 %v7484, %v7486
        %v7488 = vrot.slane %v7480, %v7487
        %v7490 = vunpack.c.l.s4 1983009808
        %v7491 = vunpack.c.0.s8 %v7490
        %v7492 = vlaneseq
        %v7493 = vshrl.u32 %v7492, 7
        %v7494 = vsub.s32 %v7491, %v7493
        %v7495 = vrot.slane %v7481, %v7494
        %v7496 = vcombine.low %v7488, %v7495
        %v7497 = vcombine.low %v6864, %v6865
        %v7498 = vcombine.low %v6866, %v6867
        %v7500 = vunpack.c.l.s4 1983009808
        %v7501 = vunpack.c.0.s8 %v7500
        %v7502 = vlaneseq
        %v7503 = vshrl.u32 %v7502, 7
        %v7504 = vsub.s32 %v7501, %v7503
        %v7505 = vrot.slane %v7497, %v7504
        %v7507 = vunpack.c.l.s4 1983009808
        %v7508 = vunpack.c.0.s8 %v7507
        %v7509 = vlaneseq
        %v7510 = vshrl.u32 %v7509, 7
        %v7511 = vsub.s32 %v7508, %v7510
        %v7512 = vrot.slane %v7498, %v7511
        %v7513 = vcombine.low %v7505, %v7512
        %v7514 = vcombine.low %v6868, %v6869
        %v7515 = vcombine.low %v6870, %v6871
        %v7517 = vunpack.c.l.s4 1983009808
        %v7518 = vunpack.c.0.s8 %v7517
        %v7519 = vlaneseq
        %v7520 = vshrl.u32 %v7519, 7
        %v7521 = vsub.s32 %v7518, %v7520
        %v7522 = vrot.slane %v7514, %v7521
        %v7524 = vunpack.c.l.s4 1983009808
        %v7525 = vunpack.c.0.s8 %v7524
        %v7526 = vlaneseq
        %v7527 = vshrl.u32 %v7526, 7
        %v7528 = vsub.s32 %v7525, %v7527
        %v7529 = vrot.slane %v7515, %v7528
        %v7530 = vcombine.low %v7522, %v7529
        %v7531 = vcombine.low %v6872, %v6873
        %v7532 = vcombine.low %v6874, %v6875
        %v7534 = vunpack.c.l.s4 1983009808
        %v7535 = vunpack.c.0.s8 %v7534
        %v7536 = vlaneseq
        %v7537 = vshrl.u32 %v7536, 7
        %v7538 = vsub.s32 %v7535, %v7537
        %v7539 = vrot.slane %v7531, %v7538
        %v7541 = vunpack.c.l.s4 1983009808
        %v7542 = vunpack.c.0.s8 %v7541
        %v7543 = vlaneseq
        %v7544 = vshrl.u32 %v7543, 7
        %v7545 = vsub.s32 %v7542, %v7544
        %v7546 = vrot.slane %v7532, %v7545
        %v7547 = vcombine.low %v7539, %v7546
        %7580 = vxpose.xlu0.b32.start [1/16] %v7020, 128
        %7581 = vxpose.xlu0.b32.cont [2/16] %v7037, 128
        %7582 = vxpose.xlu0.b32.cont [3/16] %v7054, 128
        %7583 = vxpose.xlu0.b32.cont [4/16] %v7071, 128
        %7584 = vxpose.xlu0.b32.cont [5/16] %v7088, 128
        %7585 = vxpose.xlu0.b32.cont [6/16] %v7105, 128
        %7586 = vxpose.xlu0.b32.cont [7/16] %v7122, 128
        %7587 = vxpose.xlu0.b32.cont [8/16] %v7139, 128
        %7588 = vxpose.xlu0.b32.cont [9/16] %v7156, 128
        %7589 = vxpose.xlu0.b32.cont [10/16] %v7173, 128
        %7590 = vxpose.xlu0.b32.cont [11/16] %v7190, 128
        %7591 = vxpose.xlu0.b32.cont [12/16] %v7207, 128
        %7592 = vxpose.xlu0.b32.cont [13/16] %v7224, 128
        %7593 = vxpose.xlu0.b32.cont [14/16] %v7241, 128
        %7594 = vxpose.xlu0.b32.cont [15/16] %v7258, 128
        %7595 = vxpose.xlu0.b32.end [16/16] %v7275, 128
        %v7596 = vpop.trf.xlu0
        %v7597 = vpop.trf.xlu0
        %v7598 = vpop.trf.xlu0
        %v7599 = vpop.trf.xlu0
        %v7600 = vpop.trf.xlu0
        %v7601 = vpop.trf.xlu0
        %v7602 = vpop.trf.xlu0
        %v7603 = vpop.trf.xlu0
        %v7604 = vpop.trf.xlu0
        %v7605 = vpop.trf.xlu0
        %v7606 = vpop.trf.xlu0
        %v7607 = vpop.trf.xlu0
        %v7608 = vpop.trf.xlu0
        %v7609 = vpop.trf.xlu0
        %v7610 = vpop.trf.xlu0
        %v7611 = vpop.trf.xlu0
        %7612 = vxpose.xlu0.b32.start [1/16] %v7292, 128
        %7613 = vxpose.xlu0.b32.cont [2/16] %v7309, 128
        %7614 = vxpose.xlu0.b32.cont [3/16] %v7326, 128
        %7615 = vxpose.xlu0.b32.cont [4/16] %v7343, 128
        %7616 = vxpose.xlu0.b32.cont [5/16] %v7360, 128
        %7617 = vxpose.xlu0.b32.cont [6/16] %v7377, 128
        %7618 = vxpose.xlu0.b32.cont [7/16] %v7394, 128
        %7619 = vxpose.xlu0.b32.cont [8/16] %v7411, 128
        %7620 = vxpose.xlu0.b32.cont [9/16] %v7428, 128
        %7621 = vxpose.xlu0.b32.cont [10/16] %v7445, 128
        %7622 = vxpose.xlu0.b32.cont [11/16] %v7462, 128
        %7623 = vxpose.xlu0.b32.cont [12/16] %v7479, 128
        %7624 = vxpose.xlu0.b32.cont [13/16] %v7496, 128
        %7625 = vxpose.xlu0.b32.cont [14/16] %v7513, 128
        %7626 = vxpose.xlu0.b32.cont [15/16] %v7530, 128
        %7627 = vxpose.xlu0.b32.end [16/16] %v7547, 128
        %v7628 = vpop.trf.xlu0
        %v7629 = vpop.trf.xlu0
        %v7630 = vpop.trf.xlu0
        %v7631 = vpop.trf.xlu0
        %v7632 = vpop.trf.xlu0
        %v7633 = vpop.trf.xlu0
        %v7634 = vpop.trf.xlu0
        %v7635 = vpop.trf.xlu0
        %v7636 = vpop.trf.xlu0
        %v7637 = vpop.trf.xlu0
        %v7638 = vpop.trf.xlu0
        %v7639 = vpop.trf.xlu0
        %v7640 = vpop.trf.xlu0
        %v7641 = vpop.trf.xlu0
        %v7642 = vpop.trf.xlu0
        %v7643 = vpop.trf.xlu0
        %7644 = vst [vmem:[%s377] sm:$0xff] %v7596
        %7645 = vst [vmem:[%s377 + $0x8] sm:$0xff] %v7628
        %7646 = vst [vmem:[%s377 + $0x10] sm:$0xff] %v7597
        %7647 = vst [vmem:[%s377 + $0x18] sm:$0xff] %v7629
        %s7648 = sand.u32 %s250, 1
        %s7649 = scalar_lea.sflag [#allocation5], %s7648
        %s7650 = sand.u32 %s250, 1
        %s7651 = smul.addr %s7650, 32
        %s7652 = scalar_lea.vmem [#allocation6], %s7651
        // Predicated region
        $region65: #{tpu_custom_call.1} parent=59 // pred_check
          %p7653 = pneg %p260
        $region66: #{tpu_custom_call.1} parent=59 // pred_check_branch
          %7655 = sbr.rel (%p7653) target = $region68
        $region67: #{tpu_custom_call.1} parent=59 // pred_region
          %s7657 = ssub.s32 512, 512
          %7658 = vsyncadd %s7649, %s7657
          %s7659 = smul.addr %s27, 4
          %s7660 = smul.addr %s7659, 128
          %s7661 = scalar_lea.hbm %s10, %s7660
          %s7662 = sshll.u32 %s7652, 4
          %s7663 = int_to_ptr.vmem [resolvable:$true] %s7662
          %7668 = dma.vmem_to_hbm [thread:$0]  %s7663, 512, %s7661, %s7649, 256, 256, 16
        $region68: #{tpu_custom_call.1} parent=59 // pred_fallthru
          _
      $region60: #{tpu_custom_call.1} parent=5 // pred_fallthru
        _
      %p7669 = scmp.le.s32.totalorder 2, %s22
      // Predicated region
      $region69: #{tpu_custom_call.1} parent=5 // pred_check
        %p7670 = pneg %p7669
      $region70: #{tpu_custom_call.1} parent=5 // pred_check_branch
        %7672 = sbr.rel (%p7670) target = $region72
      $region71: #{tpu_custom_call.1} parent=5 // pred_region
        %s7673 = ssub.s32 %s22, 2
        // Predicated region
        $region73: #{tpu_custom_call.1} parent=71 // pred_check
          %p7674 = pneg %p266
        $region74: #{tpu_custom_call.1} parent=71 // pred_check_branch
          %7676 = sbr.rel (%p7674) target = $region76
        $region75: #{tpu_custom_call.1} parent=71 // pred_region
          %s7677 = sand.u32 %s251, 1
          %s7678 = scalar_lea.sflag [#allocation5], %s7677
          %s7679 = sand.u32 %s251, 1
          %s7680 = smul.addr %s7679, 32
          %s7681 = scalar_lea.vmem [#allocation6], %s7680
          %7682 = dma.done %s7678, 512
        $region76: #{tpu_custom_call.1} parent=71 // pred_fallthru
          _
      $region72: #{tpu_custom_call.1} parent=5 // pred_fallthru
        _
    $region6: #{tpu_custom_call.1} parent=1 // loop_footer
      %s26 = sadd.s32 1, %s22
    $region7: #{tpu_custom_call.1} parent=1 // loop_footer_branch
      %21 = sbr.rel target = $region3
    $region8: #{tpu_custom_call.1} parent=1 // loop_exit
      _
    %7683 = vsyncpa [#allocation4], 1
    %s7684 = scalar_lea.sflag [#allocation4], 1
    %7685 = vsyncpa %s7684, 1
    %7686 = vsyncpa [#allocation5], 1
    %s7687 = scalar_lea.sflag [#allocation5], 1
    %7688 = vsyncpa %s7687, 1

</llo_original>
